<compile_context>
chip_gen: v6e
topology: v6e:2x2x1
jax: 0.10.0
libtpu: 0.0.40
codegen_flags: <defaults>
</compile_context>

<pallas_src>
import jax
import jax.numpy as jnp
from jax import lax
from jax.experimental import pallas as pl
from jax.experimental.pallas import tpu as pltpu

H = 128            # hidden size
IN = 1             # input size
OUT = 1            # output size
NUM_LAYERS = 2
BB = 8             # batch tile (fills the 8 vreg sublanes / MXU M-dim)


# ----------------------------------------------------------------------------
# Kernel
# ----------------------------------------------------------------------------
def _lstm_kernel(x_ref,                # (seq*BB, 1)  f32  VMEM  rows in (t, b) order
                 wih0_ref,             # (1, 4H)      f32  layer-0 input weights (permuted)
                 b0_ref,               # (1, 4H)      f32  b_ih0 + b_hh0 (permuted)
                 wf_ref,               # (H, 8H)      bf16 fused [W_hh0 | W_ih1] (permuted)
                 whh1_ref,             # (H, 4H)      bf16 layer-1 recurrent weights (permuted)
                 b1_ref,               # (1, 4H)      f32  b_ih1 + b_hh1 (permuted)
                 wlin_ref,             # (H, 1)       f32  linear head
                 blin_ref,             # (1, 1)       f32
                 out_ref,              # (BB, 1)      f32
                 gin0_scr):            # (seq*BB, 4H) f32  VMEM scratch
    seq_bb = x_ref.shape[0]
    seq_len = seq_bb // BB

    # Precompute the layer-0 input projection for every (t, b) pair at once:
    # removes a broadcast-mul + bias-add (and any scalar read) from the
    # serial per-step dependency chain.
    gin0_scr[...] = x_ref[...] * wih0_ref[...] + b0_ref[...]

    def cell(gates, c_prev):
        # gate order (i, f, o, g): one sigmoid over 3H lanes + one tanh over H
        ifo = jax.nn.sigmoid(gates[:, :3 * H])
        g = jnp.tanh(gates[:, 3 * H:])
        i_g = ifo[:, 0 * H:1 * H]
        f_g = ifo[:, 1 * H:2 * H]
        o_g = ifo[:, 2 * H:3 * H]
        c = f_g * c_prev + i_g * g
        h = o_g * jnp.tanh(c)
        return h, c

    def step(t, carry):
        # rec0 = h0[t-1] @ W_hh0 was produced by the previous step's fused dot.
        rec0, c0, h1, c1 = carry

        base = pl.multiple_of(t * BB, BB)
        gin0_t = gin0_scr[pl.ds(base, BB), :]            # (BB, 4H)

        # ---- layer 0 (critical chain: add -> cell -> fused dot) ----
        gates0 = gin0_t + rec0
        h0, c0 = cell(gates0, c0)

        # One fused MXU dot of h0 produces BOTH the layer-0 recurrent term for
        # step t+1 and the layer-1 input term for step t (2 dots/step, not 3).
        fused = jnp.dot(h0.astype(jnp.bfloat16), wf_ref[...],
                        preferred_element_type=jnp.float32)   # (BB, 8H) f32
        rec0_next = fused[:, :4 * H]
        in1 = fused[:, 4 * H:]

        # ---- layer 1 (independent chain, interleaves with layer 0) ----
        gates1 = (in1
                  + jnp.dot(h1.astype(jnp.bfloat16), whh1_ref[...],
                            preferred_element_type=jnp.float32)
                  + b1_ref[...])
        h1, c1 = cell(gates1, c1)

        return (rec0_next, c0, h1, c1)

    zeros_h = jnp.zeros((BB, H), jnp.float32)
    zeros_g = jnp.zeros((BB, 4 * H), jnp.float32)        # h0_init = 0  =>  rec0 = 0
    unroll = True if seq_len <= 16 else 4
    rec0, c0, h1, c1 = lax.fori_loop(
        0, seq_len, step, (zeros_g, zeros_h, zeros_h, zeros_h), unroll=unroll)

    # Linear head on the last timestep's top-layer hidden state (f32, exact).
    out_ref[...] = (jnp.dot(h1, wlin_ref[...],
                            preferred_element_type=jnp.float32)
                    + blin_ref[...])


# ----------------------------------------------------------------------------
# Wrappers
# ----------------------------------------------------------------------------
def lstm_forward_batched(xs, kp):
    """xs: (B, seq_len) f32 -> (B,) predictions, one independent LSTM per row.

    Batching amortizes kernel launch + weight DMA; batch blocks of BB=8 are a
    "parallel" grid axis (sharded across TensorCores on multi-core chips).
    """
    xs = jnp.asarray(xs, jnp.float32)
    B, seq_len = xs.shape
    nb = pl.cdiv(B, BB)
    b_pad = nb * BB
    xs_p = jnp.pad(xs, ((0, b_pad - B), (0, 0)))
    # Rows ordered (t, b) within each batch block: x_tb[i, t*BB + b, 0] = xs[i*BB+b, t]
    x_tb = (xs_p.reshape(nb, BB, seq_len)
                .transpose(0, 2, 1)
                .reshape(nb, seq_len * BB, 1))

    out = pl.pallas_call(
        _lstm_kernel,
        out_shape=jax.ShapeDtypeStruct((nb, BB, 1), jnp.float32),
        grid=(nb,),
        in_specs=[
            pl.BlockSpec((None, seq_len * BB, 1), lambda i: (i, 0, 0)),  # x
            pl.BlockSpec((1, 4 * H), lambda i: (0, 0)),                  # wih0
            pl.BlockSpec((1, 4 * H), lambda i: (0, 0)),                  # b0
            pl.BlockSpec((H, 8 * H), lambda i: (0, 0)),                  # fused whh0|wih1
            pl.BlockSpec((H, 4 * H), lambda i: (0, 0)),                  # whh1
            pl.BlockSpec((1, 4 * H), lambda i: (0, 0)),                  # b1
            pl.BlockSpec((H, 1), lambda i: (0, 0)),                      # wlin
            pl.BlockSpec((1, 1), lambda i: (0, 0)),                      # blin
        ],
        out_specs=pl.BlockSpec((None, BB, 1), lambda i: (i, 0, 0)),
        scratch_shapes=[pltpu.VMEM((seq_len * BB, 4 * H), jnp.float32)],
        compiler_params=pltpu.CompilerParams(
            dimension_semantics=("parallel",)),
    )(x_tb, kp["wih0"], kp["b0"], kp["w_fused"], kp["whh1"], kp["b1"],
      kp["wlin"], kp["blin"])
    return out.reshape(b_pad)[:B]


def lstm_forward(input_seq, kp):
    """input_seq: (seq_len,) f32. Returns shape (1,) like the PyTorch module."""
    return lstm_forward_batched(input_seq[None, :], kp).reshape(OUT)


# ----------------------------------------------------------------------------
# Parameters (PyTorch layout) + kernel packing (permute / fuse / bf16)
# ----------------------------------------------------------------------------
def pack_params(tp):
    # PyTorch gate row order is (i, f, g, o); permute columns of the
    # transposed weights to (i, f, o, g) so the kernel applies one sigmoid
    # over a contiguous 3H slice and one tanh over the trailing H slice.
    perm = jnp.concatenate([jnp.arange(0, H), jnp.arange(H, 2 * H),
                            jnp.arange(3 * H, 4 * H), jnp.arange(2 * H, 3 * H)])
    wih0 = tp["w_ih0"].T[:, perm]                       # (1, 4H)
    whh0 = tp["w_hh0"].T[:, perm]                       # (H, 4H)
    wih1 = tp["w_ih1"].T[:, perm]                       # (H, 4H)
    whh1 = tp["w_hh1"].T[:, perm]                       # (H, 4H)
    return {
        "wih0": wih0,
        "b0": (tp["b_ih0"] + tp["b_hh0"])[perm][None, :],
        # Fuse [W_hh0 | W_ih1]: one MXU dot of h0 yields both the layer-0
        # recurrent term (t+1) and the layer-1 input term (t). bf16 operands
        # are MXU-native and halve the weight footprint.
        "w_fused": jnp.concatenate([whh0, wih1], axis=1).astype(jnp.bfloat16),
        "whh1": whh1.astype(jnp.bfloat16),
        "b1": (tp["b_ih1"] + tp["b_hh1"])[perm][None, :],
        "wlin": tp["w_lin"].T,                          # (H, 1) f32
        "blin": tp["b_lin"][None, :],                   # (1, 1) f32
    }


def init_params(key):
    """PyTorch-style uniform(-1/sqrt(H), 1/sqrt(H)) init in PyTorch layouts."""
    k = 1.0 / jnp.sqrt(jnp.float32(H))
    keys = jax.random.split(key, 10)

    def u(kk, shape):
        return jax.random.uniform(kk, shape, jnp.float32, minval=-k, maxval=k)

    tp = {
        "w_ih0": u(keys[0], (4 * H, IN)),
        "w_hh0": u(keys[1], (4 * H, H)),
        "b_ih0": u(keys[2], (4 * H,)),
        "b_hh0": u(keys[3], (4 * H,)),
        "w_ih1": u(keys[4], (4 * H, H)),
        "w_hh1": u(keys[5], (4 * H, H)),
        "b_ih1": u(keys[6], (4 * H,)),
        "b_hh1": u(keys[7], (4 * H,)),
        "w_lin": u(keys[8], (OUT, H)),
        "b_lin": u(keys[9], (OUT,)),
    }
    return tp, pack_params(tp)


# ----------------------------------------------------------------------------
# Pure-JAX reference (PyTorch layout, gate order i,f,g,o)
# ----------------------------------------------------------------------------
def lstm_forward_ref(input_seq, tp, matmul_dtype=jnp.float32):
    x = jnp.asarray(input_seq, jnp.float32)

    def cell(gates, c_prev):
        i = jax.nn.sigmoid(gates[:, 0 * H:1 * H])
        f = jax.nn.sigmoid(gates[:, 1 * H:2 * H])
        g = jnp.tanh(gates[:, 2 * H:3 * H])
        o = jax.nn.sigmoid(gates[:, 3 * H:4 * H])
        c = f * c_prev + i * g
        return o * jnp.tanh(c), c

    def dot(h, w_t):
        return jnp.dot(h.astype(matmul_dtype), w_t.astype(matmul_dtype),
                       preferred_element_type=jnp.float32)

    wih0_t, whh0_t = tp["w_ih0"].T, tp["w_hh0"].T
    wih1_t, whh1_t = tp["w_ih1"].T, tp["w_hh1"].T
    b0 = (tp["b_ih0"] + tp["b_hh0"])[None, :]
    b1 = (tp["b_ih1"] + tp["b_hh1"])[None, :]

    def step(carry, x_t):
        h0, c0, h1, c1 = carry
        g0 = x_t * wih0_t + dot(h0, whh0_t) + b0
        h0, c0 = cell(g0, c0)
        g1 = dot(h0, wih1_t) + dot(h1, whh1_t) + b1
        h1, c1 = cell(g1, c1)
        return (h0, c0, h1, c1), None

    z = jnp.zeros((1, H), jnp.float32)
    (h0, c0, h1, c1), _ = lax.scan(step, (z, z, z, z), x)
    return (h1 @ tp["w_lin"].T + tp["b_lin"][None, :]).reshape(OUT)


# ----------------------------------------------------------------------------
if __name__ == "__main__":
    key = jax.random.PRNGKey(0)
    pkey, xkey = jax.random.split(key)
    torch_params, kernel_params = init_params(pkey)

    seq_len = 8
    input_seq = jax.random.normal(xkey, (seq_len,), jnp.float32)

    # Single-sequence path (exact module semantics).
    pred = jax.block_until_ready(lstm_forward(input_seq, kernel_params))
    ref_bf16 = lstm_forward_ref(input_seq, torch_params, jnp.bfloat16)
    ref_f32 = lstm_forward_ref(input_seq, torch_params, jnp.float32)

    assert pred.shape == (OUT,), pred.shape
    assert jnp.allclose(pred, ref_bf16, atol=1e-4, rtol=1e-4), (pred, ref_bf16)
    # bf16 MXU operands vs exact-f32 PyTorch math: small bounded deviation.
    assert jnp.allclose(pred, ref_f32, atol=5e-2, rtol=5e-2), (pred, ref_f32)

    # Batched path: 16 independent sequences in one call (fills MXU M-dim,
    # exercises the "parallel" batch grid used for v7x dual-TensorCore).
    xs = jax.random.normal(jax.random.PRNGKey(1), (16, seq_len), jnp.float32)
    preds = jax.block_until_ready(lstm_forward_batched(xs, kernel_params))
    refs = jnp.stack([lstm_forward_ref(xs[b], torch_params, jnp.bfloat16)
                      for b in range(xs.shape[0])]).reshape(-1)
    assert preds.shape == (16,), preds.shape
    assert jnp.allclose(preds, refs, atol=1e-4, rtol=1e-4), (preds, refs)

    print("KERNEL_OK")
</pallas_src>

<mosaic_0001>
module attributes {stable_mosaic.version = 11 : i64} {
  func.func @_lstm_kernel(%arg0: i32, %arg1: memref<1x64x1xf32, #tpu.memory_space<vmem>>, %arg2: memref<1x512xf32, #tpu.memory_space<vmem>>, %arg3: memref<1x512xf32, #tpu.memory_space<vmem>>, %arg4: memref<128x1024xbf16, #tpu.memory_space<vmem>>, %arg5: memref<128x512xbf16, #tpu.memory_space<vmem>>, %arg6: memref<1x512xf32, #tpu.memory_space<vmem>>, %arg7: memref<128x1xf32, #tpu.memory_space<vmem>>, %arg8: memref<1x1xf32, #tpu.memory_space<vmem>>, %arg9: memref<1x8x1xf32, #tpu.memory_space<vmem>>, %arg10: memref<64x512xf32, #tpu.memory_space<vmem>>) attributes {dimension_semantics = [#tpu.dimension_semantics<parallel>], iteration_bounds = array<i64: 1>, scalar_prefetch = 0 : i64, scratch_operands = 1 : i64, tpu.core_type = #tpu.core_type<tc>, window_params = [{transform_indices = @transform_0, window_bounds = array<i64: 1, 64, 1>}, {pipeline_mode = #tpu.pipeline_mode<synchronous>, transform_indices = @transform_1, window_bounds = array<i64: 1, 512>}, {pipeline_mode = #tpu.pipeline_mode<synchronous>, transform_indices = @transform_2, window_bounds = array<i64: 1, 512>}, {pipeline_mode = #tpu.pipeline_mode<synchronous>, transform_indices = @transform_3, window_bounds = array<i64: 128, 1024>}, {pipeline_mode = #tpu.pipeline_mode<synchronous>, transform_indices = @transform_4, window_bounds = array<i64: 128, 512>}, {pipeline_mode = #tpu.pipeline_mode<synchronous>, transform_indices = @transform_5, window_bounds = array<i64: 1, 512>}, {pipeline_mode = #tpu.pipeline_mode<synchronous>, transform_indices = @transform_6, window_bounds = array<i64: 128, 1>}, {pipeline_mode = #tpu.pipeline_mode<synchronous>, transform_indices = @transform_7, window_bounds = array<i64: 1, 1>}, {transform_indices = @transform_8, window_bounds = array<i64: 1, 8, 1>}]} {
    %c0 = arith.constant 0 : index
    %c0_0 = arith.constant 0 : index
    %c0_1 = arith.constant 0 : index
    %0 = vector.load %arg1[%c0, %c0_0, %c0_1] : memref<1x64x1xf32, #tpu.memory_space<vmem>>, vector<1x64x1xf32>
    %1 = vector.shape_cast %0 : vector<1x64x1xf32> to vector<64x1xf32>
    %c0_2 = arith.constant 0 : index
    %c0_3 = arith.constant 0 : index
    %2 = vector.load %arg2[%c0_2, %c0_3] : memref<1x512xf32, #tpu.memory_space<vmem>>, vector<1x512xf32>
    %3 = vector.broadcast %1 : vector<64x1xf32> to vector<64x512xf32>
    %4 = vector.broadcast %2 : vector<1x512xf32> to vector<64x512xf32>
    %5 = arith.mulf %3, %4 : vector<64x512xf32>
    %c0_4 = arith.constant 0 : index
    %c0_5 = arith.constant 0 : index
    %6 = vector.load %arg3[%c0_4, %c0_5] : memref<1x512xf32, #tpu.memory_space<vmem>>, vector<1x512xf32>
    %7 = vector.broadcast %6 : vector<1x512xf32> to vector<64x512xf32>
    %8 = arith.addf %5, %7 : vector<64x512xf32>
    %c0_6 = arith.constant 0 : index
    %c0_7 = arith.constant 0 : index
    %9 = vector.load %arg10[%c0_6, %c0_7] : memref<64x512xf32, #tpu.memory_space<vmem>>, vector<64x512xf32>
    tpu.vector_store %arg10[%c0_6, %c0_7], %8 {strides = array<i32>} : memref<64x512xf32, #tpu.memory_space<vmem>>, vector<64x512xf32>,
    %cst = arith.constant 0.000000e+00 : f32
    %10 = vector.broadcast %cst : f32 to vector<8x128xf32>
    %cst_8 = arith.constant 0.000000e+00 : f32
    %11 = vector.broadcast %cst_8 : f32 to vector<8x512xf32>
    %c0_i32 = arith.constant 0 : i32
    %c8_i32 = arith.constant 8 : i32
    %12 = arith.muli %c0_i32, %c8_i32 : i32
    %13 = tpu.assume_multiple %12, 8 : i32
    %14 = arith.index_cast %13 : i32 to index
    %c0_9 = arith.constant 0 : index
    %15 = vector.load %arg10[%14, %c0_9] : memref<64x512xf32, #tpu.memory_space<vmem>>, vector<8x512xf32>
    %16 = arith.addf %15, %11 : vector<8x512xf32>
    %17 = vector.extract_strided_slice %16 {offsets = [0, 0], sizes = [8, 384], strides = [1, 1]} : vector<8x512xf32> to vector<8x384xf32>
    %18 = arith.negf %17 : vector<8x384xf32>
    %19 = math.exp %18 : vector<8x384xf32>
    %cst_10 = arith.constant 1.000000e+00 : f32
    %20 = vector.broadcast %cst_10 : f32 to vector<8x384xf32>
    %21 = arith.addf %20, %19 : vector<8x384xf32>
    %22 = arith.divf %20, %21 : vector<8x384xf32>
    %23 = vector.extract_strided_slice %16 {offsets = [0, 384], sizes = [8, 128], strides = [1, 1]} : vector<8x512xf32> to vector<8x128xf32>
    %24 = math.tanh %23 : vector<8x128xf32>
    %25 = vector.extract_strided_slice %22 {offsets = [0, 0], sizes = [8, 128], strides = [1, 1]} : vector<8x384xf32> to vector<8x128xf32>
    %26 = vector.extract_strided_slice %22 {offsets = [0, 128], sizes = [8, 128], strides = [1, 1]} : vector<8x384xf32> to vector<8x128xf32>
    %27 = vector.extract_strided_slice %22 {offsets = [0, 256], sizes = [8, 128], strides = [1, 1]} : vector<8x384xf32> to vector<8x128xf32>
    %28 = arith.mulf %26, %10 : vector<8x128xf32>
    %29 = arith.mulf %25, %24 : vector<8x128xf32>
    %30 = arith.addf %28, %29 : vector<8x128xf32>
    %31 = math.tanh %30 : vector<8x128xf32>
    %32 = arith.mulf %27, %31 : vector<8x128xf32>
    %33 = arith.truncf %32 : vector<8x128xf32> to vector<8x128xbf16>
    %c0_11 = arith.constant 0 : index
    %c0_12 = arith.constant 0 : index
    %34 = vector.load %arg4[%c0_11, %c0_12] : memref<128x1024xbf16, #tpu.memory_space<vmem>>, vector<128x1024xbf16>
    %cst_13 = arith.constant dense<0.000000e+00> : vector<8x1024xf32>
    %35 = tpu.matmul %33, %34, %cst_13 {dimension_numbers = #tpu.dot_dimension_numbers<[1], [0], [0], [1], [0, 0, 1, 1], [], []>} : vector<8x128xbf16>, vector<128x1024xbf16>, vector<8x1024xf32> -> vector<8x1024xf32>
    %36 = vector.extract_strided_slice %35 {offsets = [0, 0], sizes = [8, 512], strides = [1, 1]} : vector<8x1024xf32> to vector<8x512xf32>
    %37 = vector.extract_strided_slice %35 {offsets = [0, 512], sizes = [8, 512], strides = [1, 1]} : vector<8x1024xf32> to vector<8x512xf32>
    %38 = arith.truncf %10 : vector<8x128xf32> to vector<8x128xbf16>
    %c0_14 = arith.constant 0 : index
    %c0_15 = arith.constant 0 : index
    %39 = vector.load %arg5[%c0_14, %c0_15] : memref<128x512xbf16, #tpu.memory_space<vmem>>, vector<128x512xbf16>
    %cst_16 = arith.constant dense<0.000000e+00> : vector<8x512xf32>
    %40 = tpu.matmul %38, %39, %cst_16 {dimension_numbers = #tpu.dot_dimension_numbers<[1], [0], [0], [1], [0, 0, 1, 1], [], []>} : vector<8x128xbf16>, vector<128x512xbf16>, vector<8x512xf32> -> vector<8x512xf32>
    %41 = arith.addf %37, %40 : vector<8x512xf32>
    %c0_17 = arith.constant 0 : index
    %c0_18 = arith.constant 0 : index
    %42 = vector.load %arg6[%c0_17, %c0_18] : memref<1x512xf32, #tpu.memory_space<vmem>>, vector<1x512xf32>
    %43 = vector.broadcast %42 : vector<1x512xf32> to vector<8x512xf32>
    %44 = arith.addf %41, %43 : vector<8x512xf32>
    %45 = vector.extract_strided_slice %44 {offsets = [0, 0], sizes = [8, 384], strides = [1, 1]} : vector<8x512xf32> to vector<8x384xf32>
    %46 = arith.negf %45 : vector<8x384xf32>
    %47 = math.exp %46 : vector<8x384xf32>
    %cst_19 = arith.constant 1.000000e+00 : f32
    %48 = vector.broadcast %cst_19 : f32 to vector<8x384xf32>
    %49 = arith.addf %48, %47 : vector<8x384xf32>
    %50 = arith.divf %48, %49 : vector<8x384xf32>
    %51 = vector.extract_strided_slice %44 {offsets = [0, 384], sizes = [8, 128], strides = [1, 1]} : vector<8x512xf32> to vector<8x128xf32>
    %52 = math.tanh %51 : vector<8x128xf32>
    %53 = vector.extract_strided_slice %50 {offsets = [0, 0], sizes = [8, 128], strides = [1, 1]} : vector<8x384xf32> to vector<8x128xf32>
    %54 = vector.extract_strided_slice %50 {offsets = [0, 128], sizes = [8, 128], strides = [1, 1]} : vector<8x384xf32> to vector<8x128xf32>
    %55 = vector.extract_strided_slice %50 {offsets = [0, 256], sizes = [8, 128], strides = [1, 1]} : vector<8x384xf32> to vector<8x128xf32>
    %56 = arith.mulf %54, %10 : vector<8x128xf32>
    %57 = arith.mulf %53, %52 : vector<8x128xf32>
    %58 = arith.addf %56, %57 : vector<8x128xf32>
    %59 = math.tanh %58 : vector<8x128xf32>
    %60 = arith.mulf %55, %59 : vector<8x128xf32>
    %c1_i32 = arith.constant 1 : i32
    %c8_i32_20 = arith.constant 8 : i32
    %61 = arith.muli %c1_i32, %c8_i32_20 : i32
    %62 = tpu.assume_multiple %61, 8 : i32
    %63 = arith.index_cast %62 : i32 to index
    %c0_21 = arith.constant 0 : index
    %64 = vector.load %arg10[%63, %c0_21] : memref<64x512xf32, #tpu.memory_space<vmem>>, vector<8x512xf32>
    %65 = arith.addf %64, %36 : vector<8x512xf32>
    %66 = vector.extract_strided_slice %65 {offsets = [0, 0], sizes = [8, 384], strides = [1, 1]} : vector<8x512xf32> to vector<8x384xf32>
    %67 = arith.negf %66 : vector<8x384xf32>
    %68 = math.exp %67 : vector<8x384xf32>
    %cst_22 = arith.constant 1.000000e+00 : f32
    %69 = vector.broadcast %cst_22 : f32 to vector<8x384xf32>
    %70 = arith.addf %69, %68 : vector<8x384xf32>
    %71 = arith.divf %69, %70 : vector<8x384xf32>
    %72 = vector.extract_strided_slice %65 {offsets = [0, 384], sizes = [8, 128], strides = [1, 1]} : vector<8x512xf32> to vector<8x128xf32>
    %73 = math.tanh %72 : vector<8x128xf32>
    %74 = vector.extract_strided_slice %71 {offsets = [0, 0], sizes = [8, 128], strides = [1, 1]} : vector<8x384xf32> to vector<8x128xf32>
    %75 = vector.extract_strided_slice %71 {offsets = [0, 128], sizes = [8, 128], strides = [1, 1]} : vector<8x384xf32> to vector<8x128xf32>
    %76 = vector.extract_strided_slice %71 {offsets = [0, 256], sizes = [8, 128], strides = [1, 1]} : vector<8x384xf32> to vector<8x128xf32>
    %77 = arith.mulf %75, %30 : vector<8x128xf32>
    %78 = arith.mulf %74, %73 : vector<8x128xf32>
    %79 = arith.addf %77, %78 : vector<8x128xf32>
    %80 = math.tanh %79 : vector<8x128xf32>
    %81 = arith.mulf %76, %80 : vector<8x128xf32>
    %82 = arith.truncf %81 : vector<8x128xf32> to vector<8x128xbf16>
    %c0_23 = arith.constant 0 : index
    %c0_24 = arith.constant 0 : index
    %83 = vector.load %arg4[%c0_23, %c0_24] : memref<128x1024xbf16, #tpu.memory_space<vmem>>, vector<128x1024xbf16>
    %cst_25 = arith.constant dense<0.000000e+00> : vector<8x1024xf32>
    %84 = tpu.matmul %82, %83, %cst_25 {dimension_numbers = #tpu.dot_dimension_numbers<[1], [0], [0], [1], [0, 0, 1, 1], [], []>} : vector<8x128xbf16>, vector<128x1024xbf16>, vector<8x1024xf32> -> vector<8x1024xf32>
    %85 = vector.extract_strided_slice %84 {offsets = [0, 0], sizes = [8, 512], strides = [1, 1]} : vector<8x1024xf32> to vector<8x512xf32>
    %86 = vector.extract_strided_slice %84 {offsets = [0, 512], sizes = [8, 512], strides = [1, 1]} : vector<8x1024xf32> to vector<8x512xf32>
    %87 = arith.truncf %60 : vector<8x128xf32> to vector<8x128xbf16>
    %c0_26 = arith.constant 0 : index
    %c0_27 = arith.constant 0 : index
    %88 = vector.load %arg5[%c0_26, %c0_27] : memref<128x512xbf16, #tpu.memory_space<vmem>>, vector<128x512xbf16>
    %cst_28 = arith.constant dense<0.000000e+00> : vector<8x512xf32>
    %89 = tpu.matmul %87, %88, %cst_28 {dimension_numbers = #tpu.dot_dimension_numbers<[1], [0], [0], [1], [0, 0, 1, 1], [], []>} : vector<8x128xbf16>, vector<128x512xbf16>, vector<8x512xf32> -> vector<8x512xf32>
    %90 = arith.addf %86, %89 : vector<8x512xf32>
    %c0_29 = arith.constant 0 : index
    %c0_30 = arith.constant 0 : index
    %91 = vector.load %arg6[%c0_29, %c0_30] : memref<1x512xf32, #tpu.memory_space<vmem>>, vector<1x512xf32>
    %92 = vector.broadcast %91 : vector<1x512xf32> to vector<8x512xf32>
    %93 = arith.addf %90, %92 : vector<8x512xf32>
    %94 = vector.extract_strided_slice %93 {offsets = [0, 0], sizes = [8, 384], strides = [1, 1]} : vector<8x512xf32> to vector<8x384xf32>
    %95 = arith.negf %94 : vector<8x384xf32>
    %96 = math.exp %95 : vector<8x384xf32>
    %cst_31 = arith.constant 1.000000e+00 : f32
    %97 = vector.broadcast %cst_31 : f32 to vector<8x384xf32>
    %98 = arith.addf %97, %96 : vector<8x384xf32>
    %99 = arith.divf %97, %98 : vector<8x384xf32>
    %100 = vector.extract_strided_slice %93 {offsets = [0, 384], sizes = [8, 128], strides = [1, 1]} : vector<8x512xf32> to vector<8x128xf32>
    %101 = math.tanh %100 : vector<8x128xf32>
    %102 = vector.extract_strided_slice %99 {offsets = [0, 0], sizes = [8, 128], strides = [1, 1]} : vector<8x384xf32> to vector<8x128xf32>
    %103 = vector.extract_strided_slice %99 {offsets = [0, 128], sizes = [8, 128], strides = [1, 1]} : vector<8x384xf32> to vector<8x128xf32>
    %104 = vector.extract_strided_slice %99 {offsets = [0, 256], sizes = [8, 128], strides = [1, 1]} : vector<8x384xf32> to vector<8x128xf32>
    %105 = arith.mulf %103, %58 : vector<8x128xf32>
    %106 = arith.mulf %102, %101 : vector<8x128xf32>
    %107 = arith.addf %105, %106 : vector<8x128xf32>
    %108 = math.tanh %107 : vector<8x128xf32>
    %109 = arith.mulf %104, %108 : vector<8x128xf32>
    %c2_i32 = arith.constant 2 : i32
    %c8_i32_32 = arith.constant 8 : i32
    %110 = arith.muli %c2_i32, %c8_i32_32 : i32
    %111 = tpu.assume_multiple %110, 8 : i32
    %112 = arith.index_cast %111 : i32 to index
    %c0_33 = arith.constant 0 : index
    %113 = vector.load %arg10[%112, %c0_33] : memref<64x512xf32, #tpu.memory_space<vmem>>, vector<8x512xf32>
    %114 = arith.addf %113, %85 : vector<8x512xf32>
    %115 = vector.extract_strided_slice %114 {offsets = [0, 0], sizes = [8, 384], strides = [1, 1]} : vector<8x512xf32> to vector<8x384xf32>
    %116 = arith.negf %115 : vector<8x384xf32>
    %117 = math.exp %116 : vector<8x384xf32>
    %cst_34 = arith.constant 1.000000e+00 : f32
    %118 = vector.broadcast %cst_34 : f32 to vector<8x384xf32>
    %119 = arith.addf %118, %117 : vector<8x384xf32>
    %120 = arith.divf %118, %119 : vector<8x384xf32>
    %121 = vector.extract_strided_slice %114 {offsets = [0, 384], sizes = [8, 128], strides = [1, 1]} : vector<8x512xf32> to vector<8x128xf32>
    %122 = math.tanh %121 : vector<8x128xf32>
    %123 = vector.extract_strided_slice %120 {offsets = [0, 0], sizes = [8, 128], strides = [1, 1]} : vector<8x384xf32> to vector<8x128xf32>
    %124 = vector.extract_strided_slice %120 {offsets = [0, 128], sizes = [8, 128], strides = [1, 1]} : vector<8x384xf32> to vector<8x128xf32>
    %125 = vector.extract_strided_slice %120 {offsets = [0, 256], sizes = [8, 128], strides = [1, 1]} : vector<8x384xf32> to vector<8x128xf32>
    %126 = arith.mulf %124, %79 : vector<8x128xf32>
    %127 = arith.mulf %123, %122 : vector<8x128xf32>
    %128 = arith.addf %126, %127 : vector<8x128xf32>
    %129 = math.tanh %128 : vector<8x128xf32>
    %130 = arith.mulf %125, %129 : vector<8x128xf32>
    %131 = arith.truncf %130 : vector<8x128xf32> to vector<8x128xbf16>
    %c0_35 = arith.constant 0 : index
    %c0_36 = arith.constant 0 : index
    %132 = vector.load %arg4[%c0_35, %c0_36] : memref<128x1024xbf16, #tpu.memory_space<vmem>>, vector<128x1024xbf16>
    %cst_37 = arith.constant dense<0.000000e+00> : vector<8x1024xf32>
    %133 = tpu.matmul %131, %132, %cst_37 {dimension_numbers = #tpu.dot_dimension_numbers<[1], [0], [0], [1], [0, 0, 1, 1], [], []>} : vector<8x128xbf16>, vector<128x1024xbf16>, vector<8x1024xf32> -> vector<8x1024xf32>
    %134 = vector.extract_strided_slice %133 {offsets = [0, 0], sizes = [8, 512], strides = [1, 1]} : vector<8x1024xf32> to vector<8x512xf32>
    %135 = vector.extract_strided_slice %133 {offsets = [0, 512], sizes = [8, 512], strides = [1, 1]} : vector<8x1024xf32> to vector<8x512xf32>
    %136 = arith.truncf %109 : vector<8x128xf32> to vector<8x128xbf16>
    %c0_38 = arith.constant 0 : index
    %c0_39 = arith.constant 0 : index
    %137 = vector.load %arg5[%c0_38, %c0_39] : memref<128x512xbf16, #tpu.memory_space<vmem>>, vector<128x512xbf16>
    %cst_40 = arith.constant dense<0.000000e+00> : vector<8x512xf32>
    %138 = tpu.matmul %136, %137, %cst_40 {dimension_numbers = #tpu.dot_dimension_numbers<[1], [0], [0], [1], [0, 0, 1, 1], [], []>} : vector<8x128xbf16>, vector<128x512xbf16>, vector<8x512xf32> -> vector<8x512xf32>
    %139 = arith.addf %135, %138 : vector<8x512xf32>
    %c0_41 = arith.constant 0 : index
    %c0_42 = arith.constant 0 : index
    %140 = vector.load %arg6[%c0_41, %c0_42] : memref<1x512xf32, #tpu.memory_space<vmem>>, vector<1x512xf32>
    %141 = vector.broadcast %140 : vector<1x512xf32> to vector<8x512xf32>
    %142 = arith.addf %139, %141 : vector<8x512xf32>
    %143 = vector.extract_strided_slice %142 {offsets = [0, 0], sizes = [8, 384], strides = [1, 1]} : vector<8x512xf32> to vector<8x384xf32>
    %144 = arith.negf %143 : vector<8x384xf32>
    %145 = math.exp %144 : vector<8x384xf32>
    %cst_43 = arith.constant 1.000000e+00 : f32
    %146 = vector.broadcast %cst_43 : f32 to vector<8x384xf32>
    %147 = arith.addf %146, %145 : vector<8x384xf32>
    %148 = arith.divf %146, %147 : vector<8x384xf32>
    %149 = vector.extract_strided_slice %142 {offsets = [0, 384], sizes = [8, 128], strides = [1, 1]} : vector<8x512xf32> to vector<8x128xf32>
    %150 = math.tanh %149 : vector<8x128xf32>
    %151 = vector.extract_strided_slice %148 {offsets = [0, 0], sizes = [8, 128], strides = [1, 1]} : vector<8x384xf32> to vector<8x128xf32>
    %152 = vector.extract_strided_slice %148 {offsets = [0, 128], sizes = [8, 128], strides = [1, 1]} : vector<8x384xf32> to vector<8x128xf32>
    %153 = vector.extract_strided_slice %148 {offsets = [0, 256], sizes = [8, 128], strides = [1, 1]} : vector<8x384xf32> to vector<8x128xf32>
    %154 = arith.mulf %152, %107 : vector<8x128xf32>
    %155 = arith.mulf %151, %150 : vector<8x128xf32>
    %156 = arith.addf %154, %155 : vector<8x128xf32>
    %157 = math.tanh %156 : vector<8x128xf32>
    %158 = arith.mulf %153, %157 : vector<8x128xf32>
    %c3_i32 = arith.constant 3 : i32
    %c8_i32_44 = arith.constant 8 : i32
    %159 = arith.muli %c3_i32, %c8_i32_44 : i32
    %160 = tpu.assume_multiple %159, 8 : i32
    %161 = arith.index_cast %160 : i32 to index
    %c0_45 = arith.constant 0 : index
    %162 = vector.load %arg10[%161, %c0_45] : memref<64x512xf32, #tpu.memory_space<vmem>>, vector<8x512xf32>
    %163 = arith.addf %162, %134 : vector<8x512xf32>
    %164 = vector.extract_strided_slice %163 {offsets = [0, 0], sizes = [8, 384], strides = [1, 1]} : vector<8x512xf32> to vector<8x384xf32>
    %165 = arith.negf %164 : vector<8x384xf32>
    %166 = math.exp %165 : vector<8x384xf32>
    %cst_46 = arith.constant 1.000000e+00 : f32
    %167 = vector.broadcast %cst_46 : f32 to vector<8x384xf32>
    %168 = arith.addf %167, %166 : vector<8x384xf32>
    %169 = arith.divf %167, %168 : vector<8x384xf32>
    %170 = vector.extract_strided_slice %163 {offsets = [0, 384], sizes = [8, 128], strides = [1, 1]} : vector<8x512xf32> to vector<8x128xf32>
    %171 = math.tanh %170 : vector<8x128xf32>
    %172 = vector.extract_strided_slice %169 {offsets = [0, 0], sizes = [8, 128], strides = [1, 1]} : vector<8x384xf32> to vector<8x128xf32>
    %173 = vector.extract_strided_slice %169 {offsets = [0, 128], sizes = [8, 128], strides = [1, 1]} : vector<8x384xf32> to vector<8x128xf32>
    %174 = vector.extract_strided_slice %169 {offsets = [0, 256], sizes = [8, 128], strides = [1, 1]} : vector<8x384xf32> to vector<8x128xf32>
    %175 = arith.mulf %173, %128 : vector<8x128xf32>
    %176 = arith.mulf %172, %171 : vector<8x128xf32>
    %177 = arith.addf %175, %176 : vector<8x128xf32>
    %178 = math.tanh %177 : vector<8x128xf32>
    %179 = arith.mulf %174, %178 : vector<8x128xf32>
    %180 = arith.truncf %179 : vector<8x128xf32> to vector<8x128xbf16>
    %c0_47 = arith.constant 0 : index
    %c0_48 = arith.constant 0 : index
    %181 = vector.load %arg4[%c0_47, %c0_48] : memref<128x1024xbf16, #tpu.memory_space<vmem>>, vector<128x1024xbf16>
    %cst_49 = arith.constant dense<0.000000e+00> : vector<8x1024xf32>
    %182 = tpu.matmul %180, %181, %cst_49 {dimension_numbers = #tpu.dot_dimension_numbers<[1], [0], [0], [1], [0, 0, 1, 1], [], []>} : vector<8x128xbf16>, vector<128x1024xbf16>, vector<8x1024xf32> -> vector<8x1024xf32>
    %183 = vector.extract_strided_slice %182 {offsets = [0, 0], sizes = [8, 512], strides = [1, 1]} : vector<8x1024xf32> to vector<8x512xf32>
    %184 = vector.extract_strided_slice %182 {offsets = [0, 512], sizes = [8, 512], strides = [1, 1]} : vector<8x1024xf32> to vector<8x512xf32>
    %185 = arith.truncf %158 : vector<8x128xf32> to vector<8x128xbf16>
    %c0_50 = arith.constant 0 : index
    %c0_51 = arith.constant 0 : index
    %186 = vector.load %arg5[%c0_50, %c0_51] : memref<128x512xbf16, #tpu.memory_space<vmem>>, vector<128x512xbf16>
    %cst_52 = arith.constant dense<0.000000e+00> : vector<8x512xf32>
    %187 = tpu.matmul %185, %186, %cst_52 {dimension_numbers = #tpu.dot_dimension_numbers<[1], [0], [0], [1], [0, 0, 1, 1], [], []>} : vector<8x128xbf16>, vector<128x512xbf16>, vector<8x512xf32> -> vector<8x512xf32>
    %188 = arith.addf %184, %187 : vector<8x512xf32>
    %c0_53 = arith.constant 0 : index
    %c0_54 = arith.constant 0 : index
    %189 = vector.load %arg6[%c0_53, %c0_54] : memref<1x512xf32, #tpu.memory_space<vmem>>, vector<1x512xf32>
    %190 = vector.broadcast %189 : vector<1x512xf32> to vector<8x512xf32>
    %191 = arith.addf %188, %190 : vector<8x512xf32>
    %192 = vector.extract_strided_slice %191 {offsets = [0, 0], sizes = [8, 384], strides = [1, 1]} : vector<8x512xf32> to vector<8x384xf32>
    %193 = arith.negf %192 : vector<8x384xf32>
    %194 = math.exp %193 : vector<8x384xf32>
    %cst_55 = arith.constant 1.000000e+00 : f32
    %195 = vector.broadcast %cst_55 : f32 to vector<8x384xf32>
    %196 = arith.addf %195, %194 : vector<8x384xf32>
    %197 = arith.divf %195, %196 : vector<8x384xf32>
    %198 = vector.extract_strided_slice %191 {offsets = [0, 384], sizes = [8, 128], strides = [1, 1]} : vector<8x512xf32> to vector<8x128xf32>
    %199 = math.tanh %198 : vector<8x128xf32>
    %200 = vector.extract_strided_slice %197 {offsets = [0, 0], sizes = [8, 128], strides = [1, 1]} : vector<8x384xf32> to vector<8x128xf32>
    %201 = vector.extract_strided_slice %197 {offsets = [0, 128], sizes = [8, 128], strides = [1, 1]} : vector<8x384xf32> to vector<8x128xf32>
    %202 = vector.extract_strided_slice %197 {offsets = [0, 256], sizes = [8, 128], strides = [1, 1]} : vector<8x384xf32> to vector<8x128xf32>
    %203 = arith.mulf %201, %156 : vector<8x128xf32>
    %204 = arith.mulf %200, %199 : vector<8x128xf32>
    %205 = arith.addf %203, %204 : vector<8x128xf32>
    %206 = math.tanh %205 : vector<8x128xf32>
    %207 = arith.mulf %202, %206 : vector<8x128xf32>
    %c4_i32 = arith.constant 4 : i32
    %c8_i32_56 = arith.constant 8 : i32
    %208 = arith.muli %c4_i32, %c8_i32_56 : i32
    %209 = tpu.assume_multiple %208, 8 : i32
    %210 = arith.index_cast %209 : i32 to index
    %c0_57 = arith.constant 0 : index
    %211 = vector.load %arg10[%210, %c0_57] : memref<64x512xf32, #tpu.memory_space<vmem>>, vector<8x512xf32>
    %212 = arith.addf %211, %183 : vector<8x512xf32>
    %213 = vector.extract_strided_slice %212 {offsets = [0, 0], sizes = [8, 384], strides = [1, 1]} : vector<8x512xf32> to vector<8x384xf32>
    %214 = arith.negf %213 : vector<8x384xf32>
    %215 = math.exp %214 : vector<8x384xf32>
    %cst_58 = arith.constant 1.000000e+00 : f32
    %216 = vector.broadcast %cst_58 : f32 to vector<8x384xf32>
    %217 = arith.addf %216, %215 : vector<8x384xf32>
    %218 = arith.divf %216, %217 : vector<8x384xf32>
    %219 = vector.extract_strided_slice %212 {offsets = [0, 384], sizes = [8, 128], strides = [1, 1]} : vector<8x512xf32> to vector<8x128xf32>
    %220 = math.tanh %219 : vector<8x128xf32>
    %221 = vector.extract_strided_slice %218 {offsets = [0, 0], sizes = [8, 128], strides = [1, 1]} : vector<8x384xf32> to vector<8x128xf32>
    %222 = vector.extract_strided_slice %218 {offsets = [0, 128], sizes = [8, 128], strides = [1, 1]} : vector<8x384xf32> to vector<8x128xf32>
    %223 = vector.extract_strided_slice %218 {offsets = [0, 256], sizes = [8, 128], strides = [1, 1]} : vector<8x384xf32> to vector<8x128xf32>
    %224 = arith.mulf %222, %177 : vector<8x128xf32>
    %225 = arith.mulf %221, %220 : vector<8x128xf32>
    %226 = arith.addf %224, %225 : vector<8x128xf32>
    %227 = math.tanh %226 : vector<8x128xf32>
    %228 = arith.mulf %223, %227 : vector<8x128xf32>
    %229 = arith.truncf %228 : vector<8x128xf32> to vector<8x128xbf16>
    %c0_59 = arith.constant 0 : index
    %c0_60 = arith.constant 0 : index
    %230 = vector.load %arg4[%c0_59, %c0_60] : memref<128x1024xbf16, #tpu.memory_space<vmem>>, vector<128x1024xbf16>
    %cst_61 = arith.constant dense<0.000000e+00> : vector<8x1024xf32>
    %231 = tpu.matmul %229, %230, %cst_61 {dimension_numbers = #tpu.dot_dimension_numbers<[1], [0], [0], [1], [0, 0, 1, 1], [], []>} : vector<8x128xbf16>, vector<128x1024xbf16>, vector<8x1024xf32> -> vector<8x1024xf32>
    %232 = vector.extract_strided_slice %231 {offsets = [0, 0], sizes = [8, 512], strides = [1, 1]} : vector<8x1024xf32> to vector<8x512xf32>
    %233 = vector.extract_strided_slice %231 {offsets = [0, 512], sizes = [8, 512], strides = [1, 1]} : vector<8x1024xf32> to vector<8x512xf32>
    %234 = arith.truncf %207 : vector<8x128xf32> to vector<8x128xbf16>
    %c0_62 = arith.constant 0 : index
    %c0_63 = arith.constant 0 : index
    %235 = vector.load %arg5[%c0_62, %c0_63] : memref<128x512xbf16, #tpu.memory_space<vmem>>, vector<128x512xbf16>
    %cst_64 = arith.constant dense<0.000000e+00> : vector<8x512xf32>
    %236 = tpu.matmul %234, %235, %cst_64 {dimension_numbers = #tpu.dot_dimension_numbers<[1], [0], [0], [1], [0, 0, 1, 1], [], []>} : vector<8x128xbf16>, vector<128x512xbf16>, vector<8x512xf32> -> vector<8x512xf32>
    %237 = arith.addf %233, %236 : vector<8x512xf32>
    %c0_65 = arith.constant 0 : index
    %c0_66 = arith.constant 0 : index
    %238 = vector.load %arg6[%c0_65, %c0_66] : memref<1x512xf32, #tpu.memory_space<vmem>>, vector<1x512xf32>
    %239 = vector.broadcast %238 : vector<1x512xf32> to vector<8x512xf32>
    %240 = arith.addf %237, %239 : vector<8x512xf32>
    %241 = vector.extract_strided_slice %240 {offsets = [0, 0], sizes = [8, 384], strides = [1, 1]} : vector<8x512xf32> to vector<8x384xf32>
    %242 = arith.negf %241 : vector<8x384xf32>
    %243 = math.exp %242 : vector<8x384xf32>
    %cst_67 = arith.constant 1.000000e+00 : f32
    %244 = vector.broadcast %cst_67 : f32 to vector<8x384xf32>
    %245 = arith.addf %244, %243 : vector<8x384xf32>
    %246 = arith.divf %244, %245 : vector<8x384xf32>
    %247 = vector.extract_strided_slice %240 {offsets = [0, 384], sizes = [8, 128], strides = [1, 1]} : vector<8x512xf32> to vector<8x128xf32>
    %248 = math.tanh %247 : vector<8x128xf32>
    %249 = vector.extract_strided_slice %246 {offsets = [0, 0], sizes = [8, 128], strides = [1, 1]} : vector<8x384xf32> to vector<8x128xf32>
    %250 = vector.extract_strided_slice %246 {offsets = [0, 128], sizes = [8, 128], strides = [1, 1]} : vector<8x384xf32> to vector<8x128xf32>
    %251 = vector.extract_strided_slice %246 {offsets = [0, 256], sizes = [8, 128], strides = [1, 1]} : vector<8x384xf32> to vector<8x128xf32>
    %252 = arith.mulf %250, %205 : vector<8x128xf32>
    %253 = arith.mulf %249, %248 : vector<8x128xf32>
    %254 = arith.addf %252, %253 : vector<8x128xf32>
    %255 = math.tanh %254 : vector<8x128xf32>
    %256 = arith.mulf %251, %255 : vector<8x128xf32>
    %c5_i32 = arith.constant 5 : i32
    %c8_i32_68 = arith.constant 8 : i32
    %257 = arith.muli %c5_i32, %c8_i32_68 : i32
    %258 = tpu.assume_multiple %257, 8 : i32
    %259 = arith.index_cast %258 : i32 to index
    %c0_69 = arith.constant 0 : index
    %260 = vector.load %arg10[%259, %c0_69] : memref<64x512xf32, #tpu.memory_space<vmem>>, vector<8x512xf32>
    %261 = arith.addf %260, %232 : vector<8x512xf32>
    %262 = vector.extract_strided_slice %261 {offsets = [0, 0], sizes = [8, 384], strides = [1, 1]} : vector<8x512xf32> to vector<8x384xf32>
    %263 = arith.negf %262 : vector<8x384xf32>
    %264 = math.exp %263 : vector<8x384xf32>
    %cst_70 = arith.constant 1.000000e+00 : f32
    %265 = vector.broadcast %cst_70 : f32 to vector<8x384xf32>
    %266 = arith.addf %265, %264 : vector<8x384xf32>
    %267 = arith.divf %265, %266 : vector<8x384xf32>
    %268 = vector.extract_strided_slice %261 {offsets = [0, 384], sizes = [8, 128], strides = [1, 1]} : vector<8x512xf32> to vector<8x128xf32>
    %269 = math.tanh %268 : vector<8x128xf32>
    %270 = vector.extract_strided_slice %267 {offsets = [0, 0], sizes = [8, 128], strides = [1, 1]} : vector<8x384xf32> to vector<8x128xf32>
    %271 = vector.extract_strided_slice %267 {offsets = [0, 128], sizes = [8, 128], strides = [1, 1]} : vector<8x384xf32> to vector<8x128xf32>
    %272 = vector.extract_strided_slice %267 {offsets = [0, 256], sizes = [8, 128], strides = [1, 1]} : vector<8x384xf32> to vector<8x128xf32>
    %273 = arith.mulf %271, %226 : vector<8x128xf32>
    %274 = arith.mulf %270, %269 : vector<8x128xf32>
    %275 = arith.addf %273, %274 : vector<8x128xf32>
    %276 = math.tanh %275 : vector<8x128xf32>
    %277 = arith.mulf %272, %276 : vector<8x128xf32>
    %278 = arith.truncf %277 : vector<8x128xf32> to vector<8x128xbf16>
    %c0_71 = arith.constant 0 : index
    %c0_72 = arith.constant 0 : index
    %279 = vector.load %arg4[%c0_71, %c0_72] : memref<128x1024xbf16, #tpu.memory_space<vmem>>, vector<128x1024xbf16>
    %cst_73 = arith.constant dense<0.000000e+00> : vector<8x1024xf32>
    %280 = tpu.matmul %278, %279, %cst_73 {dimension_numbers = #tpu.dot_dimension_numbers<[1], [0], [0], [1], [0, 0, 1, 1], [], []>} : vector<8x128xbf16>, vector<128x1024xbf16>, vector<8x1024xf32> -> vector<8x1024xf32>
    %281 = vector.extract_strided_slice %280 {offsets = [0, 0], sizes = [8, 512], strides = [1, 1]} : vector<8x1024xf32> to vector<8x512xf32>
    %282 = vector.extract_strided_slice %280 {offsets = [0, 512], sizes = [8, 512], strides = [1, 1]} : vector<8x1024xf32> to vector<8x512xf32>
    %283 = arith.truncf %256 : vector<8x128xf32> to vector<8x128xbf16>
    %c0_74 = arith.constant 0 : index
    %c0_75 = arith.constant 0 : index
    %284 = vector.load %arg5[%c0_74, %c0_75] : memref<128x512xbf16, #tpu.memory_space<vmem>>, vector<128x512xbf16>
    %cst_76 = arith.constant dense<0.000000e+00> : vector<8x512xf32>
    %285 = tpu.matmul %283, %284, %cst_76 {dimension_numbers = #tpu.dot_dimension_numbers<[1], [0], [0], [1], [0, 0, 1, 1], [], []>} : vector<8x128xbf16>, vector<128x512xbf16>, vector<8x512xf32> -> vector<8x512xf32>
    %286 = arith.addf %282, %285 : vector<8x512xf32>
    %c0_77 = arith.constant 0 : index
    %c0_78 = arith.constant 0 : index
    %287 = vector.load %arg6[%c0_77, %c0_78] : memref<1x512xf32, #tpu.memory_space<vmem>>, vector<1x512xf32>
    %288 = vector.broadcast %287 : vector<1x512xf32> to vector<8x512xf32>
    %289 = arith.addf %286, %288 : vector<8x512xf32>
    %290 = vector.extract_strided_slice %289 {offsets = [0, 0], sizes = [8, 384], strides = [1, 1]} : vector<8x512xf32> to vector<8x384xf32>
    %291 = arith.negf %290 : vector<8x384xf32>
    %292 = math.exp %291 : vector<8x384xf32>
    %cst_79 = arith.constant 1.000000e+00 : f32
    %293 = vector.broadcast %cst_79 : f32 to vector<8x384xf32>
    %294 = arith.addf %293, %292 : vector<8x384xf32>
    %295 = arith.divf %293, %294 : vector<8x384xf32>
    %296 = vector.extract_strided_slice %289 {offsets = [0, 384], sizes = [8, 128], strides = [1, 1]} : vector<8x512xf32> to vector<8x128xf32>
    %297 = math.tanh %296 : vector<8x128xf32>
    %298 = vector.extract_strided_slice %295 {offsets = [0, 0], sizes = [8, 128], strides = [1, 1]} : vector<8x384xf32> to vector<8x128xf32>
    %299 = vector.extract_strided_slice %295 {offsets = [0, 128], sizes = [8, 128], strides = [1, 1]} : vector<8x384xf32> to vector<8x128xf32>
    %300 = vector.extract_strided_slice %295 {offsets = [0, 256], sizes = [8, 128], strides = [1, 1]} : vector<8x384xf32> to vector<8x128xf32>
    %301 = arith.mulf %299, %254 : vector<8x128xf32>
    %302 = arith.mulf %298, %297 : vector<8x128xf32>
    %303 = arith.addf %301, %302 : vector<8x128xf32>
    %304 = math.tanh %303 : vector<8x128xf32>
    %305 = arith.mulf %300, %304 : vector<8x128xf32>
    %c6_i32 = arith.constant 6 : i32
    %c8_i32_80 = arith.constant 8 : i32
    %306 = arith.muli %c6_i32, %c8_i32_80 : i32
    %307 = tpu.assume_multiple %306, 8 : i32
    %308 = arith.index_cast %307 : i32 to index
    %c0_81 = arith.constant 0 : index
    %309 = vector.load %arg10[%308, %c0_81] : memref<64x512xf32, #tpu.memory_space<vmem>>, vector<8x512xf32>
    %310 = arith.addf %309, %281 : vector<8x512xf32>
    %311 = vector.extract_strided_slice %310 {offsets = [0, 0], sizes = [8, 384], strides = [1, 1]} : vector<8x512xf32> to vector<8x384xf32>
    %312 = arith.negf %311 : vector<8x384xf32>
    %313 = math.exp %312 : vector<8x384xf32>
    %cst_82 = arith.constant 1.000000e+00 : f32
    %314 = vector.broadcast %cst_82 : f32 to vector<8x384xf32>
    %315 = arith.addf %314, %313 : vector<8x384xf32>
    %316 = arith.divf %314, %315 : vector<8x384xf32>
    %317 = vector.extract_strided_slice %310 {offsets = [0, 384], sizes = [8, 128], strides = [1, 1]} : vector<8x512xf32> to vector<8x128xf32>
    %318 = math.tanh %317 : vector<8x128xf32>
    %319 = vector.extract_strided_slice %316 {offsets = [0, 0], sizes = [8, 128], strides = [1, 1]} : vector<8x384xf32> to vector<8x128xf32>
    %320 = vector.extract_strided_slice %316 {offsets = [0, 128], sizes = [8, 128], strides = [1, 1]} : vector<8x384xf32> to vector<8x128xf32>
    %321 = vector.extract_strided_slice %316 {offsets = [0, 256], sizes = [8, 128], strides = [1, 1]} : vector<8x384xf32> to vector<8x128xf32>
    %322 = arith.mulf %320, %275 : vector<8x128xf32>
    %323 = arith.mulf %319, %318 : vector<8x128xf32>
    %324 = arith.addf %322, %323 : vector<8x128xf32>
    %325 = math.tanh %324 : vector<8x128xf32>
    %326 = arith.mulf %321, %325 : vector<8x128xf32>
    %327 = arith.truncf %326 : vector<8x128xf32> to vector<8x128xbf16>
    %c0_83 = arith.constant 0 : index
    %c0_84 = arith.constant 0 : index
    %328 = vector.load %arg4[%c0_83, %c0_84] : memref<128x1024xbf16, #tpu.memory_space<vmem>>, vector<128x1024xbf16>
    %cst_85 = arith.constant dense<0.000000e+00> : vector<8x1024xf32>
    %329 = tpu.matmul %327, %328, %cst_85 {dimension_numbers = #tpu.dot_dimension_numbers<[1], [0], [0], [1], [0, 0, 1, 1], [], []>} : vector<8x128xbf16>, vector<128x1024xbf16>, vector<8x1024xf32> -> vector<8x1024xf32>
    %330 = vector.extract_strided_slice %329 {offsets = [0, 0], sizes = [8, 512], strides = [1, 1]} : vector<8x1024xf32> to vector<8x512xf32>
    %331 = vector.extract_strided_slice %329 {offsets = [0, 512], sizes = [8, 512], strides = [1, 1]} : vector<8x1024xf32> to vector<8x512xf32>
    %332 = arith.truncf %305 : vector<8x128xf32> to vector<8x128xbf16>
    %c0_86 = arith.constant 0 : index
    %c0_87 = arith.constant 0 : index
    %333 = vector.load %arg5[%c0_86, %c0_87] : memref<128x512xbf16, #tpu.memory_space<vmem>>, vector<128x512xbf16>
    %cst_88 = arith.constant dense<0.000000e+00> : vector<8x512xf32>
    %334 = tpu.matmul %332, %333, %cst_88 {dimension_numbers = #tpu.dot_dimension_numbers<[1], [0], [0], [1], [0, 0, 1, 1], [], []>} : vector<8x128xbf16>, vector<128x512xbf16>, vector<8x512xf32> -> vector<8x512xf32>
    %335 = arith.addf %331, %334 : vector<8x512xf32>
    %c0_89 = arith.constant 0 : index
    %c0_90 = arith.constant 0 : index
    %336 = vector.load %arg6[%c0_89, %c0_90] : memref<1x512xf32, #tpu.memory_space<vmem>>, vector<1x512xf32>
    %337 = vector.broadcast %336 : vector<1x512xf32> to vector<8x512xf32>
    %338 = arith.addf %335, %337 : vector<8x512xf32>
    %339 = vector.extract_strided_slice %338 {offsets = [0, 0], sizes = [8, 384], strides = [1, 1]} : vector<8x512xf32> to vector<8x384xf32>
    %340 = arith.negf %339 : vector<8x384xf32>
    %341 = math.exp %340 : vector<8x384xf32>
    %cst_91 = arith.constant 1.000000e+00 : f32
    %342 = vector.broadcast %cst_91 : f32 to vector<8x384xf32>
    %343 = arith.addf %342, %341 : vector<8x384xf32>
    %344 = arith.divf %342, %343 : vector<8x384xf32>
    %345 = vector.extract_strided_slice %338 {offsets = [0, 384], sizes = [8, 128], strides = [1, 1]} : vector<8x512xf32> to vector<8x128xf32>
    %346 = math.tanh %345 : vector<8x128xf32>
    %347 = vector.extract_strided_slice %344 {offsets = [0, 0], sizes = [8, 128], strides = [1, 1]} : vector<8x384xf32> to vector<8x128xf32>
    %348 = vector.extract_strided_slice %344 {offsets = [0, 128], sizes = [8, 128], strides = [1, 1]} : vector<8x384xf32> to vector<8x128xf32>
    %349 = vector.extract_strided_slice %344 {offsets = [0, 256], sizes = [8, 128], strides = [1, 1]} : vector<8x384xf32> to vector<8x128xf32>
    %350 = arith.mulf %348, %303 : vector<8x128xf32>
    %351 = arith.mulf %347, %346 : vector<8x128xf32>
    %352 = arith.addf %350, %351 : vector<8x128xf32>
    %353 = math.tanh %352 : vector<8x128xf32>
    %354 = arith.mulf %349, %353 : vector<8x128xf32>
    %c7_i32 = arith.constant 7 : i32
    %c8_i32_92 = arith.constant 8 : i32
    %355 = arith.muli %c7_i32, %c8_i32_92 : i32
    %356 = tpu.assume_multiple %355, 8 : i32
    %357 = arith.index_cast %356 : i32 to index
    %c0_93 = arith.constant 0 : index
    %358 = vector.load %arg10[%357, %c0_93] : memref<64x512xf32, #tpu.memory_space<vmem>>, vector<8x512xf32>
    %359 = arith.addf %358, %330 : vector<8x512xf32>
    %360 = vector.extract_strided_slice %359 {offsets = [0, 0], sizes = [8, 384], strides = [1, 1]} : vector<8x512xf32> to vector<8x384xf32>
    %361 = arith.negf %360 : vector<8x384xf32>
    %362 = math.exp %361 : vector<8x384xf32>
    %cst_94 = arith.constant 1.000000e+00 : f32
    %363 = vector.broadcast %cst_94 : f32 to vector<8x384xf32>
    %364 = arith.addf %363, %362 : vector<8x384xf32>
    %365 = arith.divf %363, %364 : vector<8x384xf32>
    %366 = vector.extract_strided_slice %359 {offsets = [0, 384], sizes = [8, 128], strides = [1, 1]} : vector<8x512xf32> to vector<8x128xf32>
    %367 = math.tanh %366 : vector<8x128xf32>
    %368 = vector.extract_strided_slice %365 {offsets = [0, 0], sizes = [8, 128], strides = [1, 1]} : vector<8x384xf32> to vector<8x128xf32>
    %369 = vector.extract_strided_slice %365 {offsets = [0, 128], sizes = [8, 128], strides = [1, 1]} : vector<8x384xf32> to vector<8x128xf32>
    %370 = vector.extract_strided_slice %365 {offsets = [0, 256], sizes = [8, 128], strides = [1, 1]} : vector<8x384xf32> to vector<8x128xf32>
    %371 = arith.mulf %369, %324 : vector<8x128xf32>
    %372 = arith.mulf %368, %367 : vector<8x128xf32>
    %373 = arith.addf %371, %372 : vector<8x128xf32>
    %374 = math.tanh %373 : vector<8x128xf32>
    %375 = arith.mulf %370, %374 : vector<8x128xf32>
    %376 = arith.truncf %375 : vector<8x128xf32> to vector<8x128xbf16>
    %c0_95 = arith.constant 0 : index
    %c0_96 = arith.constant 0 : index
    %377 = vector.load %arg4[%c0_95, %c0_96] : memref<128x1024xbf16, #tpu.memory_space<vmem>>, vector<128x1024xbf16>
    %cst_97 = arith.constant dense<0.000000e+00> : vector<8x1024xf32>
    %378 = tpu.matmul %376, %377, %cst_97 {dimension_numbers = #tpu.dot_dimension_numbers<[1], [0], [0], [1], [0, 0, 1, 1], [], []>} : vector<8x128xbf16>, vector<128x1024xbf16>, vector<8x1024xf32> -> vector<8x1024xf32>
    %379 = vector.extract_strided_slice %378 {offsets = [0, 0], sizes = [8, 512], strides = [1, 1]} : vector<8x1024xf32> to vector<8x512xf32>
    %380 = vector.extract_strided_slice %378 {offsets = [0, 512], sizes = [8, 512], strides = [1, 1]} : vector<8x1024xf32> to vector<8x512xf32>
    %381 = arith.truncf %354 : vector<8x128xf32> to vector<8x128xbf16>
    %c0_98 = arith.constant 0 : index
    %c0_99 = arith.constant 0 : index
    %382 = vector.load %arg5[%c0_98, %c0_99] : memref<128x512xbf16, #tpu.memory_space<vmem>>, vector<128x512xbf16>
    %cst_100 = arith.constant dense<0.000000e+00> : vector<8x512xf32>
    %383 = tpu.matmul %381, %382, %cst_100 {dimension_numbers = #tpu.dot_dimension_numbers<[1], [0], [0], [1], [0, 0, 1, 1], [], []>} : vector<8x128xbf16>, vector<128x512xbf16>, vector<8x512xf32> -> vector<8x512xf32>
    %384 = arith.addf %380, %383 : vector<8x512xf32>
    %c0_101 = arith.constant 0 : index
    %c0_102 = arith.constant 0 : index
    %385 = vector.load %arg6[%c0_101, %c0_102] : memref<1x512xf32, #tpu.memory_space<vmem>>, vector<1x512xf32>
    %386 = vector.broadcast %385 : vector<1x512xf32> to vector<8x512xf32>
    %387 = arith.addf %384, %386 : vector<8x512xf32>
    %388 = vector.extract_strided_slice %387 {offsets = [0, 0], sizes = [8, 384], strides = [1, 1]} : vector<8x512xf32> to vector<8x384xf32>
    %389 = arith.negf %388 : vector<8x384xf32>
    %390 = math.exp %389 : vector<8x384xf32>
    %cst_103 = arith.constant 1.000000e+00 : f32
    %391 = vector.broadcast %cst_103 : f32 to vector<8x384xf32>
    %392 = arith.addf %391, %390 : vector<8x384xf32>
    %393 = arith.divf %391, %392 : vector<8x384xf32>
    %394 = vector.extract_strided_slice %387 {offsets = [0, 384], sizes = [8, 128], strides = [1, 1]} : vector<8x512xf32> to vector<8x128xf32>
    %395 = math.tanh %394 : vector<8x128xf32>
    %396 = vector.extract_strided_slice %393 {offsets = [0, 0], sizes = [8, 128], strides = [1, 1]} : vector<8x384xf32> to vector<8x128xf32>
    %397 = vector.extract_strided_slice %393 {offsets = [0, 128], sizes = [8, 128], strides = [1, 1]} : vector<8x384xf32> to vector<8x128xf32>
    %398 = vector.extract_strided_slice %393 {offsets = [0, 256], sizes = [8, 128], strides = [1, 1]} : vector<8x384xf32> to vector<8x128xf32>
    %399 = arith.mulf %397, %352 : vector<8x128xf32>
    %400 = arith.mulf %396, %395 : vector<8x128xf32>
    %401 = arith.addf %399, %400 : vector<8x128xf32>
    %402 = math.tanh %401 : vector<8x128xf32>
    %403 = arith.mulf %398, %402 : vector<8x128xf32>
    %c8_i32_104 = arith.constant 8 : i32
    %c0_105 = arith.constant 0 : index
    %c0_106 = arith.constant 0 : index
    %404 = vector.load %arg7[%c0_105, %c0_106] : memref<128x1xf32, #tpu.memory_space<vmem>>, vector<128x1xf32>
    %cst_107 = arith.constant dense<0.000000e+00> : vector<8x1xf32>
    %405 = tpu.matmul %403, %404, %cst_107 {dimension_numbers = #tpu.dot_dimension_numbers<[1], [0], [0], [1], [0, 0, 1, 1], [], []>} : vector<8x128xf32>, vector<128x1xf32>, vector<8x1xf32> -> vector<8x1xf32>
    %c0_108 = arith.constant 0 : index
    %c0_109 = arith.constant 0 : index
    %406 = vector.load %arg8[%c0_108, %c0_109] : memref<1x1xf32, #tpu.memory_space<vmem>>, vector<1x1xf32>
    %407 = vector.broadcast %406 : vector<1x1xf32> to vector<8x1xf32>
    %408 = arith.addf %405, %407 : vector<8x1xf32>
    %c0_110 = arith.constant 0 : index
    %c0_111 = arith.constant 0 : index
    %c0_112 = arith.constant 0 : index
    %409 = vector.load %arg9[%c0_110, %c0_111, %c0_112] : memref<1x8x1xf32, #tpu.memory_space<vmem>>, vector<1x8x1xf32>
    %410 = vector.shape_cast %409 : vector<1x8x1xf32> to vector<8x1xf32>
    %411 = vector.shape_cast %408 : vector<8x1xf32> to vector<1x8x1xf32>
    tpu.vector_store %arg9[%c0_110, %c0_111, %c0_112], %411 {strides = array<i32>} : memref<1x8x1xf32, #tpu.memory_space<vmem>>, vector<1x8x1xf32>,
    return
  }
  func.func @transform_0(%arg0: i32) -> (i32, i32, i32) {
    %c0_i32 = arith.constant 0 : i32
    %c0_i32_0 = arith.constant 0 : i32
    %c0_i32_1 = arith.constant 0 : i32
    return %arg0, %c0_i32, %c0_i32_0 : i32, i32, i32
  }
  func.func @transform_1(%arg0: i32) -> (i32, i32) {
    %c0_i32 = arith.constant 0 : i32
    %c0_i32_0 = arith.constant 0 : i32
    %c0_i32_1 = arith.constant 0 : i32
    return %c0_i32, %c0_i32_0 : i32, i32
  }
  func.func @transform_2(%arg0: i32) -> (i32, i32) {
    %c0_i32 = arith.constant 0 : i32
    %c0_i32_0 = arith.constant 0 : i32
    %c0_i32_1 = arith.constant 0 : i32
    return %c0_i32, %c0_i32_0 : i32, i32
  }
  func.func @transform_3(%arg0: i32) -> (i32, i32) {
    %c0_i32 = arith.constant 0 : i32
    %c0_i32_0 = arith.constant 0 : i32
    %c0_i32_1 = arith.constant 0 : i32
    return %c0_i32, %c0_i32_0 : i32, i32
  }
  func.func @transform_4(%arg0: i32) -> (i32, i32) {
    %c0_i32 = arith.constant 0 : i32
    %c0_i32_0 = arith.constant 0 : i32
    %c0_i32_1 = arith.constant 0 : i32
    return %c0_i32, %c0_i32_0 : i32, i32
  }
  func.func @transform_5(%arg0: i32) -> (i32, i32) {
    %c0_i32 = arith.constant 0 : i32
    %c0_i32_0 = arith.constant 0 : i32
    %c0_i32_1 = arith.constant 0 : i32
    return %c0_i32, %c0_i32_0 : i32, i32
  }
  func.func @transform_6(%arg0: i32) -> (i32, i32) {
    %c0_i32 = arith.constant 0 : i32
    %c0_i32_0 = arith.constant 0 : i32
    %c0_i32_1 = arith.constant 0 : i32
    return %c0_i32, %c0_i32_0 : i32, i32
  }
  func.func @transform_7(%arg0: i32) -> (i32, i32) {
    %c0_i32 = arith.constant 0 : i32
    %c0_i32_0 = arith.constant 0 : i32
    %c0_i32_1 = arith.constant 0 : i32
    return %c0_i32, %c0_i32_0 : i32, i32
  }
  func.func @transform_8(%arg0: i32) -> (i32, i32, i32) {
    %c0_i32 = arith.constant 0 : i32
    %c0_i32_0 = arith.constant 0 : i32
    %c0_i32_1 = arith.constant 0 : i32
    return %arg0, %c0_i32, %c0_i32_0 : i32, i32, i32
  }
}

</mosaic_0001>

<llo_original>
// kernel: tpu_custom_call.1
$region0: #{tpu_custom_call.1}
  #allocation0 [shape = 'u32[]', space=smem, size = 0x4, offset = 0x4, fixed_abs, tag = 'smem constant byte address 0x4 - core index']
  #allocation1 [shape = 'u32[144,128]{1,0:T(1,128)}', space=vmem, size = 0x12000, scoped, tag = 'internal scratch']
  #allocation2 [shape = 'f32[64,512]{1,0:T(8,128)}', space=vmem, size = 0x20000, scoped, tag = 'scratch operand']
  #allocation3 [shape = 'f32[1,1]{1,0:T(1,128)S(1)}', space=vmem, size = 0x200, scoped, tag = 'scoped memory for tpu_custom_call.1']
  %s0 = inlined_call_operand.vmem [shape: f32[1,64,1], index: 0, kind: input, shape index: {}]
  %s1 = inlined_call_operand.vmem [shape: f32[1,512], index: 1, kind: input, shape index: {}]
  %s2 = inlined_call_operand.vmem [shape: f32[1,512], index: 2, kind: input, shape index: {}]
  %s3 = inlined_call_operand.hbm [shape: bf16[128,1024], index: 3, kind: input, shape index: {}]
  %s4 = inlined_call_operand.hbm [shape: bf16[128,512], index: 4, kind: input, shape index: {}]
  %s5 = inlined_call_operand.vmem [shape: f32[1,512], index: 5, kind: input, shape index: {}]
  %s6 = inlined_call_operand.vmem [shape: f32[128,1], index: 6, kind: input, shape index: {}]
  %s7 = inlined_call_operand.<no memory space> [shape: f32[1,1], index: 7, kind: input, shape index: {}]
  %s8 = inlined_call_operand.vmem [shape: f32[1,8,1], index: 8, kind: output, shape index: {}]
  %s9 = sld [smem:[#allocation0]]
  $region50: #{tpu_custom_call.1} parent=0
    _
  %s11 = ssub.s32 1, %s9
  %s12 = scalar_select 0, %s11, %s9
  %v13 = vstv %s7
  %14 = vst [vmem:[#allocation3] sm:$0x1] %v13
  $region1: #{tpu_custom_call.1} parent=0
    #allocation4 [shape = 'u8[262144]{0}', space=vmem, size = 0x40000, scoped, tag = 'input window, operand 3, single buffered']
    #allocation5 [shape = 's32[1]{0}', space=sflag, size = 0x4, scoped, tag = 'scoped memory for tpu_custom_call.1']
    #allocation6 [shape = 'u8[131072]{0}', space=vmem, size = 0x20000, scoped, tag = 'input window, operand 4, single buffered']
    #allocation7 [shape = 's32[1]{0}', space=sflag, size = 0x4, scoped, tag = 'scoped memory for tpu_custom_call.1']
    %15 = vsyncpa [#allocation5], 0
    %16 = vsyncpa [#allocation7], 0
    // Predicated region
    $region2: #{tpu_custom_call.1} parent=1 // pred_check
      _
    $region3: #{tpu_custom_call.1} parent=1 // pred_check_branch
      %18 = sbr.rel (0) target = $region5
    $region4: #{tpu_custom_call.1} parent=1 // pred_region
      _
    $region5: #{tpu_custom_call.1} parent=1 // pred_fallthru
      _
    // Predicated region
    $region6: #{tpu_custom_call.1} parent=1 // pred_check
      _
    $region7: #{tpu_custom_call.1} parent=1 // pred_check_branch
      %20 = sbr.rel (0) target = $region9
    $region8: #{tpu_custom_call.1} parent=1 // pred_region
      _
    $region9: #{tpu_custom_call.1} parent=1 // pred_fallthru
      _
    // Predicated region
    $region10: #{tpu_custom_call.1} parent=1 // pred_check
      _
    $region11: #{tpu_custom_call.1} parent=1 // pred_check_branch
      %22 = sbr.rel (0) target = $region13
    $region12: #{tpu_custom_call.1} parent=1 // pred_region
      _
    $region13: #{tpu_custom_call.1} parent=1 // pred_fallthru
      _
    // Predicated region
    $region14: #{tpu_custom_call.1} parent=1 // pred_check
      _
    $region15: #{tpu_custom_call.1} parent=1 // pred_check_branch
      %24 = sbr.rel (0) target = $region17
    $region16: #{tpu_custom_call.1} parent=1 // pred_region
      %s26 = ssub.s32 8192, 8192
      %27 = vsyncadd [#allocation5], %s26
      %s28 = sshll.u32 [#allocation4], 4
      %s29 = int_to_ptr.vmem [resolvable:$true] %s28
      %34 = dma.hbm_to_vmem [thread:$0]  %s3, 8192, %s29, [#allocation5], 512, 512, 32
    $region17: #{tpu_custom_call.1} parent=1 // pred_fallthru
      _
    // Predicated region
    $region18: #{tpu_custom_call.1} parent=1 // pred_check
      _
    $region19: #{tpu_custom_call.1} parent=1 // pred_check_branch
      %36 = sbr.rel (0) target = $region21
    $region20: #{tpu_custom_call.1} parent=1 // pred_region
      %s38 = ssub.s32 4096, 4096
      %39 = vsyncadd [#allocation7], %s38
      %s40 = sshll.u32 [#allocation6], 4
      %s41 = int_to_ptr.vmem [resolvable:$true] %s40
      %46 = dma.hbm_to_vmem [thread:$0]  %s4, 4096, %s41, [#allocation7], 256, 256, 16
    $region21: #{tpu_custom_call.1} parent=1 // pred_fallthru
      _
    // Predicated region
    $region22: #{tpu_custom_call.1} parent=1 // pred_check
      _
    $region23: #{tpu_custom_call.1} parent=1 // pred_check_branch
      %48 = sbr.rel (0) target = $region25
    $region24: #{tpu_custom_call.1} parent=1 // pred_region
      _
    $region25: #{tpu_custom_call.1} parent=1 // pred_fallthru
      _
    // Predicated region
    $region26: #{tpu_custom_call.1} parent=1 // pred_check
      _
    $region27: #{tpu_custom_call.1} parent=1 // pred_check_branch
      %50 = sbr.rel (0) target = $region29
    $region28: #{tpu_custom_call.1} parent=1 // pred_region
      _
    $region29: #{tpu_custom_call.1} parent=1 // pred_fallthru
      _
    // Predicated region
    $region30: #{tpu_custom_call.1} parent=1 // pred_check
      _
    $region31: #{tpu_custom_call.1} parent=1 // pred_check_branch
      %52 = sbr.rel (0) target = $region33
    $region32: #{tpu_custom_call.1} parent=1 // pred_region
      _
    $region33: #{tpu_custom_call.1} parent=1 // pred_fallthru
      _
    // Predicated region
    $region34: #{tpu_custom_call.1} parent=1 // pred_check
      _
    $region35: #{tpu_custom_call.1} parent=1 // pred_check_branch
      %54 = sbr.rel (0) target = $region37
    $region36: #{tpu_custom_call.1} parent=1 // pred_region
      %55 = dma.done [#allocation5], 8192
    $region37: #{tpu_custom_call.1} parent=1 // pred_fallthru
      _
    // Predicated region
    $region38: #{tpu_custom_call.1} parent=1 // pred_check
      _
    $region39: #{tpu_custom_call.1} parent=1 // pred_check_branch
      %57 = sbr.rel (0) target = $region41
    $region40: #{tpu_custom_call.1} parent=1 // pred_region
      %58 = dma.done [#allocation7], 4096
    $region41: #{tpu_custom_call.1} parent=1 // pred_fallthru
      _
    %v60 = vld [vmem:[%s0] sm:$0xff]
    %v61 = vld [vmem:[%s0 + $0x8] sm:$0xff]
    %v62 = vld [vmem:[%s0 + $0x10] sm:$0xff]
    %v63 = vld [vmem:[%s0 + $0x18] sm:$0xff]
    %v64 = vld [vmem:[%s0 + $0x20] sm:$0xff]
    %v65 = vld [vmem:[%s0 + $0x28] sm:$0xff]
    %v66 = vld [vmem:[%s0 + $0x30] sm:$0xff]
    %v67 = vld [vmem:[%s0 + $0x38] sm:$0xff]
    %v68 = vld [vmem:[%s1] sm:$0xf]
    %70 = vset.pattern.permute.xlu0 0
    %71 = vperm.xlu0 %70, %v60
    %v72 = vpop.permute.xlu0 %71
    %75 = vset.pattern.permute.xlu0 0
    %76 = vperm.xlu0 %75, %v61
    %v77 = vpop.permute.xlu0 %76
    %80 = vset.pattern.permute.xlu0 0
    %81 = vperm.xlu0 %80, %v62
    %v82 = vpop.permute.xlu0 %81
    %85 = vset.pattern.permute.xlu0 0
    %86 = vperm.xlu0 %85, %v63
    %v87 = vpop.permute.xlu0 %86
    %90 = vset.pattern.permute.xlu0 0
    %91 = vperm.xlu0 %90, %v64
    %v92 = vpop.permute.xlu0 %91
    %95 = vset.pattern.permute.xlu0 0
    %96 = vperm.xlu0 %95, %v65
    %v97 = vpop.permute.xlu0 %96
    %100 = vset.pattern.permute.xlu0 0
    %101 = vperm.xlu0 %100, %v66
    %v102 = vpop.permute.xlu0 %101
    %105 = vset.pattern.permute.xlu0 0
    %106 = vperm.xlu0 %105, %v67
    %v107 = vpop.permute.xlu0 %106
    %v110 = vlaneseq
    %v111 = vshrl.u32 %v110, 7
    %v112 = vsub.s32 0, %v111
    %v113 = vrot.slane %v68, %v112
    %v114 = vlaneseq
    %v115 = vshrl.u32 %v114, 7
    %v116 = vsub.s32 1, %v115
    %v117 = vrot.slane %v68, %v116
    %v118 = vlaneseq
    %v119 = vshrl.u32 %v118, 7
    %v120 = vsub.s32 2, %v119
    %v121 = vrot.slane %v68, %v120
    %v122 = vlaneseq
    %v123 = vshrl.u32 %v122, 7
    %v124 = vsub.s32 3, %v123
    %v125 = vrot.slane %v68, %v124
    %v130 = vmul.f32 %v72, %v113
    %v131 = vmul.f32 %v72, %v117
    %v132 = vmul.f32 %v72, %v121
    %v133 = vmul.f32 %v72, %v125
    %v134 = vmul.f32 %v77, %v113
    %v135 = vmul.f32 %v77, %v117
    %v136 = vmul.f32 %v77, %v121
    %v137 = vmul.f32 %v77, %v125
    %v138 = vmul.f32 %v82, %v113
    %v139 = vmul.f32 %v82, %v117
    %v140 = vmul.f32 %v82, %v121
    %v141 = vmul.f32 %v82, %v125
    %v142 = vmul.f32 %v87, %v113
    %v143 = vmul.f32 %v87, %v117
    %v144 = vmul.f32 %v87, %v121
    %v145 = vmul.f32 %v87, %v125
    %v146 = vmul.f32 %v92, %v113
    %v147 = vmul.f32 %v92, %v117
    %v148 = vmul.f32 %v92, %v121
    %v149 = vmul.f32 %v92, %v125
    %v150 = vmul.f32 %v97, %v113
    %v151 = vmul.f32 %v97, %v117
    %v152 = vmul.f32 %v97, %v121
    %v153 = vmul.f32 %v97, %v125
    %v154 = vmul.f32 %v102, %v113
    %v155 = vmul.f32 %v102, %v117
    %v156 = vmul.f32 %v102, %v121
    %v157 = vmul.f32 %v102, %v125
    %v158 = vmul.f32 %v107, %v113
    %v159 = vmul.f32 %v107, %v117
    %v160 = vmul.f32 %v107, %v121
    %v161 = vmul.f32 %v107, %v125
    %v162 = vld [vmem:[%s2] sm:$0xf]
    %v164 = vlaneseq
    %v165 = vshrl.u32 %v164, 7
    %v166 = vsub.s32 0, %v165
    %v167 = vrot.slane %v162, %v166
    %v168 = vlaneseq
    %v169 = vshrl.u32 %v168, 7
    %v170 = vsub.s32 1, %v169
    %v171 = vrot.slane %v162, %v170
    %v172 = vlaneseq
    %v173 = vshrl.u32 %v172, 7
    %v174 = vsub.s32 2, %v173
    %v175 = vrot.slane %v162, %v174
    %v176 = vlaneseq
    %v177 = vshrl.u32 %v176, 7
    %v178 = vsub.s32 3, %v177
    %v179 = vrot.slane %v162, %v178
    %v184 = vadd.f32 %v130, %v167
    %v185 = vadd.f32 %v131, %v171
    %v186 = vadd.f32 %v132, %v175
    %v187 = vadd.f32 %v133, %v179
    %v188 = vadd.f32 %v134, %v167
    %v189 = vadd.f32 %v135, %v171
    %v190 = vadd.f32 %v136, %v175
    %v191 = vadd.f32 %v137, %v179
    %v192 = vadd.f32 %v138, %v167
    %v193 = vadd.f32 %v139, %v171
    %v194 = vadd.f32 %v140, %v175
    %v195 = vadd.f32 %v141, %v179
    %v196 = vadd.f32 %v142, %v167
    %v197 = vadd.f32 %v143, %v171
    %v198 = vadd.f32 %v144, %v175
    %v199 = vadd.f32 %v145, %v179
    %v200 = vadd.f32 %v146, %v167
    %v201 = vadd.f32 %v147, %v171
    %v202 = vadd.f32 %v148, %v175
    %v203 = vadd.f32 %v149, %v179
    %v204 = vadd.f32 %v150, %v167
    %v205 = vadd.f32 %v151, %v171
    %v206 = vadd.f32 %v152, %v175
    %v207 = vadd.f32 %v153, %v179
    %v208 = vadd.f32 %v154, %v167
    %v209 = vadd.f32 %v155, %v171
    %v210 = vadd.f32 %v156, %v175
    %v211 = vadd.f32 %v157, %v179
    %v212 = vadd.f32 %v158, %v167
    %v213 = vadd.f32 %v159, %v171
    %v214 = vadd.f32 %v160, %v175
    %v215 = vadd.f32 %v161, %v179
    %216 = vst [vmem:[#allocation2] sm:$0xff] %v184
    %217 = vst [vmem:[#allocation2 + $0x8] sm:$0xff] %v185
    %218 = vst [vmem:[#allocation2 + $0x10] sm:$0xff] %v186
    %219 = vst [vmem:[#allocation2 + $0x18] sm:$0xff] %v187
    %220 = vst [vmem:[#allocation2 + $0x20] sm:$0xff] %v188
    %221 = vst [vmem:[#allocation2 + $0x28] sm:$0xff] %v189
    %222 = vst [vmem:[#allocation2 + $0x30] sm:$0xff] %v190
    %223 = vst [vmem:[#allocation2 + $0x38] sm:$0xff] %v191
    %224 = vst [vmem:[#allocation2 + $0x40] sm:$0xff] %v192
    %225 = vst [vmem:[#allocation2 + $0x48] sm:$0xff] %v193
    %226 = vst [vmem:[#allocation2 + $0x50] sm:$0xff] %v194
    %227 = vst [vmem:[#allocation2 + $0x58] sm:$0xff] %v195
    %228 = vst [vmem:[#allocation2 + $0x60] sm:$0xff] %v196
    %229 = vst [vmem:[#allocation2 + $0x68] sm:$0xff] %v197
    %230 = vst [vmem:[#allocation2 + $0x70] sm:$0xff] %v198
    %231 = vst [vmem:[#allocation2 + $0x78] sm:$0xff] %v199
    %232 = vst [vmem:[#allocation2 + $0x80] sm:$0xff] %v200
    %233 = vst [vmem:[#allocation2 + $0x88] sm:$0xff] %v201
    %234 = vst [vmem:[#allocation2 + $0x90] sm:$0xff] %v202
    %235 = vst [vmem:[#allocation2 + $0x98] sm:$0xff] %v203
    %236 = vst [vmem:[#allocation2 + $0xa0] sm:$0xff] %v204
    %237 = vst [vmem:[#allocation2 + $0xa8] sm:$0xff] %v205
    %238 = vst [vmem:[#allocation2 + $0xb0] sm:$0xff] %v206
    %239 = vst [vmem:[#allocation2 + $0xb8] sm:$0xff] %v207
    %240 = vst [vmem:[#allocation2 + $0xc0] sm:$0xff] %v208
    %241 = vst [vmem:[#allocation2 + $0xc8] sm:$0xff] %v209
    %242 = vst [vmem:[#allocation2 + $0xd0] sm:$0xff] %v210
    %243 = vst [vmem:[#allocation2 + $0xd8] sm:$0xff] %v211
    %244 = vst [vmem:[#allocation2 + $0xe0] sm:$0xff] %v212
    %245 = vst [vmem:[#allocation2 + $0xe8] sm:$0xff] %v213
    %246 = vst [vmem:[#allocation2 + $0xf0] sm:$0xff] %v214
    %247 = vst [vmem:[#allocation2 + $0xf8] sm:$0xff] %v215
    %s248 = smul.u32 0, 4
    %s249 = smul.addr %s248, 8
    %s250 = scalar_lea.vmem [#allocation2], %s249
    %v251 = vld [vmem:[%s250] sm:$0xff]
    %v252 = vld [vmem:[%s250 + $0x8] sm:$0xff]
    %v253 = vld [vmem:[%s250 + $0x10] sm:$0xff]
    %v254 = vld [vmem:[%s250 + $0x18] sm:$0xff]
    %v255 = vadd.f32 %v251, 0.0
    %v256 = vadd.f32 %v252, 0.0
    %v257 = vadd.f32 %v253, 0.0
    %v258 = vadd.f32 %v254, 0.0
    %v259 = vxor.u32 %v255, 2147483648
    %v260 = vxor.u32 %v256, 2147483648
    %v261 = vxor.u32 %v257, 2147483648
    %v262 = vmul.f32 %v259, 1.442695
    %v263 = vpow.pop %v262
    %v264 = vmul.f32 %v260, 1.442695
    %v265 = vpow.pop %v264
    %v266 = vmul.f32 %v261, 1.442695
    %v267 = vpow.pop %v266
    %v268 = vadd.f32 %v263, 1.0
    %v269 = vadd.f32 %v265, 1.0
    %v270 = vadd.f32 %v267, 1.0
    %v271 = vrcp.pop %v268
    %v272 = vmul.f32 1.0, %v271
    %v273 = vrcp.pop %v269
    %v274 = vmul.f32 1.0, %v273
    %v275 = vrcp.pop %v270
    %v276 = vmul.f32 1.0, %v275
    %v277 = vtanh.pop %v258
    %v278 = vmul.f32 %v274, 0.0
    %v279 = vmul.f32 %v272, %v277
    %v280 = vadd.f32 %v278, %v279
    %v281 = vtanh.pop %v280
    %v282 = vmul.f32 %v276, %v281
    %v283 = vpack.c.bf16 %v282, %v282
    %v284 = vld [vmem:[#allocation4] sm:$0xff]
    %v285 = vld [vmem:[#allocation4 + $0x8] sm:$0xff]
    %v286 = vld [vmem:[#allocation4 + $0x10] sm:$0xff]
    %v287 = vld [vmem:[#allocation4 + $0x18] sm:$0xff]
    %v288 = vld [vmem:[#allocation4 + $0x20] sm:$0xff]
    %v289 = vld [vmem:[#allocation4 + $0x28] sm:$0xff]
    %v290 = vld [vmem:[#allocation4 + $0x30] sm:$0xff]
    %v291 = vld [vmem:[#allocation4 + $0x38] sm:$0xff]
    %v292 = vld [vmem:[#allocation4 + $0x40] sm:$0xff]
    %v293 = vld [vmem:[#allocation4 + $0x48] sm:$0xff]
    %v294 = vld [vmem:[#allocation4 + $0x50] sm:$0xff]
    %v295 = vld [vmem:[#allocation4 + $0x58] sm:$0xff]
    %v296 = vld [vmem:[#allocation4 + $0x60] sm:$0xff]
    %v297 = vld [vmem:[#allocation4 + $0x68] sm:$0xff]
    %v298 = vld [vmem:[#allocation4 + $0x70] sm:$0xff]
    %v299 = vld [vmem:[#allocation4 + $0x78] sm:$0xff]
    %v300 = vld [vmem:[#allocation4 + $0x80] sm:$0xff]
    %v301 = vld [vmem:[#allocation4 + $0x88] sm:$0xff]
    %v302 = vld [vmem:[#allocation4 + $0x90] sm:$0xff]
    %v303 = vld [vmem:[#allocation4 + $0x98] sm:$0xff]
    %v304 = vld [vmem:[#allocation4 + $0xa0] sm:$0xff]
    %v305 = vld [vmem:[#allocation4 + $0xa8] sm:$0xff]
    %v306 = vld [vmem:[#allocation4 + $0xb0] sm:$0xff]
    %v307 = vld [vmem:[#allocation4 + $0xb8] sm:$0xff]
    %v308 = vld [vmem:[#allocation4 + $0xc0] sm:$0xff]
    %v309 = vld [vmem:[#allocation4 + $0xc8] sm:$0xff]
    %v310 = vld [vmem:[#allocation4 + $0xd0] sm:$0xff]
    %v311 = vld [vmem:[#allocation4 + $0xd8] sm:$0xff]
    %v312 = vld [vmem:[#allocation4 + $0xe0] sm:$0xff]
    %v313 = vld [vmem:[#allocation4 + $0xe8] sm:$0xff]
    %v314 = vld [vmem:[#allocation4 + $0xf0] sm:$0xff]
    %v315 = vld [vmem:[#allocation4 + $0xf8] sm:$0xff]
    %v316 = vld [vmem:[#allocation4 + $0x100] sm:$0xff]
    %v317 = vld [vmem:[#allocation4 + $0x108] sm:$0xff]
    %v318 = vld [vmem:[#allocation4 + $0x110] sm:$0xff]
    %v319 = vld [vmem:[#allocation4 + $0x118] sm:$0xff]
    %v320 = vld [vmem:[#allocation4 + $0x120] sm:$0xff]
    %v321 = vld [vmem:[#allocation4 + $0x128] sm:$0xff]
    %v322 = vld [vmem:[#allocation4 + $0x130] sm:$0xff]
    %v323 = vld [vmem:[#allocation4 + $0x138] sm:$0xff]
    %v324 = vld [vmem:[#allocation4 + $0x140] sm:$0xff]
    %v325 = vld [vmem:[#allocation4 + $0x148] sm:$0xff]
    %v326 = vld [vmem:[#allocation4 + $0x150] sm:$0xff]
    %v327 = vld [vmem:[#allocation4 + $0x158] sm:$0xff]
    %v328 = vld [vmem:[#allocation4 + $0x160] sm:$0xff]
    %v329 = vld [vmem:[#allocation4 + $0x168] sm:$0xff]
    %v330 = vld [vmem:[#allocation4 + $0x170] sm:$0xff]
    %v331 = vld [vmem:[#allocation4 + $0x178] sm:$0xff]
    %v332 = vld [vmem:[#allocation4 + $0x180] sm:$0xff]
    %v333 = vld [vmem:[#allocation4 + $0x188] sm:$0xff]
    %v334 = vld [vmem:[#allocation4 + $0x190] sm:$0xff]
    %v335 = vld [vmem:[#allocation4 + $0x198] sm:$0xff]
    %v336 = vld [vmem:[#allocation4 + $0x1a0] sm:$0xff]
    %v337 = vld [vmem:[#allocation4 + $0x1a8] sm:$0xff]
    %v338 = vld [vmem:[#allocation4 + $0x1b0] sm:$0xff]
    %v339 = vld [vmem:[#allocation4 + $0x1b8] sm:$0xff]
    %v340 = vld [vmem:[#allocation4 + $0x1c0] sm:$0xff]
    %v341 = vld [vmem:[#allocation4 + $0x1c8] sm:$0xff]
    %v342 = vld [vmem:[#allocation4 + $0x1d0] sm:$0xff]
    %v343 = vld [vmem:[#allocation4 + $0x1d8] sm:$0xff]
    %v344 = vld [vmem:[#allocation4 + $0x1e0] sm:$0xff]
    %v345 = vld [vmem:[#allocation4 + $0x1e8] sm:$0xff]
    %v346 = vld [vmem:[#allocation4 + $0x1f0] sm:$0xff]
    %v347 = vld [vmem:[#allocation4 + $0x1f8] sm:$0xff]
    %v412 = vunpack.c.l.b16 %v284
    %v413 = vunpack.c.h.b16 %v284
    %v414 = vunpack.c.l.b16 %v285
    %v415 = vunpack.c.h.b16 %v285
    %v416 = vunpack.c.l.b16 %v286
    %v417 = vunpack.c.h.b16 %v286
    %v418 = vunpack.c.l.b16 %v287
    %v419 = vunpack.c.h.b16 %v287
    %v420 = vunpack.c.l.b16 %v288
    %v421 = vunpack.c.h.b16 %v288
    %v422 = vunpack.c.l.b16 %v289
    %v423 = vunpack.c.h.b16 %v289
    %v424 = vunpack.c.l.b16 %v290
    %v425 = vunpack.c.h.b16 %v290
    %v426 = vunpack.c.l.b16 %v291
    %v427 = vunpack.c.h.b16 %v291
    %v428 = vunpack.c.l.b16 %v292
    %v429 = vunpack.c.h.b16 %v292
    %v430 = vunpack.c.l.b16 %v293
    %v431 = vunpack.c.h.b16 %v293
    %v432 = vunpack.c.l.b16 %v294
    %v433 = vunpack.c.h.b16 %v294
    %v434 = vunpack.c.l.b16 %v295
    %v435 = vunpack.c.h.b16 %v295
    %v436 = vunpack.c.l.b16 %v296
    %v437 = vunpack.c.h.b16 %v296
    %v438 = vunpack.c.l.b16 %v297
    %v439 = vunpack.c.h.b16 %v297
    %v440 = vunpack.c.l.b16 %v298
    %v441 = vunpack.c.h.b16 %v298
    %v442 = vunpack.c.l.b16 %v299
    %v443 = vunpack.c.h.b16 %v299
    %v444 = vunpack.c.l.b16 %v300
    %v445 = vunpack.c.h.b16 %v300
    %v446 = vunpack.c.l.b16 %v301
    %v447 = vunpack.c.h.b16 %v301
    %v448 = vunpack.c.l.b16 %v302
    %v449 = vunpack.c.h.b16 %v302
    %v450 = vunpack.c.l.b16 %v303
    %v451 = vunpack.c.h.b16 %v303
    %v452 = vunpack.c.l.b16 %v304
    %v453 = vunpack.c.h.b16 %v304
    %v454 = vunpack.c.l.b16 %v305
    %v455 = vunpack.c.h.b16 %v305
    %v456 = vunpack.c.l.b16 %v306
    %v457 = vunpack.c.h.b16 %v306
    %v458 = vunpack.c.l.b16 %v307
    %v459 = vunpack.c.h.b16 %v307
    %v460 = vunpack.c.l.b16 %v308
    %v461 = vunpack.c.h.b16 %v308
    %v462 = vunpack.c.l.b16 %v309
    %v463 = vunpack.c.h.b16 %v309
    %v464 = vunpack.c.l.b16 %v310
    %v465 = vunpack.c.h.b16 %v310
    %v466 = vunpack.c.l.b16 %v311
    %v467 = vunpack.c.h.b16 %v311
    %v468 = vunpack.c.l.b16 %v312
    %v469 = vunpack.c.h.b16 %v312
    %v470 = vunpack.c.l.b16 %v313
    %v471 = vunpack.c.h.b16 %v313
    %v472 = vunpack.c.l.b16 %v314
    %v473 = vunpack.c.h.b16 %v314
    %v474 = vunpack.c.l.b16 %v315
    %v475 = vunpack.c.h.b16 %v315
    %v476 = vunpack.c.l.b16 %v316
    %v477 = vunpack.c.h.b16 %v316
    %v478 = vunpack.c.l.b16 %v317
    %v479 = vunpack.c.h.b16 %v317
    %v480 = vunpack.c.l.b16 %v318
    %v481 = vunpack.c.h.b16 %v318
    %v482 = vunpack.c.l.b16 %v319
    %v483 = vunpack.c.h.b16 %v319
    %v484 = vunpack.c.l.b16 %v320
    %v485 = vunpack.c.h.b16 %v320
    %v486 = vunpack.c.l.b16 %v321
    %v487 = vunpack.c.h.b16 %v321
    %v488 = vunpack.c.l.b16 %v322
    %v489 = vunpack.c.h.b16 %v322
    %v490 = vunpack.c.l.b16 %v323
    %v491 = vunpack.c.h.b16 %v323
    %v492 = vunpack.c.l.b16 %v324
    %v493 = vunpack.c.h.b16 %v324
    %v494 = vunpack.c.l.b16 %v325
    %v495 = vunpack.c.h.b16 %v325
    %v496 = vunpack.c.l.b16 %v326
    %v497 = vunpack.c.h.b16 %v326
    %v498 = vunpack.c.l.b16 %v327
    %v499 = vunpack.c.h.b16 %v327
    %v500 = vunpack.c.l.b16 %v328
    %v501 = vunpack.c.h.b16 %v328
    %v502 = vunpack.c.l.b16 %v329
    %v503 = vunpack.c.h.b16 %v329
    %v504 = vunpack.c.l.b16 %v330
    %v505 = vunpack.c.h.b16 %v330
    %v506 = vunpack.c.l.b16 %v331
    %v507 = vunpack.c.h.b16 %v331
    %v508 = vunpack.c.l.b16 %v332
    %v509 = vunpack.c.h.b16 %v332
    %v510 = vunpack.c.l.b16 %v333
    %v511 = vunpack.c.h.b16 %v333
    %v512 = vunpack.c.l.b16 %v334
    %v513 = vunpack.c.h.b16 %v334
    %v514 = vunpack.c.l.b16 %v335
    %v515 = vunpack.c.h.b16 %v335
    %v516 = vunpack.c.l.b16 %v336
    %v517 = vunpack.c.h.b16 %v336
    %v518 = vunpack.c.l.b16 %v337
    %v519 = vunpack.c.h.b16 %v337
    %v520 = vunpack.c.l.b16 %v338
    %v521 = vunpack.c.h.b16 %v338
    %v522 = vunpack.c.l.b16 %v339
    %v523 = vunpack.c.h.b16 %v339
    %v524 = vunpack.c.l.b16 %v340
    %v525 = vunpack.c.h.b16 %v340
    %v526 = vunpack.c.l.b16 %v341
    %v527 = vunpack.c.h.b16 %v341
    %v528 = vunpack.c.l.b16 %v342
    %v529 = vunpack.c.h.b16 %v342
    %v530 = vunpack.c.l.b16 %v343
    %v531 = vunpack.c.h.b16 %v343
    %v532 = vunpack.c.l.b16 %v344
    %v533 = vunpack.c.h.b16 %v344
    %v534 = vunpack.c.l.b16 %v345
    %v535 = vunpack.c.h.b16 %v345
    %v536 = vunpack.c.l.b16 %v346
    %v537 = vunpack.c.h.b16 %v346
    %v538 = vunpack.c.l.b16 %v347
    %v539 = vunpack.c.h.b16 %v347
    %v540 = vpack.c.b16 %v420, %v412
    %v541 = vpack.c.b16 %v421, %v413
    %v542 = vpack.c.b16 %v422, %v414
    %v543 = vpack.c.b16 %v423, %v415
    %v544 = vpack.c.b16 %v424, %v416
    %v545 = vpack.c.b16 %v425, %v417
    %v546 = vpack.c.b16 %v426, %v418
    %v547 = vpack.c.b16 %v427, %v419
    %v548 = vpack.c.b16 %v436, %v428
    %v549 = vpack.c.b16 %v437, %v429
    %v550 = vpack.c.b16 %v438, %v430
    %v551 = vpack.c.b16 %v439, %v431
    %v552 = vpack.c.b16 %v440, %v432
    %v553 = vpack.c.b16 %v441, %v433
    %v554 = vpack.c.b16 %v442, %v434
    %v555 = vpack.c.b16 %v443, %v435
    %v556 = vpack.c.b16 %v452, %v444
    %v557 = vpack.c.b16 %v453, %v445
    %v558 = vpack.c.b16 %v454, %v446
    %v559 = vpack.c.b16 %v455, %v447
    %v560 = vpack.c.b16 %v456, %v448
    %v561 = vpack.c.b16 %v457, %v449
    %v562 = vpack.c.b16 %v458, %v450
    %v563 = vpack.c.b16 %v459, %v451
    %v564 = vpack.c.b16 %v468, %v460
    %v565 = vpack.c.b16 %v469, %v461
    %v566 = vpack.c.b16 %v470, %v462
    %v567 = vpack.c.b16 %v471, %v463
    %v568 = vpack.c.b16 %v472, %v464
    %v569 = vpack.c.b16 %v473, %v465
    %v570 = vpack.c.b16 %v474, %v466
    %v571 = vpack.c.b16 %v475, %v467
    %v572 = vpack.c.b16 %v484, %v476
    %v573 = vpack.c.b16 %v485, %v477
    %v574 = vpack.c.b16 %v486, %v478
    %v575 = vpack.c.b16 %v487, %v479
    %v576 = vpack.c.b16 %v488, %v480
    %v577 = vpack.c.b16 %v489, %v481
    %v578 = vpack.c.b16 %v490, %v482
    %v579 = vpack.c.b16 %v491, %v483
    %v580 = vpack.c.b16 %v500, %v492
    %v581 = vpack.c.b16 %v501, %v493
    %v582 = vpack.c.b16 %v502, %v494
    %v583 = vpack.c.b16 %v503, %v495
    %v584 = vpack.c.b16 %v504, %v496
    %v585 = vpack.c.b16 %v505, %v497
    %v586 = vpack.c.b16 %v506, %v498
    %v587 = vpack.c.b16 %v507, %v499
    %v588 = vpack.c.b16 %v516, %v508
    %v589 = vpack.c.b16 %v517, %v509
    %v590 = vpack.c.b16 %v518, %v510
    %v591 = vpack.c.b16 %v519, %v511
    %v592 = vpack.c.b16 %v520, %v512
    %v593 = vpack.c.b16 %v521, %v513
    %v594 = vpack.c.b16 %v522, %v514
    %v595 = vpack.c.b16 %v523, %v515
    %v596 = vpack.c.b16 %v532, %v524
    %v597 = vpack.c.b16 %v533, %v525
    %v598 = vpack.c.b16 %v534, %v526
    %v599 = vpack.c.b16 %v535, %v527
    %v600 = vpack.c.b16 %v536, %v528
    %v601 = vpack.c.b16 %v537, %v529
    %v602 = vpack.c.b16 %v538, %v530
    %v603 = vpack.c.b16 %v539, %v531
    %668 = vmatprep.subr.bf16.mxu0 %v597
    %669 = vmatpush1.bf16.msra.mxu0 %v596
    %670 = vmatprep.subr.bf16.mxu0 %v589
    %671 = vmatpush1.bf16.msra.mxu0 %v588
    %672 = vmatprep.subr.bf16.mxu0 %v581
    %673 = vmatpush1.bf16.msra.mxu0 %v580
    %674 = vmatprep.subr.bf16.mxu0 %v573
    %675 = vmatpush1.bf16.msra.mxu0 %v572
    %676 = vmatprep.subr.bf16.mxu0 %v565
    %677 = vmatpush1.bf16.msra.mxu0 %v564
    %678 = vmatprep.subr.bf16.mxu0 %v557
    %679 = vmatpush1.bf16.msra.mxu0 %v556
    %680 = vmatprep.subr.bf16.mxu0 %v549
    %681 = vmatpush1.bf16.msra.mxu0 %v548
    %682 = vmatprep.subr.bf16.mxu0 %v541
    %683 = vmatpush1.bf16.msra.mxu0 %v540
    %684 = vmatprep.subr.bf16.mxu0 0
    %685 = vmatpush2.bf16.msra.mxu0 0
    %686 = vmatprep.subr.bf16.mxu0 0
    %687 = vmatpush2.bf16.msra.mxu0 0
    %688 = vmatprep.subr.bf16.mxu0 0
    %689 = vmatpush2.bf16.msra.mxu0 0
    %690 = vmatprep.subr.bf16.mxu0 0
    %691 = vmatpush2.bf16.msra.mxu0 0
    %692 = vmatprep.subr.bf16.mxu0 0
    %693 = vmatpush2.bf16.msra.mxu0 0
    %694 = vmatprep.subr.bf16.mxu0 0
    %695 = vmatpush2.bf16.msra.mxu0 0
    %696 = vmatprep.subr.bf16.mxu0 0
    %697 = vmatpush2.bf16.msra.mxu0 0
    %698 = vmatprep.subr.bf16.mxu0 0
    %699 = vmatpush2.bf16.msra.mxu0 0
    %700 = vmatprep.mubr.bf16.mxu0 0
    %701 = vmatmul.mubr.bf16.gmra.mxu0 %v283
    %v702 = vpop.f32.mrf.mxu0
    %v703 = vadd.f32 0.0, %v702
    %v704 = vpop.f32.mrf.mxu0
    %v705 = vadd.f32 0.0, %v704
    %v706 = vpop.f32.mrf.mxu0
    %v707 = vpop.f32.mrf.mxu0
    %708 = vdwg.mxu0
    %709 = vmatprep.subr.bf16.mxu0 %v599
    %710 = vmatpush1.bf16.msra.mxu0 %v598
    %711 = vmatprep.subr.bf16.mxu0 %v591
    %712 = vmatpush1.bf16.msra.mxu0 %v590
    %713 = vmatprep.subr.bf16.mxu0 %v583
    %714 = vmatpush1.bf16.msra.mxu0 %v582
    %715 = vmatprep.subr.bf16.mxu0 %v575
    %716 = vmatpush1.bf16.msra.mxu0 %v574
    %717 = vmatprep.subr.bf16.mxu0 %v567
    %718 = vmatpush1.bf16.msra.mxu0 %v566
    %719 = vmatprep.subr.bf16.mxu0 %v559
    %720 = vmatpush1.bf16.msra.mxu0 %v558
    %721 = vmatprep.subr.bf16.mxu0 %v551
    %722 = vmatpush1.bf16.msra.mxu0 %v550
    %723 = vmatprep.subr.bf16.mxu0 %v543
    %724 = vmatpush1.bf16.msra.mxu0 %v542
    %725 = vmatprep.subr.bf16.mxu0 0
    %726 = vmatpush2.bf16.msra.mxu0 0
    %727 = vmatprep.subr.bf16.mxu0 0
    %728 = vmatpush2.bf16.msra.mxu0 0
    %729 = vmatprep.subr.bf16.mxu0 0
    %730 = vmatpush2.bf16.msra.mxu0 0
    %731 = vmatprep.subr.bf16.mxu0 0
    %732 = vmatpush2.bf16.msra.mxu0 0
    %733 = vmatprep.subr.bf16.mxu0 0
    %734 = vmatpush2.bf16.msra.mxu0 0
    %735 = vmatprep.subr.bf16.mxu0 0
    %736 = vmatpush2.bf16.msra.mxu0 0
    %737 = vmatprep.subr.bf16.mxu0 0
    %738 = vmatpush2.bf16.msra.mxu0 0
    %739 = vmatprep.subr.bf16.mxu0 0
    %740 = vmatpush2.bf16.msra.mxu0 0
    %741 = vmatprep.mubr.bf16.mxu0 0
    %742 = vmatmul.mubr.bf16.gmra.mxu0 %v283
    %v743 = vpop.f32.mrf.mxu0
    %v744 = vadd.f32 0.0, %v743
    %v745 = vpop.f32.mrf.mxu0
    %v746 = vadd.f32 0.0, %v745
    %v747 = vpop.f32.mrf.mxu0
    %v748 = vpop.f32.mrf.mxu0
    %749 = vdwg.mxu0
    %750 = vmatprep.subr.bf16.mxu0 %v601
    %751 = vmatpush1.bf16.msra.mxu0 %v600
    %752 = vmatprep.subr.bf16.mxu0 %v593
    %753 = vmatpush1.bf16.msra.mxu0 %v592
    %754 = vmatprep.subr.bf16.mxu0 %v585
    %755 = vmatpush1.bf16.msra.mxu0 %v584
    %756 = vmatprep.subr.bf16.mxu0 %v577
    %757 = vmatpush1.bf16.msra.mxu0 %v576
    %758 = vmatprep.subr.bf16.mxu0 %v569
    %759 = vmatpush1.bf16.msra.mxu0 %v568
    %760 = vmatprep.subr.bf16.mxu0 %v561
    %761 = vmatpush1.bf16.msra.mxu0 %v560
    %762 = vmatprep.subr.bf16.mxu0 %v553
    %763 = vmatpush1.bf16.msra.mxu0 %v552
    %764 = vmatprep.subr.bf16.mxu0 %v545
    %765 = vmatpush1.bf16.msra.mxu0 %v544
    %766 = vmatprep.subr.bf16.mxu0 0
    %767 = vmatpush2.bf16.msra.mxu0 0
    %768 = vmatprep.subr.bf16.mxu0 0
    %769 = vmatpush2.bf16.msra.mxu0 0
    %770 = vmatprep.subr.bf16.mxu0 0
    %771 = vmatpush2.bf16.msra.mxu0 0
    %772 = vmatprep.subr.bf16.mxu0 0
    %773 = vmatpush2.bf16.msra.mxu0 0
    %774 = vmatprep.subr.bf16.mxu0 0
    %775 = vmatpush2.bf16.msra.mxu0 0
    %776 = vmatprep.subr.bf16.mxu0 0
    %777 = vmatpush2.bf16.msra.mxu0 0
    %778 = vmatprep.subr.bf16.mxu0 0
    %779 = vmatpush2.bf16.msra.mxu0 0
    %780 = vmatprep.subr.bf16.mxu0 0
    %781 = vmatpush2.bf16.msra.mxu0 0
    %782 = vmatprep.mubr.bf16.mxu0 0
    %783 = vmatmul.mubr.bf16.gmra.mxu0 %v283
    %v784 = vpop.f32.mrf.mxu0
    %v785 = vadd.f32 0.0, %v784
    %v786 = vpop.f32.mrf.mxu0
    %v787 = vadd.f32 0.0, %v786
    %v788 = vpop.f32.mrf.mxu0
    %v789 = vpop.f32.mrf.mxu0
    %790 = vdwg.mxu0
    %791 = vmatprep.subr.bf16.mxu0 %v603
    %792 = vmatpush1.bf16.msra.mxu0 %v602
    %793 = vmatprep.subr.bf16.mxu0 %v595
    %794 = vmatpush1.bf16.msra.mxu0 %v594
    %795 = vmatprep.subr.bf16.mxu0 %v587
    %796 = vmatpush1.bf16.msra.mxu0 %v586
    %797 = vmatprep.subr.bf16.mxu0 %v579
    %798 = vmatpush1.bf16.msra.mxu0 %v578
    %799 = vmatprep.subr.bf16.mxu0 %v571
    %800 = vmatpush1.bf16.msra.mxu0 %v570
    %801 = vmatprep.subr.bf16.mxu0 %v563
    %802 = vmatpush1.bf16.msra.mxu0 %v562
    %803 = vmatprep.subr.bf16.mxu0 %v555
    %804 = vmatpush1.bf16.msra.mxu0 %v554
    %805 = vmatprep.subr.bf16.mxu0 %v547
    %806 = vmatpush1.bf16.msra.mxu0 %v546
    %807 = vmatprep.subr.bf16.mxu0 0
    %808 = vmatpush2.bf16.msra.mxu0 0
    %809 = vmatprep.subr.bf16.mxu0 0
    %810 = vmatpush2.bf16.msra.mxu0 0
    %811 = vmatprep.subr.bf16.mxu0 0
    %812 = vmatpush2.bf16.msra.mxu0 0
    %813 = vmatprep.subr.bf16.mxu0 0
    %814 = vmatpush2.bf16.msra.mxu0 0
    %815 = vmatprep.subr.bf16.mxu0 0
    %816 = vmatpush2.bf16.msra.mxu0 0
    %817 = vmatprep.subr.bf16.mxu0 0
    %818 = vmatpush2.bf16.msra.mxu0 0
    %819 = vmatprep.subr.bf16.mxu0 0
    %820 = vmatpush2.bf16.msra.mxu0 0
    %821 = vmatprep.subr.bf16.mxu0 0
    %822 = vmatpush2.bf16.msra.mxu0 0
    %823 = vmatprep.mubr.bf16.mxu0 0
    %824 = vmatmul.mubr.bf16.gmra.mxu0 %v283
    %v825 = vpop.f32.mrf.mxu0
    %v826 = vadd.f32 0.0, %v825
    %v827 = vpop.f32.mrf.mxu0
    %v828 = vadd.f32 0.0, %v827
    %v829 = vpop.f32.mrf.mxu0
    %v830 = vpop.f32.mrf.mxu0
    %831 = vdwg.mxu0
    %v832 = vld [vmem:[#allocation6] sm:$0xff]
    %v833 = vld [vmem:[#allocation6 + $0x8] sm:$0xff]
    %v834 = vld [vmem:[#allocation6 + $0x10] sm:$0xff]
    %v835 = vld [vmem:[#allocation6 + $0x18] sm:$0xff]
    %v836 = vld [vmem:[#allocation6 + $0x20] sm:$0xff]
    %v837 = vld [vmem:[#allocation6 + $0x28] sm:$0xff]
    %v838 = vld [vmem:[#allocation6 + $0x30] sm:$0xff]
    %v839 = vld [vmem:[#allocation6 + $0x38] sm:$0xff]
    %v840 = vld [vmem:[#allocation6 + $0x40] sm:$0xff]
    %v841 = vld [vmem:[#allocation6 + $0x48] sm:$0xff]
    %v842 = vld [vmem:[#allocation6 + $0x50] sm:$0xff]
    %v843 = vld [vmem:[#allocation6 + $0x58] sm:$0xff]
    %v844 = vld [vmem:[#allocation6 + $0x60] sm:$0xff]
    %v845 = vld [vmem:[#allocation6 + $0x68] sm:$0xff]
    %v846 = vld [vmem:[#allocation6 + $0x70] sm:$0xff]
    %v847 = vld [vmem:[#allocation6 + $0x78] sm:$0xff]
    %v848 = vld [vmem:[#allocation6 + $0x80] sm:$0xff]
    %v849 = vld [vmem:[#allocation6 + $0x88] sm:$0xff]
    %v850 = vld [vmem:[#allocation6 + $0x90] sm:$0xff]
    %v851 = vld [vmem:[#allocation6 + $0x98] sm:$0xff]
    %v852 = vld [vmem:[#allocation6 + $0xa0] sm:$0xff]
    %v853 = vld [vmem:[#allocation6 + $0xa8] sm:$0xff]
    %v854 = vld [vmem:[#allocation6 + $0xb0] sm:$0xff]
    %v855 = vld [vmem:[#allocation6 + $0xb8] sm:$0xff]
    %v856 = vld [vmem:[#allocation6 + $0xc0] sm:$0xff]
    %v857 = vld [vmem:[#allocation6 + $0xc8] sm:$0xff]
    %v858 = vld [vmem:[#allocation6 + $0xd0] sm:$0xff]
    %v859 = vld [vmem:[#allocation6 + $0xd8] sm:$0xff]
    %v860 = vld [vmem:[#allocation6 + $0xe0] sm:$0xff]
    %v861 = vld [vmem:[#allocation6 + $0xe8] sm:$0xff]
    %v862 = vld [vmem:[#allocation6 + $0xf0] sm:$0xff]
    %v863 = vld [vmem:[#allocation6 + $0xf8] sm:$0xff]
    %v896 = vunpack.c.l.b16 %v832
    %v897 = vunpack.c.h.b16 %v832
    %v898 = vunpack.c.l.b16 %v833
    %v899 = vunpack.c.h.b16 %v833
    %v900 = vunpack.c.l.b16 %v834
    %v901 = vunpack.c.h.b16 %v834
    %v902 = vunpack.c.l.b16 %v835
    %v903 = vunpack.c.h.b16 %v835
    %v904 = vunpack.c.l.b16 %v836
    %v905 = vunpack.c.h.b16 %v836
    %v906 = vunpack.c.l.b16 %v837
    %v907 = vunpack.c.h.b16 %v837
    %v908 = vunpack.c.l.b16 %v838
    %v909 = vunpack.c.h.b16 %v838
    %v910 = vunpack.c.l.b16 %v839
    %v911 = vunpack.c.h.b16 %v839
    %v912 = vunpack.c.l.b16 %v840
    %v913 = vunpack.c.h.b16 %v840
    %v914 = vunpack.c.l.b16 %v841
    %v915 = vunpack.c.h.b16 %v841
    %v916 = vunpack.c.l.b16 %v842
    %v917 = vunpack.c.h.b16 %v842
    %v918 = vunpack.c.l.b16 %v843
    %v919 = vunpack.c.h.b16 %v843
    %v920 = vunpack.c.l.b16 %v844
    %v921 = vunpack.c.h.b16 %v844
    %v922 = vunpack.c.l.b16 %v845
    %v923 = vunpack.c.h.b16 %v845
    %v924 = vunpack.c.l.b16 %v846
    %v925 = vunpack.c.h.b16 %v846
    %v926 = vunpack.c.l.b16 %v847
    %v927 = vunpack.c.h.b16 %v847
    %v928 = vunpack.c.l.b16 %v848
    %v929 = vunpack.c.h.b16 %v848
    %v930 = vunpack.c.l.b16 %v849
    %v931 = vunpack.c.h.b16 %v849
    %v932 = vunpack.c.l.b16 %v850
    %v933 = vunpack.c.h.b16 %v850
    %v934 = vunpack.c.l.b16 %v851
    %v935 = vunpack.c.h.b16 %v851
    %v936 = vunpack.c.l.b16 %v852
    %v937 = vunpack.c.h.b16 %v852
    %v938 = vunpack.c.l.b16 %v853
    %v939 = vunpack.c.h.b16 %v853
    %v940 = vunpack.c.l.b16 %v854
    %v941 = vunpack.c.h.b16 %v854
    %v942 = vunpack.c.l.b16 %v855
    %v943 = vunpack.c.h.b16 %v855
    %v944 = vunpack.c.l.b16 %v856
    %v945 = vunpack.c.h.b16 %v856
    %v946 = vunpack.c.l.b16 %v857
    %v947 = vunpack.c.h.b16 %v857
    %v948 = vunpack.c.l.b16 %v858
    %v949 = vunpack.c.h.b16 %v858
    %v950 = vunpack.c.l.b16 %v859
    %v951 = vunpack.c.h.b16 %v859
    %v952 = vunpack.c.l.b16 %v860
    %v953 = vunpack.c.h.b16 %v860
    %v954 = vunpack.c.l.b16 %v861
    %v955 = vunpack.c.h.b16 %v861
    %v956 = vunpack.c.l.b16 %v862
    %v957 = vunpack.c.h.b16 %v862
    %v958 = vunpack.c.l.b16 %v863
    %v959 = vunpack.c.h.b16 %v863
    %v960 = vpack.c.b16 %v900, %v896
    %v961 = vpack.c.b16 %v901, %v897
    %v962 = vpack.c.b16 %v902, %v898
    %v963 = vpack.c.b16 %v903, %v899
    %v964 = vpack.c.b16 %v908, %v904
    %v965 = vpack.c.b16 %v909, %v905
    %v966 = vpack.c.b16 %v910, %v906
    %v967 = vpack.c.b16 %v911, %v907
    %v968 = vpack.c.b16 %v916, %v912
    %v969 = vpack.c.b16 %v917, %v913
    %v970 = vpack.c.b16 %v918, %v914
    %v971 = vpack.c.b16 %v919, %v915
    %v972 = vpack.c.b16 %v924, %v920
    %v973 = vpack.c.b16 %v925, %v921
    %v974 = vpack.c.b16 %v926, %v922
    %v975 = vpack.c.b16 %v927, %v923
    %v976 = vpack.c.b16 %v932, %v928
    %v977 = vpack.c.b16 %v933, %v929
    %v978 = vpack.c.b16 %v934, %v930
    %v979 = vpack.c.b16 %v935, %v931
    %v980 = vpack.c.b16 %v940, %v936
    %v981 = vpack.c.b16 %v941, %v937
    %v982 = vpack.c.b16 %v942, %v938
    %v983 = vpack.c.b16 %v943, %v939
    %v984 = vpack.c.b16 %v948, %v944
    %v985 = vpack.c.b16 %v949, %v945
    %v986 = vpack.c.b16 %v950, %v946
    %v987 = vpack.c.b16 %v951, %v947
    %v988 = vpack.c.b16 %v956, %v952
    %v989 = vpack.c.b16 %v957, %v953
    %v990 = vpack.c.b16 %v958, %v954
    %v991 = vpack.c.b16 %v959, %v955
    %1024 = vmatprep.subr.bf16.mxu0 %v989
    %1025 = vmatpush1.bf16.msra.mxu0 %v988
    %1026 = vmatprep.subr.bf16.mxu0 %v985
    %1027 = vmatpush1.bf16.msra.mxu0 %v984
    %1028 = vmatprep.subr.bf16.mxu0 %v981
    %1029 = vmatpush1.bf16.msra.mxu0 %v980
    %1030 = vmatprep.subr.bf16.mxu0 %v977
    %1031 = vmatpush1.bf16.msra.mxu0 %v976
    %1032 = vmatprep.subr.bf16.mxu0 %v973
    %1033 = vmatpush1.bf16.msra.mxu0 %v972
    %1034 = vmatprep.subr.bf16.mxu0 %v969
    %1035 = vmatpush1.bf16.msra.mxu0 %v968
    %1036 = vmatprep.subr.bf16.mxu0 %v965
    %1037 = vmatpush1.bf16.msra.mxu0 %v964
    %1038 = vmatprep.subr.bf16.mxu0 %v961
    %1039 = vmatpush1.bf16.msra.mxu0 %v960
    %1040 = vmatprep.subr.bf16.mxu0 0
    %1041 = vmatpush2.bf16.msra.mxu0 0
    %1042 = vmatprep.subr.bf16.mxu0 0
    %1043 = vmatpush2.bf16.msra.mxu0 0
    %1044 = vmatprep.subr.bf16.mxu0 0
    %1045 = vmatpush2.bf16.msra.mxu0 0
    %1046 = vmatprep.subr.bf16.mxu0 0
    %1047 = vmatpush2.bf16.msra.mxu0 0
    %1048 = vmatprep.subr.bf16.mxu0 0
    %1049 = vmatpush2.bf16.msra.mxu0 0
    %1050 = vmatprep.subr.bf16.mxu0 0
    %1051 = vmatpush2.bf16.msra.mxu0 0
    %1052 = vmatprep.subr.bf16.mxu0 0
    %1053 = vmatpush2.bf16.msra.mxu0 0
    %1054 = vmatprep.subr.bf16.mxu0 0
    %1055 = vmatpush2.bf16.msra.mxu0 0
    %1056 = vmatprep.mubr.bf16.mxu0 0
    %1057 = vmatmul.mubr.bf16.gmra.mxu0 0
    %v1058 = vpop.f32.mrf.mxu0
    %v1059 = vadd.f32 0.0, %v1058
    %v1060 = vpop.f32.mrf.mxu0
    %v1061 = vadd.f32 0.0, %v1060
    %v1062 = vpop.f32.mrf.mxu0
    %v1063 = vpop.f32.mrf.mxu0
    %1064 = vdwg.mxu0
    %1065 = vmatprep.subr.bf16.mxu0 %v991
    %1066 = vmatpush1.bf16.msra.mxu0 %v990
    %1067 = vmatprep.subr.bf16.mxu0 %v987
    %1068 = vmatpush1.bf16.msra.mxu0 %v986
    %1069 = vmatprep.subr.bf16.mxu0 %v983
    %1070 = vmatpush1.bf16.msra.mxu0 %v982
    %1071 = vmatprep.subr.bf16.mxu0 %v979
    %1072 = vmatpush1.bf16.msra.mxu0 %v978
    %1073 = vmatprep.subr.bf16.mxu0 %v975
    %1074 = vmatpush1.bf16.msra.mxu0 %v974
    %1075 = vmatprep.subr.bf16.mxu0 %v971
    %1076 = vmatpush1.bf16.msra.mxu0 %v970
    %1077 = vmatprep.subr.bf16.mxu0 %v967
    %1078 = vmatpush1.bf16.msra.mxu0 %v966
    %1079 = vmatprep.subr.bf16.mxu0 %v963
    %1080 = vmatpush1.bf16.msra.mxu0 %v962
    %1081 = vmatprep.subr.bf16.mxu0 0
    %1082 = vmatpush2.bf16.msra.mxu0 0
    %1083 = vmatprep.subr.bf16.mxu0 0
    %1084 = vmatpush2.bf16.msra.mxu0 0
    %1085 = vmatprep.subr.bf16.mxu0 0
    %1086 = vmatpush2.bf16.msra.mxu0 0
    %1087 = vmatprep.subr.bf16.mxu0 0
    %1088 = vmatpush2.bf16.msra.mxu0 0
    %1089 = vmatprep.subr.bf16.mxu0 0
    %1090 = vmatpush2.bf16.msra.mxu0 0
    %1091 = vmatprep.subr.bf16.mxu0 0
    %1092 = vmatpush2.bf16.msra.mxu0 0
    %1093 = vmatprep.subr.bf16.mxu0 0
    %1094 = vmatpush2.bf16.msra.mxu0 0
    %1095 = vmatprep.subr.bf16.mxu0 0
    %1096 = vmatpush2.bf16.msra.mxu0 0
    %1097 = vmatprep.mubr.bf16.mxu0 0
    %1098 = vmatmul.mubr.bf16.gmra.mxu0 0
    %v1099 = vpop.f32.mrf.mxu0
    %v1100 = vadd.f32 0.0, %v1099
    %v1101 = vpop.f32.mrf.mxu0
    %v1102 = vadd.f32 0.0, %v1101
    %v1103 = vpop.f32.mrf.mxu0
    %v1104 = vpop.f32.mrf.mxu0
    %1105 = vdwg.mxu0
    %v1106 = vadd.f32 %v785, %v1059
    %v1107 = vadd.f32 %v787, %v1061
    %v1108 = vadd.f32 %v826, %v1100
    %v1109 = vadd.f32 %v828, %v1102
    %v1110 = vld [vmem:[%s5] sm:$0xf]
    %v1112 = vlaneseq
    %v1113 = vshrl.u32 %v1112, 7
    %v1114 = vsub.s32 0, %v1113
    %v1115 = vrot.slane %v1110, %v1114
    %v1116 = vlaneseq
    %v1117 = vshrl.u32 %v1116, 7
    %v1118 = vsub.s32 1, %v1117
    %v1119 = vrot.slane %v1110, %v1118
    %v1120 = vlaneseq
    %v1121 = vshrl.u32 %v1120, 7
    %v1122 = vsub.s32 2, %v1121
    %v1123 = vrot.slane %v1110, %v1122
    %v1124 = vlaneseq
    %v1125 = vshrl.u32 %v1124, 7
    %v1126 = vsub.s32 3, %v1125
    %v1127 = vrot.slane %v1110, %v1126
    %v1132 = vadd.f32 %v1106, %v1115
    %v1133 = vadd.f32 %v1107, %v1119
    %v1134 = vadd.f32 %v1108, %v1123
    %v1135 = vadd.f32 %v1109, %v1127
    %v1136 = vxor.u32 %v1132, 2147483648
    %v1137 = vxor.u32 %v1133, 2147483648
    %v1138 = vxor.u32 %v1134, 2147483648
    %v1139 = vmul.f32 %v1136, 1.442695
    %v1140 = vpow.pop %v1139
    %v1141 = vmul.f32 %v1137, 1.442695
    %v1142 = vpow.pop %v1141
    %v1143 = vmul.f32 %v1138, 1.442695
    %v1144 = vpow.pop %v1143
    %v1145 = vadd.f32 %v1140, 1.0
    %v1146 = vadd.f32 %v1142, 1.0
    %v1147 = vadd.f32 %v1144, 1.0
    %v1148 = vrcp.pop %v1145
    %v1149 = vmul.f32 1.0, %v1148
    %v1150 = vrcp.pop %v1146
    %v1151 = vmul.f32 1.0, %v1150
    %v1152 = vrcp.pop %v1147
    %v1153 = vmul.f32 1.0, %v1152
    %v1154 = vtanh.pop %v1135
    %v1155 = vmul.f32 %v1151, 0.0
    %v1156 = vmul.f32 %v1149, %v1154
    %v1157 = vadd.f32 %v1155, %v1156
    %v1158 = vtanh.pop %v1157
    %v1159 = vmul.f32 %v1153, %v1158
    %s1160 = smul.u32 1, 4
    %s1161 = smul.addr %s1160, 8
    %s1162 = scalar_lea.vmem [#allocation2], %s1161
    %v1163 = vld [vmem:[%s1162] sm:$0xff]
    %v1164 = vld [vmem:[%s1162 + $0x8] sm:$0xff]
    %v1165 = vld [vmem:[%s1162 + $0x10] sm:$0xff]
    %v1166 = vld [vmem:[%s1162 + $0x18] sm:$0xff]
    %v1167 = vadd.f32 %v1163, %v703
    %v1168 = vadd.f32 %v1164, %v705
    %v1169 = vadd.f32 %v1165, %v744
    %v1170 = vadd.f32 %v1166, %v746
    %v1171 = vxor.u32 %v1167, 2147483648
    %v1172 = vxor.u32 %v1168, 2147483648
    %v1173 = vxor.u32 %v1169, 2147483648
    %v1174 = vmul.f32 %v1171, 1.442695
    %v1175 = vpow.pop %v1174
    %v1176 = vmul.f32 %v1172, 1.442695
    %v1177 = vpow.pop %v1176
    %v1178 = vmul.f32 %v1173, 1.442695
    %v1179 = vpow.pop %v1178
    %v1180 = vadd.f32 %v1175, 1.0
    %v1181 = vadd.f32 %v1177, 1.0
    %v1182 = vadd.f32 %v1179, 1.0
    %v1183 = vrcp.pop %v1180
    %v1184 = vmul.f32 1.0, %v1183
    %v1185 = vrcp.pop %v1181
    %v1186 = vmul.f32 1.0, %v1185
    %v1187 = vrcp.pop %v1182
    %v1188 = vmul.f32 1.0, %v1187
    %v1189 = vtanh.pop %v1170
    %v1190 = vmul.f32 %v1186, %v280
    %v1191 = vmul.f32 %v1184, %v1189
    %v1192 = vadd.f32 %v1190, %v1191
    %v1193 = vtanh.pop %v1192
    %v1194 = vmul.f32 %v1188, %v1193
    %v1195 = vpack.c.bf16 %v1194, %v1194
    %1196 = vmatprep.subr.bf16.mxu0 %v597
    %1197 = vmatpush1.bf16.msra.mxu0 %v596
    %1198 = vmatprep.subr.bf16.mxu0 %v589
    %1199 = vmatpush1.bf16.msra.mxu0 %v588
    %1200 = vmatprep.subr.bf16.mxu0 %v581
    %1201 = vmatpush1.bf16.msra.mxu0 %v580
    %1202 = vmatprep.subr.bf16.mxu0 %v573
    %1203 = vmatpush1.bf16.msra.mxu0 %v572
    %1204 = vmatprep.subr.bf16.mxu0 %v565
    %1205 = vmatpush1.bf16.msra.mxu0 %v564
    %1206 = vmatprep.subr.bf16.mxu0 %v557
    %1207 = vmatpush1.bf16.msra.mxu0 %v556
    %1208 = vmatprep.subr.bf16.mxu0 %v549
    %1209 = vmatpush1.bf16.msra.mxu0 %v548
    %1210 = vmatprep.subr.bf16.mxu0 %v541
    %1211 = vmatpush1.bf16.msra.mxu0 %v540
    %1212 = vmatprep.subr.bf16.mxu0 0
    %1213 = vmatpush2.bf16.msra.mxu0 0
    %1214 = vmatprep.subr.bf16.mxu0 0
    %1215 = vmatpush2.bf16.msra.mxu0 0
    %1216 = vmatprep.subr.bf16.mxu0 0
    %1217 = vmatpush2.bf16.msra.mxu0 0
    %1218 = vmatprep.subr.bf16.mxu0 0
    %1219 = vmatpush2.bf16.msra.mxu0 0
    %1220 = vmatprep.subr.bf16.mxu0 0
    %1221 = vmatpush2.bf16.msra.mxu0 0
    %1222 = vmatprep.subr.bf16.mxu0 0
    %1223 = vmatpush2.bf16.msra.mxu0 0
    %1224 = vmatprep.subr.bf16.mxu0 0
    %1225 = vmatpush2.bf16.msra.mxu0 0
    %1226 = vmatprep.subr.bf16.mxu0 0
    %1227 = vmatpush2.bf16.msra.mxu0 0
    %1228 = vmatprep.mubr.bf16.mxu0 0
    %1229 = vmatmul.mubr.bf16.gmra.mxu0 %v1195
    %v1230 = vpop.f32.mrf.mxu0
    %v1231 = vadd.f32 0.0, %v1230
    %v1232 = vpop.f32.mrf.mxu0
    %v1233 = vadd.f32 0.0, %v1232
    %v1234 = vpop.f32.mrf.mxu0
    %v1235 = vpop.f32.mrf.mxu0
    %1236 = vdwg.mxu0
    %1237 = vmatprep.subr.bf16.mxu0 %v599
    %1238 = vmatpush1.bf16.msra.mxu0 %v598
    %1239 = vmatprep.subr.bf16.mxu0 %v591
    %1240 = vmatpush1.bf16.msra.mxu0 %v590
    %1241 = vmatprep.subr.bf16.mxu0 %v583
    %1242 = vmatpush1.bf16.msra.mxu0 %v582
    %1243 = vmatprep.subr.bf16.mxu0 %v575
    %1244 = vmatpush1.bf16.msra.mxu0 %v574
    %1245 = vmatprep.subr.bf16.mxu0 %v567
    %1246 = vmatpush1.bf16.msra.mxu0 %v566
    %1247 = vmatprep.subr.bf16.mxu0 %v559
    %1248 = vmatpush1.bf16.msra.mxu0 %v558
    %1249 = vmatprep.subr.bf16.mxu0 %v551
    %1250 = vmatpush1.bf16.msra.mxu0 %v550
    %1251 = vmatprep.subr.bf16.mxu0 %v543
    %1252 = vmatpush1.bf16.msra.mxu0 %v542
    %1253 = vmatprep.subr.bf16.mxu0 0
    %1254 = vmatpush2.bf16.msra.mxu0 0
    %1255 = vmatprep.subr.bf16.mxu0 0
    %1256 = vmatpush2.bf16.msra.mxu0 0
    %1257 = vmatprep.subr.bf16.mxu0 0
    %1258 = vmatpush2.bf16.msra.mxu0 0
    %1259 = vmatprep.subr.bf16.mxu0 0
    %1260 = vmatpush2.bf16.msra.mxu0 0
    %1261 = vmatprep.subr.bf16.mxu0 0
    %1262 = vmatpush2.bf16.msra.mxu0 0
    %1263 = vmatprep.subr.bf16.mxu0 0
    %1264 = vmatpush2.bf16.msra.mxu0 0
    %1265 = vmatprep.subr.bf16.mxu0 0
    %1266 = vmatpush2.bf16.msra.mxu0 0
    %1267 = vmatprep.subr.bf16.mxu0 0
    %1268 = vmatpush2.bf16.msra.mxu0 0
    %1269 = vmatprep.mubr.bf16.mxu0 0
    %1270 = vmatmul.mubr.bf16.gmra.mxu0 %v1195
    %v1271 = vpop.f32.mrf.mxu0
    %v1272 = vadd.f32 0.0, %v1271
    %v1273 = vpop.f32.mrf.mxu0
    %v1274 = vadd.f32 0.0, %v1273
    %v1275 = vpop.f32.mrf.mxu0
    %v1276 = vpop.f32.mrf.mxu0
    %1277 = vdwg.mxu0
    %1278 = vmatprep.subr.bf16.mxu0 %v601
    %1279 = vmatpush1.bf16.msra.mxu0 %v600
    %1280 = vmatprep.subr.bf16.mxu0 %v593
    %1281 = vmatpush1.bf16.msra.mxu0 %v592
    %1282 = vmatprep.subr.bf16.mxu0 %v585
    %1283 = vmatpush1.bf16.msra.mxu0 %v584
    %1284 = vmatprep.subr.bf16.mxu0 %v577
    %1285 = vmatpush1.bf16.msra.mxu0 %v576
    %1286 = vmatprep.subr.bf16.mxu0 %v569
    %1287 = vmatpush1.bf16.msra.mxu0 %v568
    %1288 = vmatprep.subr.bf16.mxu0 %v561
    %1289 = vmatpush1.bf16.msra.mxu0 %v560
    %1290 = vmatprep.subr.bf16.mxu0 %v553
    %1291 = vmatpush1.bf16.msra.mxu0 %v552
    %1292 = vmatprep.subr.bf16.mxu0 %v545
    %1293 = vmatpush1.bf16.msra.mxu0 %v544
    %1294 = vmatprep.subr.bf16.mxu0 0
    %1295 = vmatpush2.bf16.msra.mxu0 0
    %1296 = vmatprep.subr.bf16.mxu0 0
    %1297 = vmatpush2.bf16.msra.mxu0 0
    %1298 = vmatprep.subr.bf16.mxu0 0
    %1299 = vmatpush2.bf16.msra.mxu0 0
    %1300 = vmatprep.subr.bf16.mxu0 0
    %1301 = vmatpush2.bf16.msra.mxu0 0
    %1302 = vmatprep.subr.bf16.mxu0 0
    %1303 = vmatpush2.bf16.msra.mxu0 0
    %1304 = vmatprep.subr.bf16.mxu0 0
    %1305 = vmatpush2.bf16.msra.mxu0 0
    %1306 = vmatprep.subr.bf16.mxu0 0
    %1307 = vmatpush2.bf16.msra.mxu0 0
    %1308 = vmatprep.subr.bf16.mxu0 0
    %1309 = vmatpush2.bf16.msra.mxu0 0
    %1310 = vmatprep.mubr.bf16.mxu0 0
    %1311 = vmatmul.mubr.bf16.gmra.mxu0 %v1195
    %v1312 = vpop.f32.mrf.mxu0
    %v1313 = vadd.f32 0.0, %v1312
    %v1314 = vpop.f32.mrf.mxu0
    %v1315 = vadd.f32 0.0, %v1314
    %v1316 = vpop.f32.mrf.mxu0
    %v1317 = vpop.f32.mrf.mxu0
    %1318 = vdwg.mxu0
    %1319 = vmatprep.subr.bf16.mxu0 %v603
    %1320 = vmatpush1.bf16.msra.mxu0 %v602
    %1321 = vmatprep.subr.bf16.mxu0 %v595
    %1322 = vmatpush1.bf16.msra.mxu0 %v594
    %1323 = vmatprep.subr.bf16.mxu0 %v587
    %1324 = vmatpush1.bf16.msra.mxu0 %v586
    %1325 = vmatprep.subr.bf16.mxu0 %v579
    %1326 = vmatpush1.bf16.msra.mxu0 %v578
    %1327 = vmatprep.subr.bf16.mxu0 %v571
    %1328 = vmatpush1.bf16.msra.mxu0 %v570
    %1329 = vmatprep.subr.bf16.mxu0 %v563
    %1330 = vmatpush1.bf16.msra.mxu0 %v562
    %1331 = vmatprep.subr.bf16.mxu0 %v555
    %1332 = vmatpush1.bf16.msra.mxu0 %v554
    %1333 = vmatprep.subr.bf16.mxu0 %v547
    %1334 = vmatpush1.bf16.msra.mxu0 %v546
    %1335 = vmatprep.subr.bf16.mxu0 0
    %1336 = vmatpush2.bf16.msra.mxu0 0
    %1337 = vmatprep.subr.bf16.mxu0 0
    %1338 = vmatpush2.bf16.msra.mxu0 0
    %1339 = vmatprep.subr.bf16.mxu0 0
    %1340 = vmatpush2.bf16.msra.mxu0 0
    %1341 = vmatprep.subr.bf16.mxu0 0
    %1342 = vmatpush2.bf16.msra.mxu0 0
    %1343 = vmatprep.subr.bf16.mxu0 0
    %1344 = vmatpush2.bf16.msra.mxu0 0
    %1345 = vmatprep.subr.bf16.mxu0 0
    %1346 = vmatpush2.bf16.msra.mxu0 0
    %1347 = vmatprep.subr.bf16.mxu0 0
    %1348 = vmatpush2.bf16.msra.mxu0 0
    %1349 = vmatprep.subr.bf16.mxu0 0
    %1350 = vmatpush2.bf16.msra.mxu0 0
    %1351 = vmatprep.mubr.bf16.mxu0 0
    %1352 = vmatmul.mubr.bf16.gmra.mxu0 %v1195
    %v1353 = vpop.f32.mrf.mxu0
    %v1354 = vadd.f32 0.0, %v1353
    %v1355 = vpop.f32.mrf.mxu0
    %v1356 = vadd.f32 0.0, %v1355
    %v1357 = vpop.f32.mrf.mxu0
    %v1358 = vpop.f32.mrf.mxu0
    %1359 = vdwg.mxu0
    %v1360 = vpack.c.bf16 %v1159, %v1159
    %1361 = vmatprep.subr.bf16.mxu0 %v989
    %1362 = vmatpush1.bf16.msra.mxu0 %v988
    %1363 = vmatprep.subr.bf16.mxu0 %v985
    %1364 = vmatpush1.bf16.msra.mxu0 %v984
    %1365 = vmatprep.subr.bf16.mxu0 %v981
    %1366 = vmatpush1.bf16.msra.mxu0 %v980
    %1367 = vmatprep.subr.bf16.mxu0 %v977
    %1368 = vmatpush1.bf16.msra.mxu0 %v976
    %1369 = vmatprep.subr.bf16.mxu0 %v973
    %1370 = vmatpush1.bf16.msra.mxu0 %v972
    %1371 = vmatprep.subr.bf16.mxu0 %v969
    %1372 = vmatpush1.bf16.msra.mxu0 %v968
    %1373 = vmatprep.subr.bf16.mxu0 %v965
    %1374 = vmatpush1.bf16.msra.mxu0 %v964
    %1375 = vmatprep.subr.bf16.mxu0 %v961
    %1376 = vmatpush1.bf16.msra.mxu0 %v960
    %1377 = vmatprep.subr.bf16.mxu0 0
    %1378 = vmatpush2.bf16.msra.mxu0 0
    %1379 = vmatprep.subr.bf16.mxu0 0
    %1380 = vmatpush2.bf16.msra.mxu0 0
    %1381 = vmatprep.subr.bf16.mxu0 0
    %1382 = vmatpush2.bf16.msra.mxu0 0
    %1383 = vmatprep.subr.bf16.mxu0 0
    %1384 = vmatpush2.bf16.msra.mxu0 0
    %1385 = vmatprep.subr.bf16.mxu0 0
    %1386 = vmatpush2.bf16.msra.mxu0 0
    %1387 = vmatprep.subr.bf16.mxu0 0
    %1388 = vmatpush2.bf16.msra.mxu0 0
    %1389 = vmatprep.subr.bf16.mxu0 0
    %1390 = vmatpush2.bf16.msra.mxu0 0
    %1391 = vmatprep.subr.bf16.mxu0 0
    %1392 = vmatpush2.bf16.msra.mxu0 0
    %1393 = vmatprep.mubr.bf16.mxu0 0
    %1394 = vmatmul.mubr.bf16.gmra.mxu0 %v1360
    %v1395 = vpop.f32.mrf.mxu0
    %v1396 = vadd.f32 0.0, %v1395
    %v1397 = vpop.f32.mrf.mxu0
    %v1398 = vadd.f32 0.0, %v1397
    %v1399 = vpop.f32.mrf.mxu0
    %v1400 = vpop.f32.mrf.mxu0
    %1401 = vdwg.mxu0
    %1402 = vmatprep.subr.bf16.mxu0 %v991
    %1403 = vmatpush1.bf16.msra.mxu0 %v990
    %1404 = vmatprep.subr.bf16.mxu0 %v987
    %1405 = vmatpush1.bf16.msra.mxu0 %v986
    %1406 = vmatprep.subr.bf16.mxu0 %v983
    %1407 = vmatpush1.bf16.msra.mxu0 %v982
    %1408 = vmatprep.subr.bf16.mxu0 %v979
    %1409 = vmatpush1.bf16.msra.mxu0 %v978
    %1410 = vmatprep.subr.bf16.mxu0 %v975
    %1411 = vmatpush1.bf16.msra.mxu0 %v974
    %1412 = vmatprep.subr.bf16.mxu0 %v971
    %1413 = vmatpush1.bf16.msra.mxu0 %v970
    %1414 = vmatprep.subr.bf16.mxu0 %v967
    %1415 = vmatpush1.bf16.msra.mxu0 %v966
    %1416 = vmatprep.subr.bf16.mxu0 %v963
    %1417 = vmatpush1.bf16.msra.mxu0 %v962
    %1418 = vmatprep.subr.bf16.mxu0 0
    %1419 = vmatpush2.bf16.msra.mxu0 0
    %1420 = vmatprep.subr.bf16.mxu0 0
    %1421 = vmatpush2.bf16.msra.mxu0 0
    %1422 = vmatprep.subr.bf16.mxu0 0
    %1423 = vmatpush2.bf16.msra.mxu0 0
    %1424 = vmatprep.subr.bf16.mxu0 0
    %1425 = vmatpush2.bf16.msra.mxu0 0
    %1426 = vmatprep.subr.bf16.mxu0 0
    %1427 = vmatpush2.bf16.msra.mxu0 0
    %1428 = vmatprep.subr.bf16.mxu0 0
    %1429 = vmatpush2.bf16.msra.mxu0 0
    %1430 = vmatprep.subr.bf16.mxu0 0
    %1431 = vmatpush2.bf16.msra.mxu0 0
    %1432 = vmatprep.subr.bf16.mxu0 0
    %1433 = vmatpush2.bf16.msra.mxu0 0
    %1434 = vmatprep.mubr.bf16.mxu0 0
    %1435 = vmatmul.mubr.bf16.gmra.mxu0 %v1360
    %v1436 = vpop.f32.mrf.mxu0
    %v1437 = vadd.f32 0.0, %v1436
    %v1438 = vpop.f32.mrf.mxu0
    %v1439 = vadd.f32 0.0, %v1438
    %v1440 = vpop.f32.mrf.mxu0
    %v1441 = vpop.f32.mrf.mxu0
    %1442 = vdwg.mxu0
    %v1443 = vadd.f32 %v1313, %v1396
    %v1444 = vadd.f32 %v1315, %v1398
    %v1445 = vadd.f32 %v1354, %v1437
    %v1446 = vadd.f32 %v1356, %v1439
    %v1447 = vadd.f32 %v1443, %v1115
    %v1448 = vadd.f32 %v1444, %v1119
    %v1449 = vadd.f32 %v1445, %v1123
    %v1450 = vadd.f32 %v1446, %v1127
    %v1451 = vxor.u32 %v1447, 2147483648
    %v1452 = vxor.u32 %v1448, 2147483648
    %v1453 = vxor.u32 %v1449, 2147483648
    %v1454 = vmul.f32 %v1451, 1.442695
    %v1455 = vpow.pop %v1454
    %v1456 = vmul.f32 %v1452, 1.442695
    %v1457 = vpow.pop %v1456
    %v1458 = vmul.f32 %v1453, 1.442695
    %v1459 = vpow.pop %v1458
    %v1460 = vadd.f32 %v1455, 1.0
    %v1461 = vadd.f32 %v1457, 1.0
    %v1462 = vadd.f32 %v1459, 1.0
    %v1463 = vrcp.pop %v1460
    %v1464 = vmul.f32 1.0, %v1463
    %v1465 = vrcp.pop %v1461
    %v1466 = vmul.f32 1.0, %v1465
    %v1467 = vrcp.pop %v1462
    %v1468 = vmul.f32 1.0, %v1467
    %v1469 = vtanh.pop %v1450
    %v1470 = vmul.f32 %v1466, %v1157
    %v1471 = vmul.f32 %v1464, %v1469
    %v1472 = vadd.f32 %v1470, %v1471
    %v1473 = vtanh.pop %v1472
    %v1474 = vmul.f32 %v1468, %v1473
    %s1475 = smul.u32 2, 4
    %s1476 = smul.addr %s1475, 8
    %s1477 = scalar_lea.vmem [#allocation2], %s1476
    %v1478 = vld [vmem:[%s1477] sm:$0xff]
    %v1479 = vld [vmem:[%s1477 + $0x8] sm:$0xff]
    %v1480 = vld [vmem:[%s1477 + $0x10] sm:$0xff]
    %v1481 = vld [vmem:[%s1477 + $0x18] sm:$0xff]
    %v1482 = vadd.f32 %v1478, %v1231
    %v1483 = vadd.f32 %v1479, %v1233
    %v1484 = vadd.f32 %v1480, %v1272
    %v1485 = vadd.f32 %v1481, %v1274
    %v1486 = vxor.u32 %v1482, 2147483648
    %v1487 = vxor.u32 %v1483, 2147483648
    %v1488 = vxor.u32 %v1484, 2147483648
    %v1489 = vmul.f32 %v1486, 1.442695
    %v1490 = vpow.pop %v1489
    %v1491 = vmul.f32 %v1487, 1.442695
    %v1492 = vpow.pop %v1491
    %v1493 = vmul.f32 %v1488, 1.442695
    %v1494 = vpow.pop %v1493
    %v1495 = vadd.f32 %v1490, 1.0
    %v1496 = vadd.f32 %v1492, 1.0
    %v1497 = vadd.f32 %v1494, 1.0
    %v1498 = vrcp.pop %v1495
    %v1499 = vmul.f32 1.0, %v1498
    %v1500 = vrcp.pop %v1496
    %v1501 = vmul.f32 1.0, %v1500
    %v1502 = vrcp.pop %v1497
    %v1503 = vmul.f32 1.0, %v1502
    %v1504 = vtanh.pop %v1485
    %v1505 = vmul.f32 %v1501, %v1192
    %v1506 = vmul.f32 %v1499, %v1504
    %v1507 = vadd.f32 %v1505, %v1506
    %v1508 = vtanh.pop %v1507
    %v1509 = vmul.f32 %v1503, %v1508
    %v1510 = vpack.c.bf16 %v1509, %v1509
    %1511 = vmatprep.subr.bf16.mxu0 %v597
    %1512 = vmatpush1.bf16.msra.mxu0 %v596
    %1513 = vmatprep.subr.bf16.mxu0 %v589
    %1514 = vmatpush1.bf16.msra.mxu0 %v588
    %1515 = vmatprep.subr.bf16.mxu0 %v581
    %1516 = vmatpush1.bf16.msra.mxu0 %v580
    %1517 = vmatprep.subr.bf16.mxu0 %v573
    %1518 = vmatpush1.bf16.msra.mxu0 %v572
    %1519 = vmatprep.subr.bf16.mxu0 %v565
    %1520 = vmatpush1.bf16.msra.mxu0 %v564
    %1521 = vmatprep.subr.bf16.mxu0 %v557
    %1522 = vmatpush1.bf16.msra.mxu0 %v556
    %1523 = vmatprep.subr.bf16.mxu0 %v549
    %1524 = vmatpush1.bf16.msra.mxu0 %v548
    %1525 = vmatprep.subr.bf16.mxu0 %v541
    %1526 = vmatpush1.bf16.msra.mxu0 %v540
    %1527 = vmatprep.subr.bf16.mxu0 0
    %1528 = vmatpush2.bf16.msra.mxu0 0
    %1529 = vmatprep.subr.bf16.mxu0 0
    %1530 = vmatpush2.bf16.msra.mxu0 0
    %1531 = vmatprep.subr.bf16.mxu0 0
    %1532 = vmatpush2.bf16.msra.mxu0 0
    %1533 = vmatprep.subr.bf16.mxu0 0
    %1534 = vmatpush2.bf16.msra.mxu0 0
    %1535 = vmatprep.subr.bf16.mxu0 0
    %1536 = vmatpush2.bf16.msra.mxu0 0
    %1537 = vmatprep.subr.bf16.mxu0 0
    %1538 = vmatpush2.bf16.msra.mxu0 0
    %1539 = vmatprep.subr.bf16.mxu0 0
    %1540 = vmatpush2.bf16.msra.mxu0 0
    %1541 = vmatprep.subr.bf16.mxu0 0
    %1542 = vmatpush2.bf16.msra.mxu0 0
    %1543 = vmatprep.mubr.bf16.mxu0 0
    %1544 = vmatmul.mubr.bf16.gmra.mxu0 %v1510
    %v1545 = vpop.f32.mrf.mxu0
    %v1546 = vadd.f32 0.0, %v1545
    %v1547 = vpop.f32.mrf.mxu0
    %v1548 = vadd.f32 0.0, %v1547
    %v1549 = vpop.f32.mrf.mxu0
    %v1550 = vpop.f32.mrf.mxu0
    %1551 = vdwg.mxu0
    %1552 = vmatprep.subr.bf16.mxu0 %v599
    %1553 = vmatpush1.bf16.msra.mxu0 %v598
    %1554 = vmatprep.subr.bf16.mxu0 %v591
    %1555 = vmatpush1.bf16.msra.mxu0 %v590
    %1556 = vmatprep.subr.bf16.mxu0 %v583
    %1557 = vmatpush1.bf16.msra.mxu0 %v582
    %1558 = vmatprep.subr.bf16.mxu0 %v575
    %1559 = vmatpush1.bf16.msra.mxu0 %v574
    %1560 = vmatprep.subr.bf16.mxu0 %v567
    %1561 = vmatpush1.bf16.msra.mxu0 %v566
    %1562 = vmatprep.subr.bf16.mxu0 %v559
    %1563 = vmatpush1.bf16.msra.mxu0 %v558
    %1564 = vmatprep.subr.bf16.mxu0 %v551
    %1565 = vmatpush1.bf16.msra.mxu0 %v550
    %1566 = vmatprep.subr.bf16.mxu0 %v543
    %1567 = vmatpush1.bf16.msra.mxu0 %v542
    %1568 = vmatprep.subr.bf16.mxu0 0
    %1569 = vmatpush2.bf16.msra.mxu0 0
    %1570 = vmatprep.subr.bf16.mxu0 0
    %1571 = vmatpush2.bf16.msra.mxu0 0
    %1572 = vmatprep.subr.bf16.mxu0 0
    %1573 = vmatpush2.bf16.msra.mxu0 0
    %1574 = vmatprep.subr.bf16.mxu0 0
    %1575 = vmatpush2.bf16.msra.mxu0 0
    %1576 = vmatprep.subr.bf16.mxu0 0
    %1577 = vmatpush2.bf16.msra.mxu0 0
    %1578 = vmatprep.subr.bf16.mxu0 0
    %1579 = vmatpush2.bf16.msra.mxu0 0
    %1580 = vmatprep.subr.bf16.mxu0 0
    %1581 = vmatpush2.bf16.msra.mxu0 0
    %1582 = vmatprep.subr.bf16.mxu0 0
    %1583 = vmatpush2.bf16.msra.mxu0 0
    %1584 = vmatprep.mubr.bf16.mxu0 0
    %1585 = vmatmul.mubr.bf16.gmra.mxu0 %v1510
    %v1586 = vpop.f32.mrf.mxu0
    %v1587 = vadd.f32 0.0, %v1586
    %v1588 = vpop.f32.mrf.mxu0
    %v1589 = vadd.f32 0.0, %v1588
    %v1590 = vpop.f32.mrf.mxu0
    %v1591 = vpop.f32.mrf.mxu0
    %1592 = vdwg.mxu0
    %1593 = vmatprep.subr.bf16.mxu0 %v601
    %1594 = vmatpush1.bf16.msra.mxu0 %v600
    %1595 = vmatprep.subr.bf16.mxu0 %v593
    %1596 = vmatpush1.bf16.msra.mxu0 %v592
    %1597 = vmatprep.subr.bf16.mxu0 %v585
    %1598 = vmatpush1.bf16.msra.mxu0 %v584
    %1599 = vmatprep.subr.bf16.mxu0 %v577
    %1600 = vmatpush1.bf16.msra.mxu0 %v576
    %1601 = vmatprep.subr.bf16.mxu0 %v569
    %1602 = vmatpush1.bf16.msra.mxu0 %v568
    %1603 = vmatprep.subr.bf16.mxu0 %v561
    %1604 = vmatpush1.bf16.msra.mxu0 %v560
    %1605 = vmatprep.subr.bf16.mxu0 %v553
    %1606 = vmatpush1.bf16.msra.mxu0 %v552
    %1607 = vmatprep.subr.bf16.mxu0 %v545
    %1608 = vmatpush1.bf16.msra.mxu0 %v544
    %1609 = vmatprep.subr.bf16.mxu0 0
    %1610 = vmatpush2.bf16.msra.mxu0 0
    %1611 = vmatprep.subr.bf16.mxu0 0
    %1612 = vmatpush2.bf16.msra.mxu0 0
    %1613 = vmatprep.subr.bf16.mxu0 0
    %1614 = vmatpush2.bf16.msra.mxu0 0
    %1615 = vmatprep.subr.bf16.mxu0 0
    %1616 = vmatpush2.bf16.msra.mxu0 0
    %1617 = vmatprep.subr.bf16.mxu0 0
    %1618 = vmatpush2.bf16.msra.mxu0 0
    %1619 = vmatprep.subr.bf16.mxu0 0
    %1620 = vmatpush2.bf16.msra.mxu0 0
    %1621 = vmatprep.subr.bf16.mxu0 0
    %1622 = vmatpush2.bf16.msra.mxu0 0
    %1623 = vmatprep.subr.bf16.mxu0 0
    %1624 = vmatpush2.bf16.msra.mxu0 0
    %1625 = vmatprep.mubr.bf16.mxu0 0
    %1626 = vmatmul.mubr.bf16.gmra.mxu0 %v1510
    %v1627 = vpop.f32.mrf.mxu0
    %v1628 = vadd.f32 0.0, %v1627
    %v1629 = vpop.f32.mrf.mxu0
    %v1630 = vadd.f32 0.0, %v1629
    %v1631 = vpop.f32.mrf.mxu0
    %v1632 = vpop.f32.mrf.mxu0
    %1633 = vdwg.mxu0
    %1634 = vmatprep.subr.bf16.mxu0 %v603
    %1635 = vmatpush1.bf16.msra.mxu0 %v602
    %1636 = vmatprep.subr.bf16.mxu0 %v595
    %1637 = vmatpush1.bf16.msra.mxu0 %v594
    %1638 = vmatprep.subr.bf16.mxu0 %v587
    %1639 = vmatpush1.bf16.msra.mxu0 %v586
    %1640 = vmatprep.subr.bf16.mxu0 %v579
    %1641 = vmatpush1.bf16.msra.mxu0 %v578
    %1642 = vmatprep.subr.bf16.mxu0 %v571
    %1643 = vmatpush1.bf16.msra.mxu0 %v570
    %1644 = vmatprep.subr.bf16.mxu0 %v563
    %1645 = vmatpush1.bf16.msra.mxu0 %v562
    %1646 = vmatprep.subr.bf16.mxu0 %v555
    %1647 = vmatpush1.bf16.msra.mxu0 %v554
    %1648 = vmatprep.subr.bf16.mxu0 %v547
    %1649 = vmatpush1.bf16.msra.mxu0 %v546
    %1650 = vmatprep.subr.bf16.mxu0 0
    %1651 = vmatpush2.bf16.msra.mxu0 0
    %1652 = vmatprep.subr.bf16.mxu0 0
    %1653 = vmatpush2.bf16.msra.mxu0 0
    %1654 = vmatprep.subr.bf16.mxu0 0
    %1655 = vmatpush2.bf16.msra.mxu0 0
    %1656 = vmatprep.subr.bf16.mxu0 0
    %1657 = vmatpush2.bf16.msra.mxu0 0
    %1658 = vmatprep.subr.bf16.mxu0 0
    %1659 = vmatpush2.bf16.msra.mxu0 0
    %1660 = vmatprep.subr.bf16.mxu0 0
    %1661 = vmatpush2.bf16.msra.mxu0 0
    %1662 = vmatprep.subr.bf16.mxu0 0
    %1663 = vmatpush2.bf16.msra.mxu0 0
    %1664 = vmatprep.subr.bf16.mxu0 0
    %1665 = vmatpush2.bf16.msra.mxu0 0
    %1666 = vmatprep.mubr.bf16.mxu0 0
    %1667 = vmatmul.mubr.bf16.gmra.mxu0 %v1510
    %v1668 = vpop.f32.mrf.mxu0
    %v1669 = vadd.f32 0.0, %v1668
    %v1670 = vpop.f32.mrf.mxu0
    %v1671 = vadd.f32 0.0, %v1670
    %v1672 = vpop.f32.mrf.mxu0
    %v1673 = vpop.f32.mrf.mxu0
    %1674 = vdwg.mxu0
    %v1675 = vpack.c.bf16 %v1474, %v1474
    %1676 = vmatprep.subr.bf16.mxu0 %v989
    %1677 = vmatpush1.bf16.msra.mxu0 %v988
    %1678 = vmatprep.subr.bf16.mxu0 %v985
    %1679 = vmatpush1.bf16.msra.mxu0 %v984
    %1680 = vmatprep.subr.bf16.mxu0 %v981
    %1681 = vmatpush1.bf16.msra.mxu0 %v980
    %1682 = vmatprep.subr.bf16.mxu0 %v977
    %1683 = vmatpush1.bf16.msra.mxu0 %v976
    %1684 = vmatprep.subr.bf16.mxu0 %v973
    %1685 = vmatpush1.bf16.msra.mxu0 %v972
    %1686 = vmatprep.subr.bf16.mxu0 %v969
    %1687 = vmatpush1.bf16.msra.mxu0 %v968
    %1688 = vmatprep.subr.bf16.mxu0 %v965
    %1689 = vmatpush1.bf16.msra.mxu0 %v964
    %1690 = vmatprep.subr.bf16.mxu0 %v961
    %1691 = vmatpush1.bf16.msra.mxu0 %v960
    %1692 = vmatprep.subr.bf16.mxu0 0
    %1693 = vmatpush2.bf16.msra.mxu0 0
    %1694 = vmatprep.subr.bf16.mxu0 0
    %1695 = vmatpush2.bf16.msra.mxu0 0
    %1696 = vmatprep.subr.bf16.mxu0 0
    %1697 = vmatpush2.bf16.msra.mxu0 0
    %1698 = vmatprep.subr.bf16.mxu0 0
    %1699 = vmatpush2.bf16.msra.mxu0 0
    %1700 = vmatprep.subr.bf16.mxu0 0
    %1701 = vmatpush2.bf16.msra.mxu0 0
    %1702 = vmatprep.subr.bf16.mxu0 0
    %1703 = vmatpush2.bf16.msra.mxu0 0
    %1704 = vmatprep.subr.bf16.mxu0 0
    %1705 = vmatpush2.bf16.msra.mxu0 0
    %1706 = vmatprep.subr.bf16.mxu0 0
    %1707 = vmatpush2.bf16.msra.mxu0 0
    %1708 = vmatprep.mubr.bf16.mxu0 0
    %1709 = vmatmul.mubr.bf16.gmra.mxu0 %v1675
    %v1710 = vpop.f32.mrf.mxu0
    %v1711 = vadd.f32 0.0, %v1710
    %v1712 = vpop.f32.mrf.mxu0
    %v1713 = vadd.f32 0.0, %v1712
    %v1714 = vpop.f32.mrf.mxu0
    %v1715 = vpop.f32.mrf.mxu0
    %1716 = vdwg.mxu0
    %1717 = vmatprep.subr.bf16.mxu0 %v991
    %1718 = vmatpush1.bf16.msra.mxu0 %v990
    %1719 = vmatprep.subr.bf16.mxu0 %v987
    %1720 = vmatpush1.bf16.msra.mxu0 %v986
    %1721 = vmatprep.subr.bf16.mxu0 %v983
    %1722 = vmatpush1.bf16.msra.mxu0 %v982
    %1723 = vmatprep.subr.bf16.mxu0 %v979
    %1724 = vmatpush1.bf16.msra.mxu0 %v978
    %1725 = vmatprep.subr.bf16.mxu0 %v975
    %1726 = vmatpush1.bf16.msra.mxu0 %v974
    %1727 = vmatprep.subr.bf16.mxu0 %v971
    %1728 = vmatpush1.bf16.msra.mxu0 %v970
    %1729 = vmatprep.subr.bf16.mxu0 %v967
    %1730 = vmatpush1.bf16.msra.mxu0 %v966
    %1731 = vmatprep.subr.bf16.mxu0 %v963
    %1732 = vmatpush1.bf16.msra.mxu0 %v962
    %1733 = vmatprep.subr.bf16.mxu0 0
    %1734 = vmatpush2.bf16.msra.mxu0 0
    %1735 = vmatprep.subr.bf16.mxu0 0
    %1736 = vmatpush2.bf16.msra.mxu0 0
    %1737 = vmatprep.subr.bf16.mxu0 0
    %1738 = vmatpush2.bf16.msra.mxu0 0
    %1739 = vmatprep.subr.bf16.mxu0 0
    %1740 = vmatpush2.bf16.msra.mxu0 0
    %1741 = vmatprep.subr.bf16.mxu0 0
    %1742 = vmatpush2.bf16.msra.mxu0 0
    %1743 = vmatprep.subr.bf16.mxu0 0
    %1744 = vmatpush2.bf16.msra.mxu0 0
    %1745 = vmatprep.subr.bf16.mxu0 0
    %1746 = vmatpush2.bf16.msra.mxu0 0
    %1747 = vmatprep.subr.bf16.mxu0 0
    %1748 = vmatpush2.bf16.msra.mxu0 0
    %1749 = vmatprep.mubr.bf16.mxu0 0
    %1750 = vmatmul.mubr.bf16.gmra.mxu0 %v1675
    %v1751 = vpop.f32.mrf.mxu0
    %v1752 = vadd.f32 0.0, %v1751
    %v1753 = vpop.f32.mrf.mxu0
    %v1754 = vadd.f32 0.0, %v1753
    %v1755 = vpop.f32.mrf.mxu0
    %v1756 = vpop.f32.mrf.mxu0
    %1757 = vdwg.mxu0
    %v1758 = vadd.f32 %v1628, %v1711
    %v1759 = vadd.f32 %v1630, %v1713
    %v1760 = vadd.f32 %v1669, %v1752
    %v1761 = vadd.f32 %v1671, %v1754
    %v1762 = vadd.f32 %v1758, %v1115
    %v1763 = vadd.f32 %v1759, %v1119
    %v1764 = vadd.f32 %v1760, %v1123
    %v1765 = vadd.f32 %v1761, %v1127
    %v1766 = vxor.u32 %v1762, 2147483648
    %v1767 = vxor.u32 %v1763, 2147483648
    %v1768 = vxor.u32 %v1764, 2147483648
    %v1769 = vmul.f32 %v1766, 1.442695
    %v1770 = vpow.pop %v1769
    %v1771 = vmul.f32 %v1767, 1.442695
    %v1772 = vpow.pop %v1771
    %v1773 = vmul.f32 %v1768, 1.442695
    %v1774 = vpow.pop %v1773
    %v1775 = vadd.f32 %v1770, 1.0
    %v1776 = vadd.f32 %v1772, 1.0
    %v1777 = vadd.f32 %v1774, 1.0
    %v1778 = vrcp.pop %v1775
    %v1779 = vmul.f32 1.0, %v1778
    %v1780 = vrcp.pop %v1776
    %v1781 = vmul.f32 1.0, %v1780
    %v1782 = vrcp.pop %v1777
    %v1783 = vmul.f32 1.0, %v1782
    %v1784 = vtanh.pop %v1765
    %v1785 = vmul.f32 %v1781, %v1472
    %v1786 = vmul.f32 %v1779, %v1784
    %v1787 = vadd.f32 %v1785, %v1786
    %v1788 = vtanh.pop %v1787
    %v1789 = vmul.f32 %v1783, %v1788
    %s1790 = smul.u32 3, 4
    %s1791 = smul.addr %s1790, 8
    %s1792 = scalar_lea.vmem [#allocation2], %s1791
    %v1793 = vld [vmem:[%s1792] sm:$0xff]
    %v1794 = vld [vmem:[%s1792 + $0x8] sm:$0xff]
    %v1795 = vld [vmem:[%s1792 + $0x10] sm:$0xff]
    %v1796 = vld [vmem:[%s1792 + $0x18] sm:$0xff]
    %v1797 = vadd.f32 %v1793, %v1546
    %v1798 = vadd.f32 %v1794, %v1548
    %v1799 = vadd.f32 %v1795, %v1587
    %v1800 = vadd.f32 %v1796, %v1589
    %v1801 = vxor.u32 %v1797, 2147483648
    %v1802 = vxor.u32 %v1798, 2147483648
    %v1803 = vxor.u32 %v1799, 2147483648
    %v1804 = vmul.f32 %v1801, 1.442695
    %v1805 = vpow.pop %v1804
    %v1806 = vmul.f32 %v1802, 1.442695
    %v1807 = vpow.pop %v1806
    %v1808 = vmul.f32 %v1803, 1.442695
    %v1809 = vpow.pop %v1808
    %v1810 = vadd.f32 %v1805, 1.0
    %v1811 = vadd.f32 %v1807, 1.0
    %v1812 = vadd.f32 %v1809, 1.0
    %v1813 = vrcp.pop %v1810
    %v1814 = vmul.f32 1.0, %v1813
    %v1815 = vrcp.pop %v1811
    %v1816 = vmul.f32 1.0, %v1815
    %v1817 = vrcp.pop %v1812
    %v1818 = vmul.f32 1.0, %v1817
    %v1819 = vtanh.pop %v1800
    %v1820 = vmul.f32 %v1816, %v1507
    %v1821 = vmul.f32 %v1814, %v1819
    %v1822 = vadd.f32 %v1820, %v1821
    %v1823 = vtanh.pop %v1822
    %v1824 = vmul.f32 %v1818, %v1823
    %v1825 = vpack.c.bf16 %v1824, %v1824
    %1826 = vmatprep.subr.bf16.mxu0 %v597
    %1827 = vmatpush1.bf16.msra.mxu0 %v596
    %1828 = vmatprep.subr.bf16.mxu0 %v589
    %1829 = vmatpush1.bf16.msra.mxu0 %v588
    %1830 = vmatprep.subr.bf16.mxu0 %v581
    %1831 = vmatpush1.bf16.msra.mxu0 %v580
    %1832 = vmatprep.subr.bf16.mxu0 %v573
    %1833 = vmatpush1.bf16.msra.mxu0 %v572
    %1834 = vmatprep.subr.bf16.mxu0 %v565
    %1835 = vmatpush1.bf16.msra.mxu0 %v564
    %1836 = vmatprep.subr.bf16.mxu0 %v557
    %1837 = vmatpush1.bf16.msra.mxu0 %v556
    %1838 = vmatprep.subr.bf16.mxu0 %v549
    %1839 = vmatpush1.bf16.msra.mxu0 %v548
    %1840 = vmatprep.subr.bf16.mxu0 %v541
    %1841 = vmatpush1.bf16.msra.mxu0 %v540
    %1842 = vmatprep.subr.bf16.mxu0 0
    %1843 = vmatpush2.bf16.msra.mxu0 0
    %1844 = vmatprep.subr.bf16.mxu0 0
    %1845 = vmatpush2.bf16.msra.mxu0 0
    %1846 = vmatprep.subr.bf16.mxu0 0
    %1847 = vmatpush2.bf16.msra.mxu0 0
    %1848 = vmatprep.subr.bf16.mxu0 0
    %1849 = vmatpush2.bf16.msra.mxu0 0
    %1850 = vmatprep.subr.bf16.mxu0 0
    %1851 = vmatpush2.bf16.msra.mxu0 0
    %1852 = vmatprep.subr.bf16.mxu0 0
    %1853 = vmatpush2.bf16.msra.mxu0 0
    %1854 = vmatprep.subr.bf16.mxu0 0
    %1855 = vmatpush2.bf16.msra.mxu0 0
    %1856 = vmatprep.subr.bf16.mxu0 0
    %1857 = vmatpush2.bf16.msra.mxu0 0
    %1858 = vmatprep.mubr.bf16.mxu0 0
    %1859 = vmatmul.mubr.bf16.gmra.mxu0 %v1825
    %v1860 = vpop.f32.mrf.mxu0
    %v1861 = vadd.f32 0.0, %v1860
    %v1862 = vpop.f32.mrf.mxu0
    %v1863 = vadd.f32 0.0, %v1862
    %v1864 = vpop.f32.mrf.mxu0
    %v1865 = vpop.f32.mrf.mxu0
    %1866 = vdwg.mxu0
    %1867 = vmatprep.subr.bf16.mxu0 %v599
    %1868 = vmatpush1.bf16.msra.mxu0 %v598
    %1869 = vmatprep.subr.bf16.mxu0 %v591
    %1870 = vmatpush1.bf16.msra.mxu0 %v590
    %1871 = vmatprep.subr.bf16.mxu0 %v583
    %1872 = vmatpush1.bf16.msra.mxu0 %v582
    %1873 = vmatprep.subr.bf16.mxu0 %v575
    %1874 = vmatpush1.bf16.msra.mxu0 %v574
    %1875 = vmatprep.subr.bf16.mxu0 %v567
    %1876 = vmatpush1.bf16.msra.mxu0 %v566
    %1877 = vmatprep.subr.bf16.mxu0 %v559
    %1878 = vmatpush1.bf16.msra.mxu0 %v558
    %1879 = vmatprep.subr.bf16.mxu0 %v551
    %1880 = vmatpush1.bf16.msra.mxu0 %v550
    %1881 = vmatprep.subr.bf16.mxu0 %v543
    %1882 = vmatpush1.bf16.msra.mxu0 %v542
    %1883 = vmatprep.subr.bf16.mxu0 0
    %1884 = vmatpush2.bf16.msra.mxu0 0
    %1885 = vmatprep.subr.bf16.mxu0 0
    %1886 = vmatpush2.bf16.msra.mxu0 0
    %1887 = vmatprep.subr.bf16.mxu0 0
    %1888 = vmatpush2.bf16.msra.mxu0 0
    %1889 = vmatprep.subr.bf16.mxu0 0
    %1890 = vmatpush2.bf16.msra.mxu0 0
    %1891 = vmatprep.subr.bf16.mxu0 0
    %1892 = vmatpush2.bf16.msra.mxu0 0
    %1893 = vmatprep.subr.bf16.mxu0 0
    %1894 = vmatpush2.bf16.msra.mxu0 0
    %1895 = vmatprep.subr.bf16.mxu0 0
    %1896 = vmatpush2.bf16.msra.mxu0 0
    %1897 = vmatprep.subr.bf16.mxu0 0
    %1898 = vmatpush2.bf16.msra.mxu0 0
    %1899 = vmatprep.mubr.bf16.mxu0 0
    %1900 = vmatmul.mubr.bf16.gmra.mxu0 %v1825
    %v1901 = vpop.f32.mrf.mxu0
    %v1902 = vadd.f32 0.0, %v1901
    %v1903 = vpop.f32.mrf.mxu0
    %v1904 = vadd.f32 0.0, %v1903
    %v1905 = vpop.f32.mrf.mxu0
    %v1906 = vpop.f32.mrf.mxu0
    %1907 = vdwg.mxu0
    %1908 = vmatprep.subr.bf16.mxu0 %v601
    %1909 = vmatpush1.bf16.msra.mxu0 %v600
    %1910 = vmatprep.subr.bf16.mxu0 %v593
    %1911 = vmatpush1.bf16.msra.mxu0 %v592
    %1912 = vmatprep.subr.bf16.mxu0 %v585
    %1913 = vmatpush1.bf16.msra.mxu0 %v584
    %1914 = vmatprep.subr.bf16.mxu0 %v577
    %1915 = vmatpush1.bf16.msra.mxu0 %v576
    %1916 = vmatprep.subr.bf16.mxu0 %v569
    %1917 = vmatpush1.bf16.msra.mxu0 %v568
    %1918 = vmatprep.subr.bf16.mxu0 %v561
    %1919 = vmatpush1.bf16.msra.mxu0 %v560
    %1920 = vmatprep.subr.bf16.mxu0 %v553
    %1921 = vmatpush1.bf16.msra.mxu0 %v552
    %1922 = vmatprep.subr.bf16.mxu0 %v545
    %1923 = vmatpush1.bf16.msra.mxu0 %v544
    %1924 = vmatprep.subr.bf16.mxu0 0
    %1925 = vmatpush2.bf16.msra.mxu0 0
    %1926 = vmatprep.subr.bf16.mxu0 0
    %1927 = vmatpush2.bf16.msra.mxu0 0
    %1928 = vmatprep.subr.bf16.mxu0 0
    %1929 = vmatpush2.bf16.msra.mxu0 0
    %1930 = vmatprep.subr.bf16.mxu0 0
    %1931 = vmatpush2.bf16.msra.mxu0 0
    %1932 = vmatprep.subr.bf16.mxu0 0
    %1933 = vmatpush2.bf16.msra.mxu0 0
    %1934 = vmatprep.subr.bf16.mxu0 0
    %1935 = vmatpush2.bf16.msra.mxu0 0
    %1936 = vmatprep.subr.bf16.mxu0 0
    %1937 = vmatpush2.bf16.msra.mxu0 0
    %1938 = vmatprep.subr.bf16.mxu0 0
    %1939 = vmatpush2.bf16.msra.mxu0 0
    %1940 = vmatprep.mubr.bf16.mxu0 0
    %1941 = vmatmul.mubr.bf16.gmra.mxu0 %v1825
    %v1942 = vpop.f32.mrf.mxu0
    %v1943 = vadd.f32 0.0, %v1942
    %v1944 = vpop.f32.mrf.mxu0
    %v1945 = vadd.f32 0.0, %v1944
    %v1946 = vpop.f32.mrf.mxu0
    %v1947 = vpop.f32.mrf.mxu0
    %1948 = vdwg.mxu0
    %1949 = vmatprep.subr.bf16.mxu0 %v603
    %1950 = vmatpush1.bf16.msra.mxu0 %v602
    %1951 = vmatprep.subr.bf16.mxu0 %v595
    %1952 = vmatpush1.bf16.msra.mxu0 %v594
    %1953 = vmatprep.subr.bf16.mxu0 %v587
    %1954 = vmatpush1.bf16.msra.mxu0 %v586
    %1955 = vmatprep.subr.bf16.mxu0 %v579
    %1956 = vmatpush1.bf16.msra.mxu0 %v578
    %1957 = vmatprep.subr.bf16.mxu0 %v571
    %1958 = vmatpush1.bf16.msra.mxu0 %v570
    %1959 = vmatprep.subr.bf16.mxu0 %v563
    %1960 = vmatpush1.bf16.msra.mxu0 %v562
    %1961 = vmatprep.subr.bf16.mxu0 %v555
    %1962 = vmatpush1.bf16.msra.mxu0 %v554
    %1963 = vmatprep.subr.bf16.mxu0 %v547
    %1964 = vmatpush1.bf16.msra.mxu0 %v546
    %1965 = vmatprep.subr.bf16.mxu0 0
    %1966 = vmatpush2.bf16.msra.mxu0 0
    %1967 = vmatprep.subr.bf16.mxu0 0
    %1968 = vmatpush2.bf16.msra.mxu0 0
    %1969 = vmatprep.subr.bf16.mxu0 0
    %1970 = vmatpush2.bf16.msra.mxu0 0
    %1971 = vmatprep.subr.bf16.mxu0 0
    %1972 = vmatpush2.bf16.msra.mxu0 0
    %1973 = vmatprep.subr.bf16.mxu0 0
    %1974 = vmatpush2.bf16.msra.mxu0 0
    %1975 = vmatprep.subr.bf16.mxu0 0
    %1976 = vmatpush2.bf16.msra.mxu0 0
    %1977 = vmatprep.subr.bf16.mxu0 0
    %1978 = vmatpush2.bf16.msra.mxu0 0
    %1979 = vmatprep.subr.bf16.mxu0 0
    %1980 = vmatpush2.bf16.msra.mxu0 0
    %1981 = vmatprep.mubr.bf16.mxu0 0
    %1982 = vmatmul.mubr.bf16.gmra.mxu0 %v1825
    %v1983 = vpop.f32.mrf.mxu0
    %v1984 = vadd.f32 0.0, %v1983
    %v1985 = vpop.f32.mrf.mxu0
    %v1986 = vadd.f32 0.0, %v1985
    %v1987 = vpop.f32.mrf.mxu0
    %v1988 = vpop.f32.mrf.mxu0
    %1989 = vdwg.mxu0
    %v1990 = vpack.c.bf16 %v1789, %v1789
    %1991 = vmatprep.subr.bf16.mxu0 %v989
    %1992 = vmatpush1.bf16.msra.mxu0 %v988
    %1993 = vmatprep.subr.bf16.mxu0 %v985
    %1994 = vmatpush1.bf16.msra.mxu0 %v984
    %1995 = vmatprep.subr.bf16.mxu0 %v981
    %1996 = vmatpush1.bf16.msra.mxu0 %v980
    %1997 = vmatprep.subr.bf16.mxu0 %v977
    %1998 = vmatpush1.bf16.msra.mxu0 %v976
    %1999 = vmatprep.subr.bf16.mxu0 %v973
    %2000 = vmatpush1.bf16.msra.mxu0 %v972
    %2001 = vmatprep.subr.bf16.mxu0 %v969
    %2002 = vmatpush1.bf16.msra.mxu0 %v968
    %2003 = vmatprep.subr.bf16.mxu0 %v965
    %2004 = vmatpush1.bf16.msra.mxu0 %v964
    %2005 = vmatprep.subr.bf16.mxu0 %v961
    %2006 = vmatpush1.bf16.msra.mxu0 %v960
    %2007 = vmatprep.subr.bf16.mxu0 0
    %2008 = vmatpush2.bf16.msra.mxu0 0
    %2009 = vmatprep.subr.bf16.mxu0 0
    %2010 = vmatpush2.bf16.msra.mxu0 0
    %2011 = vmatprep.subr.bf16.mxu0 0
    %2012 = vmatpush2.bf16.msra.mxu0 0
    %2013 = vmatprep.subr.bf16.mxu0 0
    %2014 = vmatpush2.bf16.msra.mxu0 0
    %2015 = vmatprep.subr.bf16.mxu0 0
    %2016 = vmatpush2.bf16.msra.mxu0 0
    %2017 = vmatprep.subr.bf16.mxu0 0
    %2018 = vmatpush2.bf16.msra.mxu0 0
    %2019 = vmatprep.subr.bf16.mxu0 0
    %2020 = vmatpush2.bf16.msra.mxu0 0
    %2021 = vmatprep.subr.bf16.mxu0 0
    %2022 = vmatpush2.bf16.msra.mxu0 0
    %2023 = vmatprep.mubr.bf16.mxu0 0
    %2024 = vmatmul.mubr.bf16.gmra.mxu0 %v1990
    %v2025 = vpop.f32.mrf.mxu0
    %v2026 = vadd.f32 0.0, %v2025
    %v2027 = vpop.f32.mrf.mxu0
    %v2028 = vadd.f32 0.0, %v2027
    %v2029 = vpop.f32.mrf.mxu0
    %v2030 = vpop.f32.mrf.mxu0
    %2031 = vdwg.mxu0
    %2032 = vmatprep.subr.bf16.mxu0 %v991
    %2033 = vmatpush1.bf16.msra.mxu0 %v990
    %2034 = vmatprep.subr.bf16.mxu0 %v987
    %2035 = vmatpush1.bf16.msra.mxu0 %v986
    %2036 = vmatprep.subr.bf16.mxu0 %v983
    %2037 = vmatpush1.bf16.msra.mxu0 %v982
    %2038 = vmatprep.subr.bf16.mxu0 %v979
    %2039 = vmatpush1.bf16.msra.mxu0 %v978
    %2040 = vmatprep.subr.bf16.mxu0 %v975
    %2041 = vmatpush1.bf16.msra.mxu0 %v974
    %2042 = vmatprep.subr.bf16.mxu0 %v971
    %2043 = vmatpush1.bf16.msra.mxu0 %v970
    %2044 = vmatprep.subr.bf16.mxu0 %v967
    %2045 = vmatpush1.bf16.msra.mxu0 %v966
    %2046 = vmatprep.subr.bf16.mxu0 %v963
    %2047 = vmatpush1.bf16.msra.mxu0 %v962
    %2048 = vmatprep.subr.bf16.mxu0 0
    %2049 = vmatpush2.bf16.msra.mxu0 0
    %2050 = vmatprep.subr.bf16.mxu0 0
    %2051 = vmatpush2.bf16.msra.mxu0 0
    %2052 = vmatprep.subr.bf16.mxu0 0
    %2053 = vmatpush2.bf16.msra.mxu0 0
    %2054 = vmatprep.subr.bf16.mxu0 0
    %2055 = vmatpush2.bf16.msra.mxu0 0
    %2056 = vmatprep.subr.bf16.mxu0 0
    %2057 = vmatpush2.bf16.msra.mxu0 0
    %2058 = vmatprep.subr.bf16.mxu0 0
    %2059 = vmatpush2.bf16.msra.mxu0 0
    %2060 = vmatprep.subr.bf16.mxu0 0
    %2061 = vmatpush2.bf16.msra.mxu0 0
    %2062 = vmatprep.subr.bf16.mxu0 0
    %2063 = vmatpush2.bf16.msra.mxu0 0
    %2064 = vmatprep.mubr.bf16.mxu0 0
    %2065 = vmatmul.mubr.bf16.gmra.mxu0 %v1990
    %v2066 = vpop.f32.mrf.mxu0
    %v2067 = vadd.f32 0.0, %v2066
    %v2068 = vpop.f32.mrf.mxu0
    %v2069 = vadd.f32 0.0, %v2068
    %v2070 = vpop.f32.mrf.mxu0
    %v2071 = vpop.f32.mrf.mxu0
    %2072 = vdwg.mxu0
    %v2073 = vadd.f32 %v1943, %v2026
    %v2074 = vadd.f32 %v1945, %v2028
    %v2075 = vadd.f32 %v1984, %v2067
    %v2076 = vadd.f32 %v1986, %v2069
    %v2077 = vadd.f32 %v2073, %v1115
    %v2078 = vadd.f32 %v2074, %v1119
    %v2079 = vadd.f32 %v2075, %v1123
    %v2080 = vadd.f32 %v2076, %v1127
    %v2081 = vxor.u32 %v2077, 2147483648
    %v2082 = vxor.u32 %v2078, 2147483648
    %v2083 = vxor.u32 %v2079, 2147483648
    %v2084 = vmul.f32 %v2081, 1.442695
    %v2085 = vpow.pop %v2084
    %v2086 = vmul.f32 %v2082, 1.442695
    %v2087 = vpow.pop %v2086
    %v2088 = vmul.f32 %v2083, 1.442695
    %v2089 = vpow.pop %v2088
    %v2090 = vadd.f32 %v2085, 1.0
    %v2091 = vadd.f32 %v2087, 1.0
    %v2092 = vadd.f32 %v2089, 1.0
    %v2093 = vrcp.pop %v2090
    %v2094 = vmul.f32 1.0, %v2093
    %v2095 = vrcp.pop %v2091
    %v2096 = vmul.f32 1.0, %v2095
    %v2097 = vrcp.pop %v2092
    %v2098 = vmul.f32 1.0, %v2097
    %v2099 = vtanh.pop %v2080
    %v2100 = vmul.f32 %v2096, %v1787
    %v2101 = vmul.f32 %v2094, %v2099
    %v2102 = vadd.f32 %v2100, %v2101
    %v2103 = vtanh.pop %v2102
    %v2104 = vmul.f32 %v2098, %v2103
    %s2105 = smul.u32 4, 4
    %s2106 = smul.addr %s2105, 8
    %s2107 = scalar_lea.vmem [#allocation2], %s2106
    %v2108 = vld [vmem:[%s2107] sm:$0xff]
    %v2109 = vld [vmem:[%s2107 + $0x8] sm:$0xff]
    %v2110 = vld [vmem:[%s2107 + $0x10] sm:$0xff]
    %v2111 = vld [vmem:[%s2107 + $0x18] sm:$0xff]
    %v2112 = vadd.f32 %v2108, %v1861
    %v2113 = vadd.f32 %v2109, %v1863
    %v2114 = vadd.f32 %v2110, %v1902
    %v2115 = vadd.f32 %v2111, %v1904
    %v2116 = vxor.u32 %v2112, 2147483648
    %v2117 = vxor.u32 %v2113, 2147483648
    %v2118 = vxor.u32 %v2114, 2147483648
    %v2119 = vmul.f32 %v2116, 1.442695
    %v2120 = vpow.pop %v2119
    %v2121 = vmul.f32 %v2117, 1.442695
    %v2122 = vpow.pop %v2121
    %v2123 = vmul.f32 %v2118, 1.442695
    %v2124 = vpow.pop %v2123
    %v2125 = vadd.f32 %v2120, 1.0
    %v2126 = vadd.f32 %v2122, 1.0
    %v2127 = vadd.f32 %v2124, 1.0
    %v2128 = vrcp.pop %v2125
    %v2129 = vmul.f32 1.0, %v2128
    %v2130 = vrcp.pop %v2126
    %v2131 = vmul.f32 1.0, %v2130
    %v2132 = vrcp.pop %v2127
    %v2133 = vmul.f32 1.0, %v2132
    %v2134 = vtanh.pop %v2115
    %v2135 = vmul.f32 %v2131, %v1822
    %v2136 = vmul.f32 %v2129, %v2134
    %v2137 = vadd.f32 %v2135, %v2136
    %v2138 = vtanh.pop %v2137
    %v2139 = vmul.f32 %v2133, %v2138
    %v2140 = vpack.c.bf16 %v2139, %v2139
    %2141 = vmatprep.subr.bf16.mxu0 %v597
    %2142 = vmatpush1.bf16.msra.mxu0 %v596
    %2143 = vmatprep.subr.bf16.mxu0 %v589
    %2144 = vmatpush1.bf16.msra.mxu0 %v588
    %2145 = vmatprep.subr.bf16.mxu0 %v581
    %2146 = vmatpush1.bf16.msra.mxu0 %v580
    %2147 = vmatprep.subr.bf16.mxu0 %v573
    %2148 = vmatpush1.bf16.msra.mxu0 %v572
    %2149 = vmatprep.subr.bf16.mxu0 %v565
    %2150 = vmatpush1.bf16.msra.mxu0 %v564
    %2151 = vmatprep.subr.bf16.mxu0 %v557
    %2152 = vmatpush1.bf16.msra.mxu0 %v556
    %2153 = vmatprep.subr.bf16.mxu0 %v549
    %2154 = vmatpush1.bf16.msra.mxu0 %v548
    %2155 = vmatprep.subr.bf16.mxu0 %v541
    %2156 = vmatpush1.bf16.msra.mxu0 %v540
    %2157 = vmatprep.subr.bf16.mxu0 0
    %2158 = vmatpush2.bf16.msra.mxu0 0
    %2159 = vmatprep.subr.bf16.mxu0 0
    %2160 = vmatpush2.bf16.msra.mxu0 0
    %2161 = vmatprep.subr.bf16.mxu0 0
    %2162 = vmatpush2.bf16.msra.mxu0 0
    %2163 = vmatprep.subr.bf16.mxu0 0
    %2164 = vmatpush2.bf16.msra.mxu0 0
    %2165 = vmatprep.subr.bf16.mxu0 0
    %2166 = vmatpush2.bf16.msra.mxu0 0
    %2167 = vmatprep.subr.bf16.mxu0 0
    %2168 = vmatpush2.bf16.msra.mxu0 0
    %2169 = vmatprep.subr.bf16.mxu0 0
    %2170 = vmatpush2.bf16.msra.mxu0 0
    %2171 = vmatprep.subr.bf16.mxu0 0
    %2172 = vmatpush2.bf16.msra.mxu0 0
    %2173 = vmatprep.mubr.bf16.mxu0 0
    %2174 = vmatmul.mubr.bf16.gmra.mxu0 %v2140
    %v2175 = vpop.f32.mrf.mxu0
    %v2176 = vadd.f32 0.0, %v2175
    %v2177 = vpop.f32.mrf.mxu0
    %v2178 = vadd.f32 0.0, %v2177
    %v2179 = vpop.f32.mrf.mxu0
    %v2180 = vpop.f32.mrf.mxu0
    %2181 = vdwg.mxu0
    %2182 = vmatprep.subr.bf16.mxu0 %v599
    %2183 = vmatpush1.bf16.msra.mxu0 %v598
    %2184 = vmatprep.subr.bf16.mxu0 %v591
    %2185 = vmatpush1.bf16.msra.mxu0 %v590
    %2186 = vmatprep.subr.bf16.mxu0 %v583
    %2187 = vmatpush1.bf16.msra.mxu0 %v582
    %2188 = vmatprep.subr.bf16.mxu0 %v575
    %2189 = vmatpush1.bf16.msra.mxu0 %v574
    %2190 = vmatprep.subr.bf16.mxu0 %v567
    %2191 = vmatpush1.bf16.msra.mxu0 %v566
    %2192 = vmatprep.subr.bf16.mxu0 %v559
    %2193 = vmatpush1.bf16.msra.mxu0 %v558
    %2194 = vmatprep.subr.bf16.mxu0 %v551
    %2195 = vmatpush1.bf16.msra.mxu0 %v550
    %2196 = vmatprep.subr.bf16.mxu0 %v543
    %2197 = vmatpush1.bf16.msra.mxu0 %v542
    %2198 = vmatprep.subr.bf16.mxu0 0
    %2199 = vmatpush2.bf16.msra.mxu0 0
    %2200 = vmatprep.subr.bf16.mxu0 0
    %2201 = vmatpush2.bf16.msra.mxu0 0
    %2202 = vmatprep.subr.bf16.mxu0 0
    %2203 = vmatpush2.bf16.msra.mxu0 0
    %2204 = vmatprep.subr.bf16.mxu0 0
    %2205 = vmatpush2.bf16.msra.mxu0 0
    %2206 = vmatprep.subr.bf16.mxu0 0
    %2207 = vmatpush2.bf16.msra.mxu0 0
    %2208 = vmatprep.subr.bf16.mxu0 0
    %2209 = vmatpush2.bf16.msra.mxu0 0
    %2210 = vmatprep.subr.bf16.mxu0 0
    %2211 = vmatpush2.bf16.msra.mxu0 0
    %2212 = vmatprep.subr.bf16.mxu0 0
    %2213 = vmatpush2.bf16.msra.mxu0 0
    %2214 = vmatprep.mubr.bf16.mxu0 0
    %2215 = vmatmul.mubr.bf16.gmra.mxu0 %v2140
    %v2216 = vpop.f32.mrf.mxu0
    %v2217 = vadd.f32 0.0, %v2216
    %v2218 = vpop.f32.mrf.mxu0
    %v2219 = vadd.f32 0.0, %v2218
    %v2220 = vpop.f32.mrf.mxu0
    %v2221 = vpop.f32.mrf.mxu0
    %2222 = vdwg.mxu0
    %2223 = vmatprep.subr.bf16.mxu0 %v601
    %2224 = vmatpush1.bf16.msra.mxu0 %v600
    %2225 = vmatprep.subr.bf16.mxu0 %v593
    %2226 = vmatpush1.bf16.msra.mxu0 %v592
    %2227 = vmatprep.subr.bf16.mxu0 %v585
    %2228 = vmatpush1.bf16.msra.mxu0 %v584
    %2229 = vmatprep.subr.bf16.mxu0 %v577
    %2230 = vmatpush1.bf16.msra.mxu0 %v576
    %2231 = vmatprep.subr.bf16.mxu0 %v569
    %2232 = vmatpush1.bf16.msra.mxu0 %v568
    %2233 = vmatprep.subr.bf16.mxu0 %v561
    %2234 = vmatpush1.bf16.msra.mxu0 %v560
    %2235 = vmatprep.subr.bf16.mxu0 %v553
    %2236 = vmatpush1.bf16.msra.mxu0 %v552
    %2237 = vmatprep.subr.bf16.mxu0 %v545
    %2238 = vmatpush1.bf16.msra.mxu0 %v544
    %2239 = vmatprep.subr.bf16.mxu0 0
    %2240 = vmatpush2.bf16.msra.mxu0 0
    %2241 = vmatprep.subr.bf16.mxu0 0
    %2242 = vmatpush2.bf16.msra.mxu0 0
    %2243 = vmatprep.subr.bf16.mxu0 0
    %2244 = vmatpush2.bf16.msra.mxu0 0
    %2245 = vmatprep.subr.bf16.mxu0 0
    %2246 = vmatpush2.bf16.msra.mxu0 0
    %2247 = vmatprep.subr.bf16.mxu0 0
    %2248 = vmatpush2.bf16.msra.mxu0 0
    %2249 = vmatprep.subr.bf16.mxu0 0
    %2250 = vmatpush2.bf16.msra.mxu0 0
    %2251 = vmatprep.subr.bf16.mxu0 0
    %2252 = vmatpush2.bf16.msra.mxu0 0
    %2253 = vmatprep.subr.bf16.mxu0 0
    %2254 = vmatpush2.bf16.msra.mxu0 0
    %2255 = vmatprep.mubr.bf16.mxu0 0
    %2256 = vmatmul.mubr.bf16.gmra.mxu0 %v2140
    %v2257 = vpop.f32.mrf.mxu0
    %v2258 = vadd.f32 0.0, %v2257
    %v2259 = vpop.f32.mrf.mxu0
    %v2260 = vadd.f32 0.0, %v2259
    %v2261 = vpop.f32.mrf.mxu0
    %v2262 = vpop.f32.mrf.mxu0
    %2263 = vdwg.mxu0
    %2264 = vmatprep.subr.bf16.mxu0 %v603
    %2265 = vmatpush1.bf16.msra.mxu0 %v602
    %2266 = vmatprep.subr.bf16.mxu0 %v595
    %2267 = vmatpush1.bf16.msra.mxu0 %v594
    %2268 = vmatprep.subr.bf16.mxu0 %v587
    %2269 = vmatpush1.bf16.msra.mxu0 %v586
    %2270 = vmatprep.subr.bf16.mxu0 %v579
    %2271 = vmatpush1.bf16.msra.mxu0 %v578
    %2272 = vmatprep.subr.bf16.mxu0 %v571
    %2273 = vmatpush1.bf16.msra.mxu0 %v570
    %2274 = vmatprep.subr.bf16.mxu0 %v563
    %2275 = vmatpush1.bf16.msra.mxu0 %v562
    %2276 = vmatprep.subr.bf16.mxu0 %v555
    %2277 = vmatpush1.bf16.msra.mxu0 %v554
    %2278 = vmatprep.subr.bf16.mxu0 %v547
    %2279 = vmatpush1.bf16.msra.mxu0 %v546
    %2280 = vmatprep.subr.bf16.mxu0 0
    %2281 = vmatpush2.bf16.msra.mxu0 0
    %2282 = vmatprep.subr.bf16.mxu0 0
    %2283 = vmatpush2.bf16.msra.mxu0 0
    %2284 = vmatprep.subr.bf16.mxu0 0
    %2285 = vmatpush2.bf16.msra.mxu0 0
    %2286 = vmatprep.subr.bf16.mxu0 0
    %2287 = vmatpush2.bf16.msra.mxu0 0
    %2288 = vmatprep.subr.bf16.mxu0 0
    %2289 = vmatpush2.bf16.msra.mxu0 0
    %2290 = vmatprep.subr.bf16.mxu0 0
    %2291 = vmatpush2.bf16.msra.mxu0 0
    %2292 = vmatprep.subr.bf16.mxu0 0
    %2293 = vmatpush2.bf16.msra.mxu0 0
    %2294 = vmatprep.subr.bf16.mxu0 0
    %2295 = vmatpush2.bf16.msra.mxu0 0
    %2296 = vmatprep.mubr.bf16.mxu0 0
    %2297 = vmatmul.mubr.bf16.gmra.mxu0 %v2140
    %v2298 = vpop.f32.mrf.mxu0
    %v2299 = vadd.f32 0.0, %v2298
    %v2300 = vpop.f32.mrf.mxu0
    %v2301 = vadd.f32 0.0, %v2300
    %v2302 = vpop.f32.mrf.mxu0
    %v2303 = vpop.f32.mrf.mxu0
    %2304 = vdwg.mxu0
    %v2305 = vpack.c.bf16 %v2104, %v2104
    %2306 = vmatprep.subr.bf16.mxu0 %v989
    %2307 = vmatpush1.bf16.msra.mxu0 %v988
    %2308 = vmatprep.subr.bf16.mxu0 %v985
    %2309 = vmatpush1.bf16.msra.mxu0 %v984
    %2310 = vmatprep.subr.bf16.mxu0 %v981
    %2311 = vmatpush1.bf16.msra.mxu0 %v980
    %2312 = vmatprep.subr.bf16.mxu0 %v977
    %2313 = vmatpush1.bf16.msra.mxu0 %v976
    %2314 = vmatprep.subr.bf16.mxu0 %v973
    %2315 = vmatpush1.bf16.msra.mxu0 %v972
    %2316 = vmatprep.subr.bf16.mxu0 %v969
    %2317 = vmatpush1.bf16.msra.mxu0 %v968
    %2318 = vmatprep.subr.bf16.mxu0 %v965
    %2319 = vmatpush1.bf16.msra.mxu0 %v964
    %2320 = vmatprep.subr.bf16.mxu0 %v961
    %2321 = vmatpush1.bf16.msra.mxu0 %v960
    %2322 = vmatprep.subr.bf16.mxu0 0
    %2323 = vmatpush2.bf16.msra.mxu0 0
    %2324 = vmatprep.subr.bf16.mxu0 0
    %2325 = vmatpush2.bf16.msra.mxu0 0
    %2326 = vmatprep.subr.bf16.mxu0 0
    %2327 = vmatpush2.bf16.msra.mxu0 0
    %2328 = vmatprep.subr.bf16.mxu0 0
    %2329 = vmatpush2.bf16.msra.mxu0 0
    %2330 = vmatprep.subr.bf16.mxu0 0
    %2331 = vmatpush2.bf16.msra.mxu0 0
    %2332 = vmatprep.subr.bf16.mxu0 0
    %2333 = vmatpush2.bf16.msra.mxu0 0
    %2334 = vmatprep.subr.bf16.mxu0 0
    %2335 = vmatpush2.bf16.msra.mxu0 0
    %2336 = vmatprep.subr.bf16.mxu0 0
    %2337 = vmatpush2.bf16.msra.mxu0 0
    %2338 = vmatprep.mubr.bf16.mxu0 0
    %2339 = vmatmul.mubr.bf16.gmra.mxu0 %v2305
    %v2340 = vpop.f32.mrf.mxu0
    %v2341 = vadd.f32 0.0, %v2340
    %v2342 = vpop.f32.mrf.mxu0
    %v2343 = vadd.f32 0.0, %v2342
    %v2344 = vpop.f32.mrf.mxu0
    %v2345 = vpop.f32.mrf.mxu0
    %2346 = vdwg.mxu0
    %2347 = vmatprep.subr.bf16.mxu0 %v991
    %2348 = vmatpush1.bf16.msra.mxu0 %v990
    %2349 = vmatprep.subr.bf16.mxu0 %v987
    %2350 = vmatpush1.bf16.msra.mxu0 %v986
    %2351 = vmatprep.subr.bf16.mxu0 %v983
    %2352 = vmatpush1.bf16.msra.mxu0 %v982
    %2353 = vmatprep.subr.bf16.mxu0 %v979
    %2354 = vmatpush1.bf16.msra.mxu0 %v978
    %2355 = vmatprep.subr.bf16.mxu0 %v975
    %2356 = vmatpush1.bf16.msra.mxu0 %v974
    %2357 = vmatprep.subr.bf16.mxu0 %v971
    %2358 = vmatpush1.bf16.msra.mxu0 %v970
    %2359 = vmatprep.subr.bf16.mxu0 %v967
    %2360 = vmatpush1.bf16.msra.mxu0 %v966
    %2361 = vmatprep.subr.bf16.mxu0 %v963
    %2362 = vmatpush1.bf16.msra.mxu0 %v962
    %2363 = vmatprep.subr.bf16.mxu0 0
    %2364 = vmatpush2.bf16.msra.mxu0 0
    %2365 = vmatprep.subr.bf16.mxu0 0
    %2366 = vmatpush2.bf16.msra.mxu0 0
    %2367 = vmatprep.subr.bf16.mxu0 0
    %2368 = vmatpush2.bf16.msra.mxu0 0
    %2369 = vmatprep.subr.bf16.mxu0 0
    %2370 = vmatpush2.bf16.msra.mxu0 0
    %2371 = vmatprep.subr.bf16.mxu0 0
    %2372 = vmatpush2.bf16.msra.mxu0 0
    %2373 = vmatprep.subr.bf16.mxu0 0
    %2374 = vmatpush2.bf16.msra.mxu0 0
    %2375 = vmatprep.subr.bf16.mxu0 0
    %2376 = vmatpush2.bf16.msra.mxu0 0
    %2377 = vmatprep.subr.bf16.mxu0 0
    %2378 = vmatpush2.bf16.msra.mxu0 0
    %2379 = vmatprep.mubr.bf16.mxu0 0
    %2380 = vmatmul.mubr.bf16.gmra.mxu0 %v2305
    %v2381 = vpop.f32.mrf.mxu0
    %v2382 = vadd.f32 0.0, %v2381
    %v2383 = vpop.f32.mrf.mxu0
    %v2384 = vadd.f32 0.0, %v2383
    %v2385 = vpop.f32.mrf.mxu0
    %v2386 = vpop.f32.mrf.mxu0
    %2387 = vdwg.mxu0
    %v2388 = vadd.f32 %v2258, %v2341
    %v2389 = vadd.f32 %v2260, %v2343
    %v2390 = vadd.f32 %v2299, %v2382
    %v2391 = vadd.f32 %v2301, %v2384
    %v2392 = vadd.f32 %v2388, %v1115
    %v2393 = vadd.f32 %v2389, %v1119
    %v2394 = vadd.f32 %v2390, %v1123
    %v2395 = vadd.f32 %v2391, %v1127
    %v2396 = vxor.u32 %v2392, 2147483648
    %v2397 = vxor.u32 %v2393, 2147483648
    %v2398 = vxor.u32 %v2394, 2147483648
    %v2399 = vmul.f32 %v2396, 1.442695
    %v2400 = vpow.pop %v2399
    %v2401 = vmul.f32 %v2397, 1.442695
    %v2402 = vpow.pop %v2401
    %v2403 = vmul.f32 %v2398, 1.442695
    %v2404 = vpow.pop %v2403
    %v2405 = vadd.f32 %v2400, 1.0
    %v2406 = vadd.f32 %v2402, 1.0
    %v2407 = vadd.f32 %v2404, 1.0
    %v2408 = vrcp.pop %v2405
    %v2409 = vmul.f32 1.0, %v2408
    %v2410 = vrcp.pop %v2406
    %v2411 = vmul.f32 1.0, %v2410
    %v2412 = vrcp.pop %v2407
    %v2413 = vmul.f32 1.0, %v2412
    %v2414 = vtanh.pop %v2395
    %v2415 = vmul.f32 %v2411, %v2102
    %v2416 = vmul.f32 %v2409, %v2414
    %v2417 = vadd.f32 %v2415, %v2416
    %v2418 = vtanh.pop %v2417
    %v2419 = vmul.f32 %v2413, %v2418
    %s2420 = smul.u32 5, 4
    %s2421 = smul.addr %s2420, 8
    %s2422 = scalar_lea.vmem [#allocation2], %s2421
    %v2423 = vld [vmem:[%s2422] sm:$0xff]
    %v2424 = vld [vmem:[%s2422 + $0x8] sm:$0xff]
    %v2425 = vld [vmem:[%s2422 + $0x10] sm:$0xff]
    %v2426 = vld [vmem:[%s2422 + $0x18] sm:$0xff]
    %v2427 = vadd.f32 %v2423, %v2176
    %v2428 = vadd.f32 %v2424, %v2178
    %v2429 = vadd.f32 %v2425, %v2217
    %v2430 = vadd.f32 %v2426, %v2219
    %v2431 = vxor.u32 %v2427, 2147483648
    %v2432 = vxor.u32 %v2428, 2147483648
    %v2433 = vxor.u32 %v2429, 2147483648
    %v2434 = vmul.f32 %v2431, 1.442695
    %v2435 = vpow.pop %v2434
    %v2436 = vmul.f32 %v2432, 1.442695
    %v2437 = vpow.pop %v2436
    %v2438 = vmul.f32 %v2433, 1.442695
    %v2439 = vpow.pop %v2438
    %v2440 = vadd.f32 %v2435, 1.0
    %v2441 = vadd.f32 %v2437, 1.0
    %v2442 = vadd.f32 %v2439, 1.0
    %v2443 = vrcp.pop %v2440
    %v2444 = vmul.f32 1.0, %v2443
    %v2445 = vrcp.pop %v2441
    %v2446 = vmul.f32 1.0, %v2445
    %v2447 = vrcp.pop %v2442
    %v2448 = vmul.f32 1.0, %v2447
    %v2449 = vtanh.pop %v2430
    %v2450 = vmul.f32 %v2446, %v2137
    %v2451 = vmul.f32 %v2444, %v2449
    %v2452 = vadd.f32 %v2450, %v2451
    %v2453 = vtanh.pop %v2452
    %v2454 = vmul.f32 %v2448, %v2453
    %v2455 = vpack.c.bf16 %v2454, %v2454
    %2456 = vmatprep.subr.bf16.mxu0 %v597
    %2457 = vmatpush1.bf16.msra.mxu0 %v596
    %2458 = vmatprep.subr.bf16.mxu0 %v589
    %2459 = vmatpush1.bf16.msra.mxu0 %v588
    %2460 = vmatprep.subr.bf16.mxu0 %v581
    %2461 = vmatpush1.bf16.msra.mxu0 %v580
    %2462 = vmatprep.subr.bf16.mxu0 %v573
    %2463 = vmatpush1.bf16.msra.mxu0 %v572
    %2464 = vmatprep.subr.bf16.mxu0 %v565
    %2465 = vmatpush1.bf16.msra.mxu0 %v564
    %2466 = vmatprep.subr.bf16.mxu0 %v557
    %2467 = vmatpush1.bf16.msra.mxu0 %v556
    %2468 = vmatprep.subr.bf16.mxu0 %v549
    %2469 = vmatpush1.bf16.msra.mxu0 %v548
    %2470 = vmatprep.subr.bf16.mxu0 %v541
    %2471 = vmatpush1.bf16.msra.mxu0 %v540
    %2472 = vmatprep.subr.bf16.mxu0 0
    %2473 = vmatpush2.bf16.msra.mxu0 0
    %2474 = vmatprep.subr.bf16.mxu0 0
    %2475 = vmatpush2.bf16.msra.mxu0 0
    %2476 = vmatprep.subr.bf16.mxu0 0
    %2477 = vmatpush2.bf16.msra.mxu0 0
    %2478 = vmatprep.subr.bf16.mxu0 0
    %2479 = vmatpush2.bf16.msra.mxu0 0
    %2480 = vmatprep.subr.bf16.mxu0 0
    %2481 = vmatpush2.bf16.msra.mxu0 0
    %2482 = vmatprep.subr.bf16.mxu0 0
    %2483 = vmatpush2.bf16.msra.mxu0 0
    %2484 = vmatprep.subr.bf16.mxu0 0
    %2485 = vmatpush2.bf16.msra.mxu0 0
    %2486 = vmatprep.subr.bf16.mxu0 0
    %2487 = vmatpush2.bf16.msra.mxu0 0
    %2488 = vmatprep.mubr.bf16.mxu0 0
    %2489 = vmatmul.mubr.bf16.gmra.mxu0 %v2455
    %v2490 = vpop.f32.mrf.mxu0
    %v2491 = vadd.f32 0.0, %v2490
    %v2492 = vpop.f32.mrf.mxu0
    %v2493 = vadd.f32 0.0, %v2492
    %v2494 = vpop.f32.mrf.mxu0
    %v2495 = vpop.f32.mrf.mxu0
    %2496 = vdwg.mxu0
    %2497 = vmatprep.subr.bf16.mxu0 %v599
    %2498 = vmatpush1.bf16.msra.mxu0 %v598
    %2499 = vmatprep.subr.bf16.mxu0 %v591
    %2500 = vmatpush1.bf16.msra.mxu0 %v590
    %2501 = vmatprep.subr.bf16.mxu0 %v583
    %2502 = vmatpush1.bf16.msra.mxu0 %v582
    %2503 = vmatprep.subr.bf16.mxu0 %v575
    %2504 = vmatpush1.bf16.msra.mxu0 %v574
    %2505 = vmatprep.subr.bf16.mxu0 %v567
    %2506 = vmatpush1.bf16.msra.mxu0 %v566
    %2507 = vmatprep.subr.bf16.mxu0 %v559
    %2508 = vmatpush1.bf16.msra.mxu0 %v558
    %2509 = vmatprep.subr.bf16.mxu0 %v551
    %2510 = vmatpush1.bf16.msra.mxu0 %v550
    %2511 = vmatprep.subr.bf16.mxu0 %v543
    %2512 = vmatpush1.bf16.msra.mxu0 %v542
    %2513 = vmatprep.subr.bf16.mxu0 0
    %2514 = vmatpush2.bf16.msra.mxu0 0
    %2515 = vmatprep.subr.bf16.mxu0 0
    %2516 = vmatpush2.bf16.msra.mxu0 0
    %2517 = vmatprep.subr.bf16.mxu0 0
    %2518 = vmatpush2.bf16.msra.mxu0 0
    %2519 = vmatprep.subr.bf16.mxu0 0
    %2520 = vmatpush2.bf16.msra.mxu0 0
    %2521 = vmatprep.subr.bf16.mxu0 0
    %2522 = vmatpush2.bf16.msra.mxu0 0
    %2523 = vmatprep.subr.bf16.mxu0 0
    %2524 = vmatpush2.bf16.msra.mxu0 0
    %2525 = vmatprep.subr.bf16.mxu0 0
    %2526 = vmatpush2.bf16.msra.mxu0 0
    %2527 = vmatprep.subr.bf16.mxu0 0
    %2528 = vmatpush2.bf16.msra.mxu0 0
    %2529 = vmatprep.mubr.bf16.mxu0 0
    %2530 = vmatmul.mubr.bf16.gmra.mxu0 %v2455
    %v2531 = vpop.f32.mrf.mxu0
    %v2532 = vadd.f32 0.0, %v2531
    %v2533 = vpop.f32.mrf.mxu0
    %v2534 = vadd.f32 0.0, %v2533
    %v2535 = vpop.f32.mrf.mxu0
    %v2536 = vpop.f32.mrf.mxu0
    %2537 = vdwg.mxu0
    %2538 = vmatprep.subr.bf16.mxu0 %v601
    %2539 = vmatpush1.bf16.msra.mxu0 %v600
    %2540 = vmatprep.subr.bf16.mxu0 %v593
    %2541 = vmatpush1.bf16.msra.mxu0 %v592
    %2542 = vmatprep.subr.bf16.mxu0 %v585
    %2543 = vmatpush1.bf16.msra.mxu0 %v584
    %2544 = vmatprep.subr.bf16.mxu0 %v577
    %2545 = vmatpush1.bf16.msra.mxu0 %v576
    %2546 = vmatprep.subr.bf16.mxu0 %v569
    %2547 = vmatpush1.bf16.msra.mxu0 %v568
    %2548 = vmatprep.subr.bf16.mxu0 %v561
    %2549 = vmatpush1.bf16.msra.mxu0 %v560
    %2550 = vmatprep.subr.bf16.mxu0 %v553
    %2551 = vmatpush1.bf16.msra.mxu0 %v552
    %2552 = vmatprep.subr.bf16.mxu0 %v545
    %2553 = vmatpush1.bf16.msra.mxu0 %v544
    %2554 = vmatprep.subr.bf16.mxu0 0
    %2555 = vmatpush2.bf16.msra.mxu0 0
    %2556 = vmatprep.subr.bf16.mxu0 0
    %2557 = vmatpush2.bf16.msra.mxu0 0
    %2558 = vmatprep.subr.bf16.mxu0 0
    %2559 = vmatpush2.bf16.msra.mxu0 0
    %2560 = vmatprep.subr.bf16.mxu0 0
    %2561 = vmatpush2.bf16.msra.mxu0 0
    %2562 = vmatprep.subr.bf16.mxu0 0
    %2563 = vmatpush2.bf16.msra.mxu0 0
    %2564 = vmatprep.subr.bf16.mxu0 0
    %2565 = vmatpush2.bf16.msra.mxu0 0
    %2566 = vmatprep.subr.bf16.mxu0 0
    %2567 = vmatpush2.bf16.msra.mxu0 0
    %2568 = vmatprep.subr.bf16.mxu0 0
    %2569 = vmatpush2.bf16.msra.mxu0 0
    %2570 = vmatprep.mubr.bf16.mxu0 0
    %2571 = vmatmul.mubr.bf16.gmra.mxu0 %v2455
    %v2572 = vpop.f32.mrf.mxu0
    %v2573 = vadd.f32 0.0, %v2572
    %v2574 = vpop.f32.mrf.mxu0
    %v2575 = vadd.f32 0.0, %v2574
    %v2576 = vpop.f32.mrf.mxu0
    %v2577 = vpop.f32.mrf.mxu0
    %2578 = vdwg.mxu0
    %2579 = vmatprep.subr.bf16.mxu0 %v603
    %2580 = vmatpush1.bf16.msra.mxu0 %v602
    %2581 = vmatprep.subr.bf16.mxu0 %v595
    %2582 = vmatpush1.bf16.msra.mxu0 %v594
    %2583 = vmatprep.subr.bf16.mxu0 %v587
    %2584 = vmatpush1.bf16.msra.mxu0 %v586
    %2585 = vmatprep.subr.bf16.mxu0 %v579
    %2586 = vmatpush1.bf16.msra.mxu0 %v578
    %2587 = vmatprep.subr.bf16.mxu0 %v571
    %2588 = vmatpush1.bf16.msra.mxu0 %v570
    %2589 = vmatprep.subr.bf16.mxu0 %v563
    %2590 = vmatpush1.bf16.msra.mxu0 %v562
    %2591 = vmatprep.subr.bf16.mxu0 %v555
    %2592 = vmatpush1.bf16.msra.mxu0 %v554
    %2593 = vmatprep.subr.bf16.mxu0 %v547
    %2594 = vmatpush1.bf16.msra.mxu0 %v546
    %2595 = vmatprep.subr.bf16.mxu0 0
    %2596 = vmatpush2.bf16.msra.mxu0 0
    %2597 = vmatprep.subr.bf16.mxu0 0
    %2598 = vmatpush2.bf16.msra.mxu0 0
    %2599 = vmatprep.subr.bf16.mxu0 0
    %2600 = vmatpush2.bf16.msra.mxu0 0
    %2601 = vmatprep.subr.bf16.mxu0 0
    %2602 = vmatpush2.bf16.msra.mxu0 0
    %2603 = vmatprep.subr.bf16.mxu0 0
    %2604 = vmatpush2.bf16.msra.mxu0 0
    %2605 = vmatprep.subr.bf16.mxu0 0
    %2606 = vmatpush2.bf16.msra.mxu0 0
    %2607 = vmatprep.subr.bf16.mxu0 0
    %2608 = vmatpush2.bf16.msra.mxu0 0
    %2609 = vmatprep.subr.bf16.mxu0 0
    %2610 = vmatpush2.bf16.msra.mxu0 0
    %2611 = vmatprep.mubr.bf16.mxu0 0
    %2612 = vmatmul.mubr.bf16.gmra.mxu0 %v2455
    %v2613 = vpop.f32.mrf.mxu0
    %v2614 = vadd.f32 0.0, %v2613
    %v2615 = vpop.f32.mrf.mxu0
    %v2616 = vadd.f32 0.0, %v2615
    %v2617 = vpop.f32.mrf.mxu0
    %v2618 = vpop.f32.mrf.mxu0
    %2619 = vdwg.mxu0
    %v2620 = vpack.c.bf16 %v2419, %v2419
    %2621 = vmatprep.subr.bf16.mxu0 %v989
    %2622 = vmatpush1.bf16.msra.mxu0 %v988
    %2623 = vmatprep.subr.bf16.mxu0 %v985
    %2624 = vmatpush1.bf16.msra.mxu0 %v984
    %2625 = vmatprep.subr.bf16.mxu0 %v981
    %2626 = vmatpush1.bf16.msra.mxu0 %v980
    %2627 = vmatprep.subr.bf16.mxu0 %v977
    %2628 = vmatpush1.bf16.msra.mxu0 %v976
    %2629 = vmatprep.subr.bf16.mxu0 %v973
    %2630 = vmatpush1.bf16.msra.mxu0 %v972
    %2631 = vmatprep.subr.bf16.mxu0 %v969
    %2632 = vmatpush1.bf16.msra.mxu0 %v968
    %2633 = vmatprep.subr.bf16.mxu0 %v965
    %2634 = vmatpush1.bf16.msra.mxu0 %v964
    %2635 = vmatprep.subr.bf16.mxu0 %v961
    %2636 = vmatpush1.bf16.msra.mxu0 %v960
    %2637 = vmatprep.subr.bf16.mxu0 0
    %2638 = vmatpush2.bf16.msra.mxu0 0
    %2639 = vmatprep.subr.bf16.mxu0 0
    %2640 = vmatpush2.bf16.msra.mxu0 0
    %2641 = vmatprep.subr.bf16.mxu0 0
    %2642 = vmatpush2.bf16.msra.mxu0 0
    %2643 = vmatprep.subr.bf16.mxu0 0
    %2644 = vmatpush2.bf16.msra.mxu0 0
    %2645 = vmatprep.subr.bf16.mxu0 0
    %2646 = vmatpush2.bf16.msra.mxu0 0
    %2647 = vmatprep.subr.bf16.mxu0 0
    %2648 = vmatpush2.bf16.msra.mxu0 0
    %2649 = vmatprep.subr.bf16.mxu0 0
    %2650 = vmatpush2.bf16.msra.mxu0 0
    %2651 = vmatprep.subr.bf16.mxu0 0
    %2652 = vmatpush2.bf16.msra.mxu0 0
    %2653 = vmatprep.mubr.bf16.mxu0 0
    %2654 = vmatmul.mubr.bf16.gmra.mxu0 %v2620
    %v2655 = vpop.f32.mrf.mxu0
    %v2656 = vadd.f32 0.0, %v2655
    %v2657 = vpop.f32.mrf.mxu0
    %v2658 = vadd.f32 0.0, %v2657
    %v2659 = vpop.f32.mrf.mxu0
    %v2660 = vpop.f32.mrf.mxu0
    %2661 = vdwg.mxu0
    %2662 = vmatprep.subr.bf16.mxu0 %v991
    %2663 = vmatpush1.bf16.msra.mxu0 %v990
    %2664 = vmatprep.subr.bf16.mxu0 %v987
    %2665 = vmatpush1.bf16.msra.mxu0 %v986
    %2666 = vmatprep.subr.bf16.mxu0 %v983
    %2667 = vmatpush1.bf16.msra.mxu0 %v982
    %2668 = vmatprep.subr.bf16.mxu0 %v979
    %2669 = vmatpush1.bf16.msra.mxu0 %v978
    %2670 = vmatprep.subr.bf16.mxu0 %v975
    %2671 = vmatpush1.bf16.msra.mxu0 %v974
    %2672 = vmatprep.subr.bf16.mxu0 %v971
    %2673 = vmatpush1.bf16.msra.mxu0 %v970
    %2674 = vmatprep.subr.bf16.mxu0 %v967
    %2675 = vmatpush1.bf16.msra.mxu0 %v966
    %2676 = vmatprep.subr.bf16.mxu0 %v963
    %2677 = vmatpush1.bf16.msra.mxu0 %v962
    %2678 = vmatprep.subr.bf16.mxu0 0
    %2679 = vmatpush2.bf16.msra.mxu0 0
    %2680 = vmatprep.subr.bf16.mxu0 0
    %2681 = vmatpush2.bf16.msra.mxu0 0
    %2682 = vmatprep.subr.bf16.mxu0 0
    %2683 = vmatpush2.bf16.msra.mxu0 0
    %2684 = vmatprep.subr.bf16.mxu0 0
    %2685 = vmatpush2.bf16.msra.mxu0 0
    %2686 = vmatprep.subr.bf16.mxu0 0
    %2687 = vmatpush2.bf16.msra.mxu0 0
    %2688 = vmatprep.subr.bf16.mxu0 0
    %2689 = vmatpush2.bf16.msra.mxu0 0
    %2690 = vmatprep.subr.bf16.mxu0 0
    %2691 = vmatpush2.bf16.msra.mxu0 0
    %2692 = vmatprep.subr.bf16.mxu0 0
    %2693 = vmatpush2.bf16.msra.mxu0 0
    %2694 = vmatprep.mubr.bf16.mxu0 0
    %2695 = vmatmul.mubr.bf16.gmra.mxu0 %v2620
    %v2696 = vpop.f32.mrf.mxu0
    %v2697 = vadd.f32 0.0, %v2696
    %v2698 = vpop.f32.mrf.mxu0
    %v2699 = vadd.f32 0.0, %v2698
    %v2700 = vpop.f32.mrf.mxu0
    %v2701 = vpop.f32.mrf.mxu0
    %2702 = vdwg.mxu0
    %v2703 = vadd.f32 %v2573, %v2656
    %v2704 = vadd.f32 %v2575, %v2658
    %v2705 = vadd.f32 %v2614, %v2697
    %v2706 = vadd.f32 %v2616, %v2699
    %v2707 = vadd.f32 %v2703, %v1115
    %v2708 = vadd.f32 %v2704, %v1119
    %v2709 = vadd.f32 %v2705, %v1123
    %v2710 = vadd.f32 %v2706, %v1127
    %v2711 = vxor.u32 %v2707, 2147483648
    %v2712 = vxor.u32 %v2708, 2147483648
    %v2713 = vxor.u32 %v2709, 2147483648
    %v2714 = vmul.f32 %v2711, 1.442695
    %v2715 = vpow.pop %v2714
    %v2716 = vmul.f32 %v2712, 1.442695
    %v2717 = vpow.pop %v2716
    %v2718 = vmul.f32 %v2713, 1.442695
    %v2719 = vpow.pop %v2718
    %v2720 = vadd.f32 %v2715, 1.0
    %v2721 = vadd.f32 %v2717, 1.0
    %v2722 = vadd.f32 %v2719, 1.0
    %v2723 = vrcp.pop %v2720
    %v2724 = vmul.f32 1.0, %v2723
    %v2725 = vrcp.pop %v2721
    %v2726 = vmul.f32 1.0, %v2725
    %v2727 = vrcp.pop %v2722
    %v2728 = vmul.f32 1.0, %v2727
    %v2729 = vtanh.pop %v2710
    %v2730 = vmul.f32 %v2726, %v2417
    %v2731 = vmul.f32 %v2724, %v2729
    %v2732 = vadd.f32 %v2730, %v2731
    %v2733 = vtanh.pop %v2732
    %v2734 = vmul.f32 %v2728, %v2733
    %s2735 = smul.u32 6, 4
    %s2736 = smul.addr %s2735, 8
    %s2737 = scalar_lea.vmem [#allocation2], %s2736
    %v2738 = vld [vmem:[%s2737] sm:$0xff]
    %v2739 = vld [vmem:[%s2737 + $0x8] sm:$0xff]
    %v2740 = vld [vmem:[%s2737 + $0x10] sm:$0xff]
    %v2741 = vld [vmem:[%s2737 + $0x18] sm:$0xff]
    %v2742 = vadd.f32 %v2738, %v2491
    %v2743 = vadd.f32 %v2739, %v2493
    %v2744 = vadd.f32 %v2740, %v2532
    %v2745 = vadd.f32 %v2741, %v2534
    %v2746 = vxor.u32 %v2742, 2147483648
    %v2747 = vxor.u32 %v2743, 2147483648
    %v2748 = vxor.u32 %v2744, 2147483648
    %v2749 = vmul.f32 %v2746, 1.442695
    %v2750 = vpow.pop %v2749
    %v2751 = vmul.f32 %v2747, 1.442695
    %v2752 = vpow.pop %v2751
    %v2753 = vmul.f32 %v2748, 1.442695
    %v2754 = vpow.pop %v2753
    %v2755 = vadd.f32 %v2750, 1.0
    %v2756 = vadd.f32 %v2752, 1.0
    %v2757 = vadd.f32 %v2754, 1.0
    %v2758 = vrcp.pop %v2755
    %v2759 = vmul.f32 1.0, %v2758
    %v2760 = vrcp.pop %v2756
    %v2761 = vmul.f32 1.0, %v2760
    %v2762 = vrcp.pop %v2757
    %v2763 = vmul.f32 1.0, %v2762
    %v2764 = vtanh.pop %v2745
    %v2765 = vmul.f32 %v2761, %v2452
    %v2766 = vmul.f32 %v2759, %v2764
    %v2767 = vadd.f32 %v2765, %v2766
    %v2768 = vtanh.pop %v2767
    %v2769 = vmul.f32 %v2763, %v2768
    %v2770 = vpack.c.bf16 %v2769, %v2769
    %2771 = vmatprep.subr.bf16.mxu0 %v597
    %2772 = vmatpush1.bf16.msra.mxu0 %v596
    %2773 = vmatprep.subr.bf16.mxu0 %v589
    %2774 = vmatpush1.bf16.msra.mxu0 %v588
    %2775 = vmatprep.subr.bf16.mxu0 %v581
    %2776 = vmatpush1.bf16.msra.mxu0 %v580
    %2777 = vmatprep.subr.bf16.mxu0 %v573
    %2778 = vmatpush1.bf16.msra.mxu0 %v572
    %2779 = vmatprep.subr.bf16.mxu0 %v565
    %2780 = vmatpush1.bf16.msra.mxu0 %v564
    %2781 = vmatprep.subr.bf16.mxu0 %v557
    %2782 = vmatpush1.bf16.msra.mxu0 %v556
    %2783 = vmatprep.subr.bf16.mxu0 %v549
    %2784 = vmatpush1.bf16.msra.mxu0 %v548
    %2785 = vmatprep.subr.bf16.mxu0 %v541
    %2786 = vmatpush1.bf16.msra.mxu0 %v540
    %2787 = vmatprep.subr.bf16.mxu0 0
    %2788 = vmatpush2.bf16.msra.mxu0 0
    %2789 = vmatprep.subr.bf16.mxu0 0
    %2790 = vmatpush2.bf16.msra.mxu0 0
    %2791 = vmatprep.subr.bf16.mxu0 0
    %2792 = vmatpush2.bf16.msra.mxu0 0
    %2793 = vmatprep.subr.bf16.mxu0 0
    %2794 = vmatpush2.bf16.msra.mxu0 0
    %2795 = vmatprep.subr.bf16.mxu0 0
    %2796 = vmatpush2.bf16.msra.mxu0 0
    %2797 = vmatprep.subr.bf16.mxu0 0
    %2798 = vmatpush2.bf16.msra.mxu0 0
    %2799 = vmatprep.subr.bf16.mxu0 0
    %2800 = vmatpush2.bf16.msra.mxu0 0
    %2801 = vmatprep.subr.bf16.mxu0 0
    %2802 = vmatpush2.bf16.msra.mxu0 0
    %2803 = vmatprep.mubr.bf16.mxu0 0
    %2804 = vmatmul.mubr.bf16.gmra.mxu0 %v2770
    %v2805 = vpop.f32.mrf.mxu0
    %v2806 = vadd.f32 0.0, %v2805
    %v2807 = vpop.f32.mrf.mxu0
    %v2808 = vadd.f32 0.0, %v2807
    %v2809 = vpop.f32.mrf.mxu0
    %v2810 = vpop.f32.mrf.mxu0
    %2811 = vdwg.mxu0
    %2812 = vmatprep.subr.bf16.mxu0 %v599
    %2813 = vmatpush1.bf16.msra.mxu0 %v598
    %2814 = vmatprep.subr.bf16.mxu0 %v591
    %2815 = vmatpush1.bf16.msra.mxu0 %v590
    %2816 = vmatprep.subr.bf16.mxu0 %v583
    %2817 = vmatpush1.bf16.msra.mxu0 %v582
    %2818 = vmatprep.subr.bf16.mxu0 %v575
    %2819 = vmatpush1.bf16.msra.mxu0 %v574
    %2820 = vmatprep.subr.bf16.mxu0 %v567
    %2821 = vmatpush1.bf16.msra.mxu0 %v566
    %2822 = vmatprep.subr.bf16.mxu0 %v559
    %2823 = vmatpush1.bf16.msra.mxu0 %v558
    %2824 = vmatprep.subr.bf16.mxu0 %v551
    %2825 = vmatpush1.bf16.msra.mxu0 %v550
    %2826 = vmatprep.subr.bf16.mxu0 %v543
    %2827 = vmatpush1.bf16.msra.mxu0 %v542
    %2828 = vmatprep.subr.bf16.mxu0 0
    %2829 = vmatpush2.bf16.msra.mxu0 0
    %2830 = vmatprep.subr.bf16.mxu0 0
    %2831 = vmatpush2.bf16.msra.mxu0 0
    %2832 = vmatprep.subr.bf16.mxu0 0
    %2833 = vmatpush2.bf16.msra.mxu0 0
    %2834 = vmatprep.subr.bf16.mxu0 0
    %2835 = vmatpush2.bf16.msra.mxu0 0
    %2836 = vmatprep.subr.bf16.mxu0 0
    %2837 = vmatpush2.bf16.msra.mxu0 0
    %2838 = vmatprep.subr.bf16.mxu0 0
    %2839 = vmatpush2.bf16.msra.mxu0 0
    %2840 = vmatprep.subr.bf16.mxu0 0
    %2841 = vmatpush2.bf16.msra.mxu0 0
    %2842 = vmatprep.subr.bf16.mxu0 0
    %2843 = vmatpush2.bf16.msra.mxu0 0
    %2844 = vmatprep.mubr.bf16.mxu0 0
    %2845 = vmatmul.mubr.bf16.gmra.mxu0 %v2770
    %v2846 = vpop.f32.mrf.mxu0
    %v2847 = vadd.f32 0.0, %v2846
    %v2848 = vpop.f32.mrf.mxu0
    %v2849 = vadd.f32 0.0, %v2848
    %v2850 = vpop.f32.mrf.mxu0
    %v2851 = vpop.f32.mrf.mxu0
    %2852 = vdwg.mxu0
    %2853 = vmatprep.subr.bf16.mxu0 %v601
    %2854 = vmatpush1.bf16.msra.mxu0 %v600
    %2855 = vmatprep.subr.bf16.mxu0 %v593
    %2856 = vmatpush1.bf16.msra.mxu0 %v592
    %2857 = vmatprep.subr.bf16.mxu0 %v585
    %2858 = vmatpush1.bf16.msra.mxu0 %v584
    %2859 = vmatprep.subr.bf16.mxu0 %v577
    %2860 = vmatpush1.bf16.msra.mxu0 %v576
    %2861 = vmatprep.subr.bf16.mxu0 %v569
    %2862 = vmatpush1.bf16.msra.mxu0 %v568
    %2863 = vmatprep.subr.bf16.mxu0 %v561
    %2864 = vmatpush1.bf16.msra.mxu0 %v560
    %2865 = vmatprep.subr.bf16.mxu0 %v553
    %2866 = vmatpush1.bf16.msra.mxu0 %v552
    %2867 = vmatprep.subr.bf16.mxu0 %v545
    %2868 = vmatpush1.bf16.msra.mxu0 %v544
    %2869 = vmatprep.subr.bf16.mxu0 0
    %2870 = vmatpush2.bf16.msra.mxu0 0
    %2871 = vmatprep.subr.bf16.mxu0 0
    %2872 = vmatpush2.bf16.msra.mxu0 0
    %2873 = vmatprep.subr.bf16.mxu0 0
    %2874 = vmatpush2.bf16.msra.mxu0 0
    %2875 = vmatprep.subr.bf16.mxu0 0
    %2876 = vmatpush2.bf16.msra.mxu0 0
    %2877 = vmatprep.subr.bf16.mxu0 0
    %2878 = vmatpush2.bf16.msra.mxu0 0
    %2879 = vmatprep.subr.bf16.mxu0 0
    %2880 = vmatpush2.bf16.msra.mxu0 0
    %2881 = vmatprep.subr.bf16.mxu0 0
    %2882 = vmatpush2.bf16.msra.mxu0 0
    %2883 = vmatprep.subr.bf16.mxu0 0
    %2884 = vmatpush2.bf16.msra.mxu0 0
    %2885 = vmatprep.mubr.bf16.mxu0 0
    %2886 = vmatmul.mubr.bf16.gmra.mxu0 %v2770
    %v2887 = vpop.f32.mrf.mxu0
    %v2888 = vadd.f32 0.0, %v2887
    %v2889 = vpop.f32.mrf.mxu0
    %v2890 = vadd.f32 0.0, %v2889
    %v2891 = vpop.f32.mrf.mxu0
    %v2892 = vpop.f32.mrf.mxu0
    %2893 = vdwg.mxu0
    %2894 = vmatprep.subr.bf16.mxu0 %v603
    %2895 = vmatpush1.bf16.msra.mxu0 %v602
    %2896 = vmatprep.subr.bf16.mxu0 %v595
    %2897 = vmatpush1.bf16.msra.mxu0 %v594
    %2898 = vmatprep.subr.bf16.mxu0 %v587
    %2899 = vmatpush1.bf16.msra.mxu0 %v586
    %2900 = vmatprep.subr.bf16.mxu0 %v579
    %2901 = vmatpush1.bf16.msra.mxu0 %v578
    %2902 = vmatprep.subr.bf16.mxu0 %v571
    %2903 = vmatpush1.bf16.msra.mxu0 %v570
    %2904 = vmatprep.subr.bf16.mxu0 %v563
    %2905 = vmatpush1.bf16.msra.mxu0 %v562
    %2906 = vmatprep.subr.bf16.mxu0 %v555
    %2907 = vmatpush1.bf16.msra.mxu0 %v554
    %2908 = vmatprep.subr.bf16.mxu0 %v547
    %2909 = vmatpush1.bf16.msra.mxu0 %v546
    %2910 = vmatprep.subr.bf16.mxu0 0
    %2911 = vmatpush2.bf16.msra.mxu0 0
    %2912 = vmatprep.subr.bf16.mxu0 0
    %2913 = vmatpush2.bf16.msra.mxu0 0
    %2914 = vmatprep.subr.bf16.mxu0 0
    %2915 = vmatpush2.bf16.msra.mxu0 0
    %2916 = vmatprep.subr.bf16.mxu0 0
    %2917 = vmatpush2.bf16.msra.mxu0 0
    %2918 = vmatprep.subr.bf16.mxu0 0
    %2919 = vmatpush2.bf16.msra.mxu0 0
    %2920 = vmatprep.subr.bf16.mxu0 0
    %2921 = vmatpush2.bf16.msra.mxu0 0
    %2922 = vmatprep.subr.bf16.mxu0 0
    %2923 = vmatpush2.bf16.msra.mxu0 0
    %2924 = vmatprep.subr.bf16.mxu0 0
    %2925 = vmatpush2.bf16.msra.mxu0 0
    %2926 = vmatprep.mubr.bf16.mxu0 0
    %2927 = vmatmul.mubr.bf16.gmra.mxu0 %v2770
    %v2928 = vpop.f32.mrf.mxu0
    %v2929 = vadd.f32 0.0, %v2928
    %v2930 = vpop.f32.mrf.mxu0
    %v2931 = vadd.f32 0.0, %v2930
    %v2932 = vpop.f32.mrf.mxu0
    %v2933 = vpop.f32.mrf.mxu0
    %2934 = vdwg.mxu0
    %v2935 = vpack.c.bf16 %v2734, %v2734
    %2936 = vmatprep.subr.bf16.mxu0 %v989
    %2937 = vmatpush1.bf16.msra.mxu0 %v988
    %2938 = vmatprep.subr.bf16.mxu0 %v985
    %2939 = vmatpush1.bf16.msra.mxu0 %v984
    %2940 = vmatprep.subr.bf16.mxu0 %v981
    %2941 = vmatpush1.bf16.msra.mxu0 %v980
    %2942 = vmatprep.subr.bf16.mxu0 %v977
    %2943 = vmatpush1.bf16.msra.mxu0 %v976
    %2944 = vmatprep.subr.bf16.mxu0 %v973
    %2945 = vmatpush1.bf16.msra.mxu0 %v972
    %2946 = vmatprep.subr.bf16.mxu0 %v969
    %2947 = vmatpush1.bf16.msra.mxu0 %v968
    %2948 = vmatprep.subr.bf16.mxu0 %v965
    %2949 = vmatpush1.bf16.msra.mxu0 %v964
    %2950 = vmatprep.subr.bf16.mxu0 %v961
    %2951 = vmatpush1.bf16.msra.mxu0 %v960
    %2952 = vmatprep.subr.bf16.mxu0 0
    %2953 = vmatpush2.bf16.msra.mxu0 0
    %2954 = vmatprep.subr.bf16.mxu0 0
    %2955 = vmatpush2.bf16.msra.mxu0 0
    %2956 = vmatprep.subr.bf16.mxu0 0
    %2957 = vmatpush2.bf16.msra.mxu0 0
    %2958 = vmatprep.subr.bf16.mxu0 0
    %2959 = vmatpush2.bf16.msra.mxu0 0
    %2960 = vmatprep.subr.bf16.mxu0 0
    %2961 = vmatpush2.bf16.msra.mxu0 0
    %2962 = vmatprep.subr.bf16.mxu0 0
    %2963 = vmatpush2.bf16.msra.mxu0 0
    %2964 = vmatprep.subr.bf16.mxu0 0
    %2965 = vmatpush2.bf16.msra.mxu0 0
    %2966 = vmatprep.subr.bf16.mxu0 0
    %2967 = vmatpush2.bf16.msra.mxu0 0
    %2968 = vmatprep.mubr.bf16.mxu0 0
    %2969 = vmatmul.mubr.bf16.gmra.mxu0 %v2935
    %v2970 = vpop.f32.mrf.mxu0
    %v2971 = vadd.f32 0.0, %v2970
    %v2972 = vpop.f32.mrf.mxu0
    %v2973 = vadd.f32 0.0, %v2972
    %v2974 = vpop.f32.mrf.mxu0
    %v2975 = vpop.f32.mrf.mxu0
    %2976 = vdwg.mxu0
    %2977 = vmatprep.subr.bf16.mxu0 %v991
    %2978 = vmatpush1.bf16.msra.mxu0 %v990
    %2979 = vmatprep.subr.bf16.mxu0 %v987
    %2980 = vmatpush1.bf16.msra.mxu0 %v986
    %2981 = vmatprep.subr.bf16.mxu0 %v983
    %2982 = vmatpush1.bf16.msra.mxu0 %v982
    %2983 = vmatprep.subr.bf16.mxu0 %v979
    %2984 = vmatpush1.bf16.msra.mxu0 %v978
    %2985 = vmatprep.subr.bf16.mxu0 %v975
    %2986 = vmatpush1.bf16.msra.mxu0 %v974
    %2987 = vmatprep.subr.bf16.mxu0 %v971
    %2988 = vmatpush1.bf16.msra.mxu0 %v970
    %2989 = vmatprep.subr.bf16.mxu0 %v967
    %2990 = vmatpush1.bf16.msra.mxu0 %v966
    %2991 = vmatprep.subr.bf16.mxu0 %v963
    %2992 = vmatpush1.bf16.msra.mxu0 %v962
    %2993 = vmatprep.subr.bf16.mxu0 0
    %2994 = vmatpush2.bf16.msra.mxu0 0
    %2995 = vmatprep.subr.bf16.mxu0 0
    %2996 = vmatpush2.bf16.msra.mxu0 0
    %2997 = vmatprep.subr.bf16.mxu0 0
    %2998 = vmatpush2.bf16.msra.mxu0 0
    %2999 = vmatprep.subr.bf16.mxu0 0
    %3000 = vmatpush2.bf16.msra.mxu0 0
    %3001 = vmatprep.subr.bf16.mxu0 0
    %3002 = vmatpush2.bf16.msra.mxu0 0
    %3003 = vmatprep.subr.bf16.mxu0 0
    %3004 = vmatpush2.bf16.msra.mxu0 0
    %3005 = vmatprep.subr.bf16.mxu0 0
    %3006 = vmatpush2.bf16.msra.mxu0 0
    %3007 = vmatprep.subr.bf16.mxu0 0
    %3008 = vmatpush2.bf16.msra.mxu0 0
    %3009 = vmatprep.mubr.bf16.mxu0 0
    %3010 = vmatmul.mubr.bf16.gmra.mxu0 %v2935
    %v3011 = vpop.f32.mrf.mxu0
    %v3012 = vadd.f32 0.0, %v3011
    %v3013 = vpop.f32.mrf.mxu0
    %v3014 = vadd.f32 0.0, %v3013
    %v3015 = vpop.f32.mrf.mxu0
    %v3016 = vpop.f32.mrf.mxu0
    %3017 = vdwg.mxu0
    %v3018 = vadd.f32 %v2888, %v2971
    %v3019 = vadd.f32 %v2890, %v2973
    %v3020 = vadd.f32 %v2929, %v3012
    %v3021 = vadd.f32 %v2931, %v3014
    %v3022 = vadd.f32 %v3018, %v1115
    %v3023 = vadd.f32 %v3019, %v1119
    %v3024 = vadd.f32 %v3020, %v1123
    %v3025 = vadd.f32 %v3021, %v1127
    %v3026 = vxor.u32 %v3022, 2147483648
    %v3027 = vxor.u32 %v3023, 2147483648
    %v3028 = vxor.u32 %v3024, 2147483648
    %v3029 = vmul.f32 %v3026, 1.442695
    %v3030 = vpow.pop %v3029
    %v3031 = vmul.f32 %v3027, 1.442695
    %v3032 = vpow.pop %v3031
    %v3033 = vmul.f32 %v3028, 1.442695
    %v3034 = vpow.pop %v3033
    %v3035 = vadd.f32 %v3030, 1.0
    %v3036 = vadd.f32 %v3032, 1.0
    %v3037 = vadd.f32 %v3034, 1.0
    %v3038 = vrcp.pop %v3035
    %v3039 = vmul.f32 1.0, %v3038
    %v3040 = vrcp.pop %v3036
    %v3041 = vmul.f32 1.0, %v3040
    %v3042 = vrcp.pop %v3037
    %v3043 = vmul.f32 1.0, %v3042
    %v3044 = vtanh.pop %v3025
    %v3045 = vmul.f32 %v3041, %v2732
    %v3046 = vmul.f32 %v3039, %v3044
    %v3047 = vadd.f32 %v3045, %v3046
    %v3048 = vtanh.pop %v3047
    %v3049 = vmul.f32 %v3043, %v3048
    %s3050 = smul.u32 7, 4
    %s3051 = smul.addr %s3050, 8
    %s3052 = scalar_lea.vmem [#allocation2], %s3051
    %v3053 = vld [vmem:[%s3052] sm:$0xff]
    %v3054 = vld [vmem:[%s3052 + $0x8] sm:$0xff]
    %v3055 = vld [vmem:[%s3052 + $0x10] sm:$0xff]
    %v3056 = vld [vmem:[%s3052 + $0x18] sm:$0xff]
    %v3057 = vadd.f32 %v3053, %v2806
    %v3058 = vadd.f32 %v3054, %v2808
    %v3059 = vadd.f32 %v3055, %v2847
    %v3060 = vadd.f32 %v3056, %v2849
    %v3061 = vxor.u32 %v3057, 2147483648
    %v3062 = vxor.u32 %v3058, 2147483648
    %v3063 = vxor.u32 %v3059, 2147483648
    %v3064 = vmul.f32 %v3061, 1.442695
    %v3065 = vpow.pop %v3064
    %v3066 = vmul.f32 %v3062, 1.442695
    %v3067 = vpow.pop %v3066
    %v3068 = vmul.f32 %v3063, 1.442695
    %v3069 = vpow.pop %v3068
    %v3070 = vadd.f32 %v3065, 1.0
    %v3071 = vadd.f32 %v3067, 1.0
    %v3072 = vadd.f32 %v3069, 1.0
    %v3073 = vrcp.pop %v3070
    %v3074 = vmul.f32 1.0, %v3073
    %v3075 = vrcp.pop %v3071
    %v3076 = vmul.f32 1.0, %v3075
    %v3077 = vrcp.pop %v3072
    %v3078 = vmul.f32 1.0, %v3077
    %v3079 = vtanh.pop %v3060
    %v3080 = vmul.f32 %v3076, %v2767
    %v3081 = vmul.f32 %v3074, %v3079
    %v3082 = vadd.f32 %v3080, %v3081
    %v3083 = vtanh.pop %v3082
    %v3084 = vmul.f32 %v3078, %v3083
    %v3085 = vpack.c.bf16 %v3084, %v3084
    %3086 = vmatprep.subr.bf16.mxu0 %v601
    %3087 = vmatpush1.bf16.msra.mxu0 %v600
    %3088 = vmatprep.subr.bf16.mxu0 %v593
    %3089 = vmatpush1.bf16.msra.mxu0 %v592
    %3090 = vmatprep.subr.bf16.mxu0 %v585
    %3091 = vmatpush1.bf16.msra.mxu0 %v584
    %3092 = vmatprep.subr.bf16.mxu0 %v577
    %3093 = vmatpush1.bf16.msra.mxu0 %v576
    %3094 = vmatprep.subr.bf16.mxu0 %v569
    %3095 = vmatpush1.bf16.msra.mxu0 %v568
    %3096 = vmatprep.subr.bf16.mxu0 %v561
    %3097 = vmatpush1.bf16.msra.mxu0 %v560
    %3098 = vmatprep.subr.bf16.mxu0 %v553
    %3099 = vmatpush1.bf16.msra.mxu0 %v552
    %3100 = vmatprep.subr.bf16.mxu0 %v545
    %3101 = vmatpush1.bf16.msra.mxu0 %v544
    %3102 = vmatprep.subr.bf16.mxu0 0
    %3103 = vmatpush2.bf16.msra.mxu0 0
    %3104 = vmatprep.subr.bf16.mxu0 0
    %3105 = vmatpush2.bf16.msra.mxu0 0
    %3106 = vmatprep.subr.bf16.mxu0 0
    %3107 = vmatpush2.bf16.msra.mxu0 0
    %3108 = vmatprep.subr.bf16.mxu0 0
    %3109 = vmatpush2.bf16.msra.mxu0 0
    %3110 = vmatprep.subr.bf16.mxu0 0
    %3111 = vmatpush2.bf16.msra.mxu0 0
    %3112 = vmatprep.subr.bf16.mxu0 0
    %3113 = vmatpush2.bf16.msra.mxu0 0
    %3114 = vmatprep.subr.bf16.mxu0 0
    %3115 = vmatpush2.bf16.msra.mxu0 0
    %3116 = vmatprep.subr.bf16.mxu0 0
    %3117 = vmatpush2.bf16.msra.mxu0 0
    %3118 = vmatprep.mubr.bf16.mxu0 0
    %3119 = vmatmul.mubr.bf16.gmra.mxu0 %v3085
    %v3120 = vpop.f32.mrf.mxu0
    %v3121 = vadd.f32 0.0, %v3120
    %v3122 = vpop.f32.mrf.mxu0
    %v3123 = vadd.f32 0.0, %v3122
    %v3124 = vpop.f32.mrf.mxu0
    %v3125 = vpop.f32.mrf.mxu0
    %3126 = vdwg.mxu0
    %3127 = vmatprep.subr.bf16.mxu0 %v603
    %3128 = vmatpush1.bf16.msra.mxu0 %v602
    %3129 = vmatprep.subr.bf16.mxu0 %v595
    %3130 = vmatpush1.bf16.msra.mxu0 %v594
    %3131 = vmatprep.subr.bf16.mxu0 %v587
    %3132 = vmatpush1.bf16.msra.mxu0 %v586
    %3133 = vmatprep.subr.bf16.mxu0 %v579
    %3134 = vmatpush1.bf16.msra.mxu0 %v578
    %3135 = vmatprep.subr.bf16.mxu0 %v571
    %3136 = vmatpush1.bf16.msra.mxu0 %v570
    %3137 = vmatprep.subr.bf16.mxu0 %v563
    %3138 = vmatpush1.bf16.msra.mxu0 %v562
    %3139 = vmatprep.subr.bf16.mxu0 %v555
    %3140 = vmatpush1.bf16.msra.mxu0 %v554
    %3141 = vmatprep.subr.bf16.mxu0 %v547
    %3142 = vmatpush1.bf16.msra.mxu0 %v546
    %3143 = vmatprep.subr.bf16.mxu0 0
    %3144 = vmatpush2.bf16.msra.mxu0 0
    %3145 = vmatprep.subr.bf16.mxu0 0
    %3146 = vmatpush2.bf16.msra.mxu0 0
    %3147 = vmatprep.subr.bf16.mxu0 0
    %3148 = vmatpush2.bf16.msra.mxu0 0
    %3149 = vmatprep.subr.bf16.mxu0 0
    %3150 = vmatpush2.bf16.msra.mxu0 0
    %3151 = vmatprep.subr.bf16.mxu0 0
    %3152 = vmatpush2.bf16.msra.mxu0 0
    %3153 = vmatprep.subr.bf16.mxu0 0
    %3154 = vmatpush2.bf16.msra.mxu0 0
    %3155 = vmatprep.subr.bf16.mxu0 0
    %3156 = vmatpush2.bf16.msra.mxu0 0
    %3157 = vmatprep.subr.bf16.mxu0 0
    %3158 = vmatpush2.bf16.msra.mxu0 0
    %3159 = vmatprep.mubr.bf16.mxu0 0
    %3160 = vmatmul.mubr.bf16.gmra.mxu0 %v3085
    %v3161 = vpop.f32.mrf.mxu0
    %v3162 = vadd.f32 0.0, %v3161
    %v3163 = vpop.f32.mrf.mxu0
    %v3164 = vadd.f32 0.0, %v3163
    %v3165 = vpop.f32.mrf.mxu0
    %v3166 = vpop.f32.mrf.mxu0
    %3167 = vdwg.mxu0
    %v3168 = vpack.c.bf16 %v3049, %v3049
    %3169 = vmatprep.subr.bf16.mxu0 %v989
    %3170 = vmatpush1.bf16.msra.mxu0 %v988
    %3171 = vmatprep.subr.bf16.mxu0 %v985
    %3172 = vmatpush1.bf16.msra.mxu0 %v984
    %3173 = vmatprep.subr.bf16.mxu0 %v981
    %3174 = vmatpush1.bf16.msra.mxu0 %v980
    %3175 = vmatprep.subr.bf16.mxu0 %v977
    %3176 = vmatpush1.bf16.msra.mxu0 %v976
    %3177 = vmatprep.subr.bf16.mxu0 %v973
    %3178 = vmatpush1.bf16.msra.mxu0 %v972
    %3179 = vmatprep.subr.bf16.mxu0 %v969
    %3180 = vmatpush1.bf16.msra.mxu0 %v968
    %3181 = vmatprep.subr.bf16.mxu0 %v965
    %3182 = vmatpush1.bf16.msra.mxu0 %v964
    %3183 = vmatprep.subr.bf16.mxu0 %v961
    %3184 = vmatpush1.bf16.msra.mxu0 %v960
    %3185 = vmatprep.subr.bf16.mxu0 0
    %3186 = vmatpush2.bf16.msra.mxu0 0
    %3187 = vmatprep.subr.bf16.mxu0 0
    %3188 = vmatpush2.bf16.msra.mxu0 0
    %3189 = vmatprep.subr.bf16.mxu0 0
    %3190 = vmatpush2.bf16.msra.mxu0 0
    %3191 = vmatprep.subr.bf16.mxu0 0
    %3192 = vmatpush2.bf16.msra.mxu0 0
    %3193 = vmatprep.subr.bf16.mxu0 0
    %3194 = vmatpush2.bf16.msra.mxu0 0
    %3195 = vmatprep.subr.bf16.mxu0 0
    %3196 = vmatpush2.bf16.msra.mxu0 0
    %3197 = vmatprep.subr.bf16.mxu0 0
    %3198 = vmatpush2.bf16.msra.mxu0 0
    %3199 = vmatprep.subr.bf16.mxu0 0
    %3200 = vmatpush2.bf16.msra.mxu0 0
    %3201 = vmatprep.mubr.bf16.mxu0 0
    %3202 = vmatmul.mubr.bf16.gmra.mxu0 %v3168
    %v3203 = vpop.f32.mrf.mxu0
    %v3204 = vadd.f32 0.0, %v3203
    %v3205 = vpop.f32.mrf.mxu0
    %v3206 = vadd.f32 0.0, %v3205
    %v3207 = vpop.f32.mrf.mxu0
    %v3208 = vpop.f32.mrf.mxu0
    %3209 = vdwg.mxu0
    %3210 = vmatprep.subr.bf16.mxu0 %v991
    %3211 = vmatpush1.bf16.msra.mxu0 %v990
    %3212 = vmatprep.subr.bf16.mxu0 %v987
    %3213 = vmatpush1.bf16.msra.mxu0 %v986
    %3214 = vmatprep.subr.bf16.mxu0 %v983
    %3215 = vmatpush1.bf16.msra.mxu0 %v982
    %3216 = vmatprep.subr.bf16.mxu0 %v979
    %3217 = vmatpush1.bf16.msra.mxu0 %v978
    %3218 = vmatprep.subr.bf16.mxu0 %v975
    %3219 = vmatpush1.bf16.msra.mxu0 %v974
    %3220 = vmatprep.subr.bf16.mxu0 %v971
    %3221 = vmatpush1.bf16.msra.mxu0 %v970
    %3222 = vmatprep.subr.bf16.mxu0 %v967
    %3223 = vmatpush1.bf16.msra.mxu0 %v966
    %3224 = vmatprep.subr.bf16.mxu0 %v963
    %3225 = vmatpush1.bf16.msra.mxu0 %v962
    %3226 = vmatprep.subr.bf16.mxu0 0
    %3227 = vmatpush2.bf16.msra.mxu0 0
    %3228 = vmatprep.subr.bf16.mxu0 0
    %3229 = vmatpush2.bf16.msra.mxu0 0
    %3230 = vmatprep.subr.bf16.mxu0 0
    %3231 = vmatpush2.bf16.msra.mxu0 0
    %3232 = vmatprep.subr.bf16.mxu0 0
    %3233 = vmatpush2.bf16.msra.mxu0 0
    %3234 = vmatprep.subr.bf16.mxu0 0
    %3235 = vmatpush2.bf16.msra.mxu0 0
    %3236 = vmatprep.subr.bf16.mxu0 0
    %3237 = vmatpush2.bf16.msra.mxu0 0
    %3238 = vmatprep.subr.bf16.mxu0 0
    %3239 = vmatpush2.bf16.msra.mxu0 0
    %3240 = vmatprep.subr.bf16.mxu0 0
    %3241 = vmatpush2.bf16.msra.mxu0 0
    %3242 = vmatprep.mubr.bf16.mxu0 0
    %3243 = vmatmul.mubr.bf16.gmra.mxu0 %v3168
    %v3244 = vpop.f32.mrf.mxu0
    %v3245 = vadd.f32 0.0, %v3244
    %v3246 = vpop.f32.mrf.mxu0
    %v3247 = vadd.f32 0.0, %v3246
    %v3248 = vpop.f32.mrf.mxu0
    %v3249 = vpop.f32.mrf.mxu0
    %3250 = vdwg.mxu0
    %v3251 = vadd.f32 %v3121, %v3204
    %v3252 = vadd.f32 %v3123, %v3206
    %v3253 = vadd.f32 %v3162, %v3245
    %v3254 = vadd.f32 %v3164, %v3247
    %v3255 = vadd.f32 %v3251, %v1115
    %v3256 = vadd.f32 %v3252, %v1119
    %v3257 = vadd.f32 %v3253, %v1123
    %v3258 = vadd.f32 %v3254, %v1127
    %v3259 = vxor.u32 %v3255, 2147483648
    %v3260 = vxor.u32 %v3256, 2147483648
    %v3261 = vxor.u32 %v3257, 2147483648
    %v3262 = vmul.f32 %v3259, 1.442695
    %v3263 = vpow.pop %v3262
    %v3264 = vmul.f32 %v3260, 1.442695
    %v3265 = vpow.pop %v3264
    %v3266 = vmul.f32 %v3261, 1.442695
    %v3267 = vpow.pop %v3266
    %v3268 = vadd.f32 %v3263, 1.0
    %v3269 = vadd.f32 %v3265, 1.0
    %v3270 = vadd.f32 %v3267, 1.0
    %v3271 = vrcp.pop %v3268
    %v3272 = vmul.f32 1.0, %v3271
    %v3273 = vrcp.pop %v3269
    %v3274 = vmul.f32 1.0, %v3273
    %v3275 = vrcp.pop %v3270
    %v3276 = vmul.f32 1.0, %v3275
    %v3277 = vtanh.pop %v3258
    %v3278 = vmul.f32 %v3274, %v3047
    %v3279 = vmul.f32 %v3272, %v3277
    %v3280 = vadd.f32 %v3278, %v3279
    %v3281 = vtanh.pop %v3280
    %v3282 = vmul.f32 %v3276, %v3281
    %v3283 = vld [vmem:[%s6] sm:$0xff]
    %v3284 = vld [vmem:[%s6 + $0x8] sm:$0xff]
    %v3285 = vld [vmem:[%s6 + $0x10] sm:$0xff]
    %v3286 = vld [vmem:[%s6 + $0x18] sm:$0xff]
    %v3287 = vld [vmem:[%s6 + $0x20] sm:$0xff]
    %v3288 = vld [vmem:[%s6 + $0x28] sm:$0xff]
    %v3289 = vld [vmem:[%s6 + $0x30] sm:$0xff]
    %v3290 = vld [vmem:[%s6 + $0x38] sm:$0xff]
    %v3291 = vld [vmem:[%s6 + $0x40] sm:$0xff]
    %v3292 = vld [vmem:[%s6 + $0x48] sm:$0xff]
    %v3293 = vld [vmem:[%s6 + $0x50] sm:$0xff]
    %v3294 = vld [vmem:[%s6 + $0x58] sm:$0xff]
    %v3295 = vld [vmem:[%s6 + $0x60] sm:$0xff]
    %v3296 = vld [vmem:[%s6 + $0x68] sm:$0xff]
    %v3297 = vld [vmem:[%s6 + $0x70] sm:$0xff]
    %v3298 = vld [vmem:[%s6 + $0x78] sm:$0xff]
    %v3299 = vld [vmem:[#allocation3] sm:$0x1]
    %v3301 = vlaneseq
    %v3302 = vshrl.u32 %v3301, 7
    %v3303 = vsub.s32 0, %v3302
    %v3304 = vrot.slane %v3299, %v3303
    %3306 = vmatprep.subr.mxu0 0.0
    %3307 = vmatpush1.msra.mxu0 %v3298
    %3308 = vmatprep.subr.mxu0 0.0
    %3309 = vmatpush1.msra.mxu0 %v3297
    %3310 = vmatprep.subr.mxu0 0.0
    %3311 = vmatpush1.msra.mxu0 %v3296
    %3312 = vmatprep.subr.mxu0 0.0
    %3313 = vmatpush1.msra.mxu0 %v3295
    %3314 = vmatprep.subr.mxu0 0.0
    %3315 = vmatpush1.msra.mxu0 %v3294
    %3316 = vmatprep.subr.mxu0 0.0
    %3317 = vmatpush1.msra.mxu0 %v3293
    %3318 = vmatprep.subr.mxu0 0.0
    %3319 = vmatpush1.msra.mxu0 %v3292
    %3320 = vmatprep.subr.mxu0 0.0
    %3321 = vmatpush1.msra.mxu0 %v3291
    %3322 = vmatprep.subr.mxu0 0.0
    %3323 = vmatpush1.msra.mxu0 %v3290
    %3324 = vmatprep.subr.mxu0 0.0
    %3325 = vmatpush1.msra.mxu0 %v3289
    %3326 = vmatprep.subr.mxu0 0.0
    %3327 = vmatpush1.msra.mxu0 %v3288
    %3328 = vmatprep.subr.mxu0 0.0
    %3329 = vmatpush1.msra.mxu0 %v3287
    %3330 = vmatprep.subr.mxu0 0.0
    %3331 = vmatpush1.msra.mxu0 %v3286
    %3332 = vmatprep.subr.mxu0 0.0
    %3333 = vmatpush1.msra.mxu0 %v3285
    %3334 = vmatprep.subr.mxu0 0.0
    %3335 = vmatpush1.msra.mxu0 %v3284
    %3336 = vmatprep.subr.mxu0 0.0
    %3337 = vmatpush1.msra.mxu0 %v3283
    %3338 = vmatprep.subr.mxu0 0.0
    %3339 = vmatpush2.msra.mxu0 0.0
    %3340 = vmatprep.subr.mxu0 0.0
    %3341 = vmatpush2.msra.mxu0 0.0
    %3342 = vmatprep.subr.mxu0 0.0
    %3343 = vmatpush2.msra.mxu0 0.0
    %3344 = vmatprep.subr.mxu0 0.0
    %3345 = vmatpush2.msra.mxu0 0.0
    %3346 = vmatprep.subr.mxu0 0.0
    %3347 = vmatpush2.msra.mxu0 0.0
    %3348 = vmatprep.subr.mxu0 0.0
    %3349 = vmatpush2.msra.mxu0 0.0
    %3350 = vmatprep.subr.mxu0 0.0
    %3351 = vmatpush2.msra.mxu0 0.0
    %3352 = vmatprep.subr.mxu0 0.0
    %3353 = vmatpush2.msra.mxu0 0.0
    %3354 = vmatprep.subr.mxu0 0.0
    %3355 = vmatpush2.msra.mxu0 0.0
    %3356 = vmatprep.subr.mxu0 0.0
    %3357 = vmatpush2.msra.mxu0 0.0
    %3358 = vmatprep.subr.mxu0 0.0
    %3359 = vmatpush2.msra.mxu0 0.0
    %3360 = vmatprep.subr.mxu0 0.0
    %3361 = vmatpush2.msra.mxu0 0.0
    %3362 = vmatprep.subr.mxu0 0.0
    %3363 = vmatpush2.msra.mxu0 0.0
    %3364 = vmatprep.subr.mxu0 0.0
    %3365 = vmatpush2.msra.mxu0 0.0
    %3366 = vmatprep.subr.mxu0 0.0
    %3367 = vmatpush2.msra.mxu0 0.0
    %3368 = vmatprep.subr.mxu0 0.0
    %3369 = vmatpush2.msra.mxu0 0.0
    %3370 = vmatprep.mubr.f32.mxu0 0.0
    %3371 = vmatmul.mubr.f32.gmra.mxu0 %v3282
    %v3372 = vpop.f32.mrf.mxu0
    %v3373 = vadd.f32 %v3304, %v3372
    %v3374 = vpop.f32.mrf.mxu0
    %3375 = vdwg.mxu0
    %vm3376 = vcmask 7168
    %3377 = vst.msk [vmem:[%s8] sm:$0xff] %vm3376, %v3373
    // Predicated region
    $region42: #{tpu_custom_call.1} parent=1 // pred_check
      _
    $region43: #{tpu_custom_call.1} parent=1 // pred_check_branch
      %3379 = sbr.rel (0) target = $region45
    $region44: #{tpu_custom_call.1} parent=1 // pred_region
      _
    $region45: #{tpu_custom_call.1} parent=1 // pred_fallthru
      _
    // Predicated region
    $region46: #{tpu_custom_call.1} parent=1 // pred_check
      _
    $region47: #{tpu_custom_call.1} parent=1 // pred_check_branch
      %3381 = sbr.rel (0) target = $region49
    $region48: #{tpu_custom_call.1} parent=1 // pred_region
      _
    $region49: #{tpu_custom_call.1} parent=1 // pred_fallthru
      _
    %3382 = vsyncpa [#allocation5], 1
    %3383 = vsyncpa [#allocation7], 1

</llo_original>
